<compile_context>
chip_gen: v5e
topology: v5e:2x2
jax: 0.10.0
libtpu: 0.0.40
codegen_flags: <defaults>
</compile_context>

<pallas_src>
import numpy as np
import jax
import jax.numpy as jnp
from jax import lax
from jax.experimental import pallas as pl
from jax.experimental.pallas import tpu as pltpu

_EPS = 1e-5
_HID = 100
_HIDP = ((_HID + 127) // 128) * 128          # 128
_FLAT = 8 * 8 * 2                            # 128 (flattened pool output, already lane aligned)


# --------------------------------------------------------------------------
# Static helpers (built once in numpy).
# --------------------------------------------------------------------------
def _pool_pairs(n, o):
    """PyTorch adaptive-pool windows for n -> o; returns (first, last) index per output."""
    pairs = []
    for i in range(o):
        s = (i * n) // o
        e = -((-(i + 1) * n) // o)           # ceil((i+1)*n/o)
        pairs.append((s, e - 1))
    return pairs


def _build_pool_gather():
    """(27, 8*128) one-hot matrix.  Column t*128+f selects the t-th candidate element of the
    AdaptiveMaxPool3d((8,8,2)) window feeding flattened feature f (windows are <= 2 per axis,
    so 8 candidate combinations cover every window; duplicates are harmless under max)."""
    dp, hp, wp = _pool_pairs(3, 8), _pool_pairs(3, 8), _pool_pairs(3, 2)
    G = np.zeros((27, 8, 128), np.float32)
    for od in range(8):
        for oh in range(8):
            for ow in range(2):
                f = (od * 8 + oh) * 2 + ow
                for t in range(8):
                    d = dp[od][(t >> 2) & 1]
                    h = hp[oh][(t >> 1) & 1]
                    w = wp[ow][t & 1]
                    G[(d * 3 + h) * 3 + w, t, f] = 1.0
    return G.reshape(27, 8 * 128)


_POOL_GATHER = _build_pool_gather()


def _build_conv3_scatter():
    """Static (s, m, k) triplets that scatter the 27 conv-3 taps into a (343, 27) matrix so that
    conv3 over the (7,7,7) layer-2 output becomes r2(B,343) @ A3(343,27)."""
    s_idx, m_idx, k_idx = [], [], []
    for d in range(3):
        for h in range(3):
            for w in range(3):
                m = (d * 3 + h) * 3 + w
                for kd in range(3):
                    for kh in range(3):
                        for kw in range(3):
                            k = (kd * 3 + kh) * 3 + kw
                            s = (2 * d + kd) * 49 + (2 * h + kh) * 7 + (2 * w + kw)
                            s_idx.append(s)
                            m_idx.append(m)
                            k_idx.append(k)
    return np.asarray(s_idx), np.asarray(m_idx), np.asarray(k_idx)


_C3_S, _C3_M, _C3_K = _build_conv3_scatter()


# --------------------------------------------------------------------------
# Kernel 1: Conv3d + BN(eval) + ReLU as a lane-dense row kernel on (K, M) patches.
# --------------------------------------------------------------------------
def _conv_rows_kernel(p_ref, w_ref, b_ref, o_ref):
    # p_ref: (K, tm)  patches, K on sublanes / rows on lanes
    # w_ref: (K, 1)   BN-scale-folded weights, b_ref: (1,1) SMEM BN shift
    # o_ref: (1, tm)  lane-dense output
    acc = jnp.sum(p_ref[...] * w_ref[...], axis=0, keepdims=True)    # exact f32 reduction
    o_ref[...] = jnp.maximum(acc + b_ref[0, 0], 0.0)


def conv_bn_relu_rows(patches_t, w_col, shift, target_blocks=2):
    """patches_t: (K, M) f32, w_col: (K, 1) f32, shift: scalar -> (M,) f32."""
    K, M = patches_t.shape
    tm = max(128, pl.cdiv(pl.cdiv(M, target_blocks), 128) * 128)
    grid = (pl.cdiv(M, tm),)
    out = pl.pallas_call(
        _conv_rows_kernel,
        out_shape=jax.ShapeDtypeStruct((1, M), jnp.float32),
        grid=grid,
        in_specs=[
            pl.BlockSpec((K, tm), lambda i: (0, i)),
            pl.BlockSpec((K, 1), lambda i: (0, 0)),
            pl.BlockSpec(memory_space=pltpu.MemorySpace.SMEM),
        ],
        out_specs=pl.BlockSpec((1, tm), lambda i: (0, i)),
        compiler_params=pltpu.CompilerParams(dimension_semantics=("parallel",)),
    )(
        patches_t,
        w_col.astype(jnp.float32),
        jnp.reshape(shift, (1, 1)).astype(jnp.float32),
    )
    return out[0]


# --------------------------------------------------------------------------
# im2col glue (cheap: only leading-axis transposes, minor dims stay contiguous).
# --------------------------------------------------------------------------
def im2col_t(x, k=3, s=2):
    """x: (B, C, D, H, W) -> (C*k^3, B*Do*Ho*Wo); K order (c, kd, kh, kw), M order (b, d, h, w)."""
    B, C, D, H, W = x.shape
    Do, Ho, Wo = (D - k) // s + 1, (H - k) // s + 1, (W - k) // s + 1
    cols = []
    for kd in range(k):
        for kh in range(k):
            for kw in range(k):
                cols.append(x[:, :, kd:kd + s * Do:s, kh:kh + s * Ho:s, kw:kw + s * Wo:s])
    st = jnp.stack(cols, axis=2)                      # (B, C, k^3, Do, Ho, Wo)
    pt = jnp.transpose(st, (1, 2, 0, 3, 4, 5))        # (C, k^3, B, Do, Ho, Wo)
    return pt.reshape(C * k ** 3, B * Do * Ho * Wo), (B, Do, Ho, Wo)


def im2col_kbm(h, k=3, s=2):
    """h: (B, D, H, W) single channel -> (k^3, B, Do*Ho*Wo) (no transpose needed)."""
    B, D, H, W = h.shape
    Do, Ho, Wo = (D - k) // s + 1, (H - k) // s + 1, (W - k) // s + 1
    cols = []
    for kd in range(k):
        for kh in range(k):
            for kw in range(k):
                cols.append(h[:, kd:kd + s * Do:s, kh:kh + s * Ho:s, kw:kw + s * Wo:s])
    st = jnp.stack(cols, axis=0)                      # (k^3, B, Do, Ho, Wo)
    return st.reshape(k ** 3, B, Do * Ho * Wo)


# --------------------------------------------------------------------------
# Kernel 2: conv2 + conv3 + AdaptiveMaxPool3d((8,8,2)) + Flatten + MLP head, fully fused.
# --------------------------------------------------------------------------
def _tail_kernel(p2_ref, w2_ref, a3_ref, g_ref, w1_ref, b1_ref, w2r_ref, s_ref, o_ref):
    # conv2 + BN + ReLU: 27-tap reduction over the leading axis -> (B, 343)
    r2 = jnp.sum(p2_ref[...] * w2_ref[...], axis=0) + s_ref[0, 0]
    r2 = jnp.maximum(r2, 0.0)
    # conv3 + BN + ReLU as a matmul with the scattered (343, 27) weight matrix -> (B, 27)
    r3 = jnp.dot(r2, a3_ref[...], preferred_element_type=jnp.float32) + s_ref[0, 1]
    r3 = jnp.maximum(r3, 0.0)
    # AdaptiveMaxPool3d((8,8,2)) + Flatten: one-hot gather matmul then 8-way max over
    # 128-lane-aligned slices (the flattened feature vector is exactly 128 lanes wide).
    g = jnp.dot(r3, g_ref[...], preferred_element_type=jnp.float32)   # (B, 8*128)
    pooled = g[:, 0:128]
    for t in range(1, 8):
        pooled = jnp.maximum(pooled, g[:, t * 128:(t + 1) * 128])
    # Linear(128, 100) padded to 128 + ReLU (MXU)
    h = jnp.dot(pooled, w1_ref[...], preferred_element_type=jnp.float32) + b1_ref[...]
    h = jnp.maximum(h, 0.0)
    # Linear(100, 1) as a VPU reduction (an N=1 MXU dot would just mask lanes)
    o_ref[...] = jnp.sum(h * w2r_ref[...], axis=-1, keepdims=True) + s_ref[0, 2]


def tail_fused(p2, w2_col, a3, w1_p, b1_p, w2_row, scal):
    K3, B, M2 = p2.shape
    return pl.pallas_call(
        _tail_kernel,
        out_shape=jax.ShapeDtypeStruct((B, 1), jnp.float32),
        grid=(1,),
        in_specs=[
            pl.BlockSpec((K3, B, M2), lambda i: (0, 0, 0)),
            pl.BlockSpec((K3, 1, 1), lambda i: (0, 0, 0)),
            pl.BlockSpec(a3.shape, lambda i: (0, 0)),
            pl.BlockSpec(_POOL_GATHER.shape, lambda i: (0, 0)),
            pl.BlockSpec(w1_p.shape, lambda i: (0, 0)),
            pl.BlockSpec(b1_p.shape, lambda i: (0, 0)),
            pl.BlockSpec(w2_row.shape, lambda i: (0, 0)),
            pl.BlockSpec(memory_space=pltpu.MemorySpace.SMEM),
        ],
        out_specs=pl.BlockSpec((B, 1), lambda i: (0, 0)),
    )(p2, w2_col, a3, jnp.asarray(_POOL_GATHER), w1_p, b1_p, w2_row, scal)


# --------------------------------------------------------------------------
# Full forward
# --------------------------------------------------------------------------
def _bn_fold(p, eps=_EPS):
    scale = p["gamma"] / jnp.sqrt(p["rvar"] + eps)
    shift = p["beta"] - p["rmean"] * scale
    return scale, shift


def unet_to_regression(x, params):
    # TODO(synk): FakeQuantize observers from the fbgemm qconfig are treated as identity;
    # BatchNorm uses eval-mode running statistics (folded into the conv weights).
    convs = params["convs"]

    # ---- layer 1: ConvBnReLU3d(C_in -> 1, k=3, s=2) via the lane-dense row kernel ----
    scale1, shift1 = _bn_fold(convs[0])
    p1, (B, D1, H1, W1) = im2col_t(x)                             # (C*27, B*15^3)
    w1_col = (convs[0]["w"].reshape(-1) * scale1).reshape(-1, 1)
    rows1 = conv_bn_relu_rows(p1, w1_col, shift1)                 # (B*15^3,)
    h1 = rows1.reshape(B, D1, H1, W1)                             # (B, 15, 15, 15)

    # ---- layers 2 + 3 + AdaptiveMaxPool3d + Flatten + MLP head, fused in one kernel ----
    scale2, shift2 = _bn_fold(convs[1])
    scale3, shift3 = _bn_fold(convs[2])
    p2 = im2col_kbm(h1)                                           # (27, B, 343)
    w2_col = (convs[1]["w"].reshape(-1) * scale2).reshape(-1, 1, 1).astype(jnp.float32)
    w3_eff = (convs[2]["w"].reshape(-1) * scale3).astype(jnp.float32)
    a3 = jnp.zeros((343, 27), jnp.float32).at[_C3_S, _C3_M].add(w3_eff[_C3_K])

    w1_p = jnp.zeros((_FLAT, _HIDP), jnp.float32).at[:, :_HID].set(params["w1"])
    b1_p = jnp.zeros((1, _HIDP), jnp.float32).at[0, :_HID].set(params["b1"])
    w2_row = jnp.zeros((1, _HIDP), jnp.float32).at[0, :_HID].set(params["w2"][:, 0])
    scal = jnp.stack([shift2, shift3, params["b2"][0]]).reshape(1, 3).astype(jnp.float32)

    return tail_fused(p2, w2_col, a3, w1_p, b1_p, w2_row, scal)


# --------------------------------------------------------------------------
# Parameters + pure-JAX reference (no Pallas) for correctness check.
# --------------------------------------------------------------------------
def init_params(key, in_channels):
    ks = jax.random.split(key, 8)
    convs = []
    c_in = in_channels
    for i in range(3):
        k0, k1, k2, k3, k4 = jax.random.split(ks[i], 5)
        convs.append(
            dict(
                w=jax.random.normal(k0, (1, c_in, 3, 3, 3), jnp.float32) * 0.1,
                gamma=1.0 + 0.1 * jax.random.normal(k1, (), jnp.float32),
                beta=0.1 * jax.random.normal(k2, (), jnp.float32),
                rmean=0.1 * jax.random.normal(k3, (), jnp.float32),
                rvar=1.0 + 0.1 * jax.random.uniform(k4, (), jnp.float32),
            )
        )
        c_in = 1
    w1 = jax.random.normal(ks[4], (_FLAT, _HID), jnp.float32) * 0.05
    b1 = jax.random.normal(ks[5], (_HID,), jnp.float32) * 0.05
    w2 = jax.random.normal(ks[6], (_HID, 1), jnp.float32) * 0.05
    b2 = jax.random.normal(ks[7], (1,), jnp.float32) * 0.05
    return dict(convs=convs, w1=w1, b1=b1, w2=w2, b2=b2)


def adaptive_max_pool_3d(x, out_size):
    def pool_axis(t, axis, o):
        n = t.shape[axis]
        parts = []
        for i in range(o):
            s = (i * n) // o
            e = -((-(i + 1) * n) // o)
            parts.append(
                jnp.max(lax.slice_in_dim(t, s, e, axis=axis), axis=axis, keepdims=True)
            )
        return jnp.concatenate(parts, axis=axis)

    for ax, o in zip((2, 3, 4), out_size):
        x = pool_axis(x, ax, o)
    return x


def reference_forward(x, params, eps=_EPS):
    h = x
    for p in params["convs"]:
        conv = lax.conv_general_dilated(
            h, p["w"], window_strides=(2, 2, 2), padding="VALID",
            dimension_numbers=("NCDHW", "OIDHW", "NCDHW"))
        scale = p["gamma"] / jnp.sqrt(p["rvar"] + eps)
        h = jnp.maximum(conv * scale + (p["beta"] - p["rmean"] * scale), 0.0)
    h = adaptive_max_pool_3d(h, (8, 8, 2))
    h = h.reshape(h.shape[0], -1)
    h = jnp.maximum(h @ params["w1"] + params["b1"], 0.0)
    return h @ params["w2"] + params["b2"]


if __name__ == "__main__":
    key = jax.random.PRNGKey(0)
    kx, kp = jax.random.split(key)
    in_channels = 4
    # NCDHW input; 32 -> 15 -> 7 -> 3 spatial through the three stride-2 convs.
    x = jax.random.normal(kx, (2, in_channels, 32, 32, 32), jnp.float32)
    params = init_params(kp, in_channels)

    fwd = jax.jit(unet_to_regression)
    out = jax.block_until_ready(fwd(x, params))
    ref = jax.block_until_ready(reference_forward(x, params))
    np.testing.assert_allclose(np.asarray(out), np.asarray(ref), rtol=1e-4, atol=1e-4)
    assert out.shape == (2, 1)
    print("KERNEL_OK")
</pallas_src>

<mosaic_0001>
module attributes {stable_mosaic.version = 11 : i64} {
  func.func @_conv_rows_kernel(%arg0: i32, %arg1: memref<108x3456xf32, #tpu.memory_space<vmem>>, %arg2: memref<108x1xf32, #tpu.memory_space<vmem>>, %arg3: memref<1x1xf32, #tpu.memory_space<smem>>, %arg4: memref<1x3456xf32, #tpu.memory_space<vmem>>) attributes {dimension_semantics = [#tpu.dimension_semantics<parallel>], iteration_bounds = array<i64: 2>, scalar_prefetch = 0 : i64, scratch_operands = 0 : i64, tpu.core_type = #tpu.core_type<tc>, window_params = [{transform_indices = @transform_0, window_bounds = array<i64: 108, 3456>}, {pipeline_mode = #tpu.pipeline_mode<synchronous>, transform_indices = @transform_1, window_bounds = array<i64: 108, 1>}, {transform_indices = @transform_2, window_bounds = array<i64: 1, 1>}, {transform_indices = @transform_3, window_bounds = array<i64: 1, 3456>}]} {
    %c0 = arith.constant 0 : index
    %c0_0 = arith.constant 0 : index
    %0 = vector.load %arg1[%c0, %c0_0] : memref<108x3456xf32, #tpu.memory_space<vmem>>, vector<108x3456xf32>
    %c0_1 = arith.constant 0 : index
    %c0_2 = arith.constant 0 : index
    %1 = vector.load %arg2[%c0_1, %c0_2] : memref<108x1xf32, #tpu.memory_space<vmem>>, vector<108x1xf32>
    %2 = vector.broadcast %1 : vector<108x1xf32> to vector<108x3456xf32>
    %3 = arith.mulf %0, %2 : vector<108x3456xf32>
    %cst = arith.constant dense<0.000000e+00> : vector<3456xf32>
    %4 = vector.multi_reduction <add>, %3, %cst [0] : vector<108x3456xf32> to vector<3456xf32>
    %5 = vector.shape_cast %4 : vector<3456xf32> to vector<1x3456xf32>
    %c0_3 = arith.constant 0 : index
    %c0_4 = arith.constant 0 : index
    %6 = memref.load %arg3[%c0_3, %c0_4] : memref<1x1xf32, #tpu.memory_space<smem>>
    %7 = vector.broadcast %6 : f32 to vector<1x3456xf32>
    %8 = arith.addf %5, %7 : vector<1x3456xf32>
    %cst_5 = arith.constant 0.000000e+00 : f32
    %9 = vector.broadcast %cst_5 : f32 to vector<1x3456xf32>
    %10 = arith.maximumf %8, %9 : vector<1x3456xf32>
    %c0_6 = arith.constant 0 : index
    %c0_7 = arith.constant 0 : index
    %11 = vector.load %arg4[%c0_6, %c0_7] : memref<1x3456xf32, #tpu.memory_space<vmem>>, vector<1x3456xf32>
    tpu.vector_store %arg4[%c0_6, %c0_7], %10 {strides = array<i32>} : memref<1x3456xf32, #tpu.memory_space<vmem>>, vector<1x3456xf32>,
    return
  }
  func.func @transform_0(%arg0: i32) -> (i32, i32) {
    %c0_i32 = arith.constant 0 : i32
    %c0_i32_0 = arith.constant 0 : i32
    return %c0_i32, %arg0 : i32, i32
  }
  func.func @transform_1(%arg0: i32) -> (i32, i32) {
    %c0_i32 = arith.constant 0 : i32
    %c0_i32_0 = arith.constant 0 : i32
    %c0_i32_1 = arith.constant 0 : i32
    return %c0_i32, %c0_i32_0 : i32, i32
  }
  func.func @transform_2(%arg0: i32) -> (i32, i32) {
    %c0_i32 = arith.constant 0 : i32
    %c0_i32_0 = arith.constant 0 : i32
    %c0_i32_1 = arith.constant 0 : i32
    return %c0_i32, %c0_i32_0 : i32, i32
  }
  func.func @transform_3(%arg0: i32) -> (i32, i32) {
    %c0_i32 = arith.constant 0 : i32
    %c0_i32_0 = arith.constant 0 : i32
    return %c0_i32, %arg0 : i32, i32
  }
}

module attributes {stable_mosaic.version = 11 : i64} {
  func.func @_tail_kernel(%arg0: i32, %arg1: memref<27x2x343xf32, #tpu.memory_space<vmem>>, %arg2: memref<27x1x1xf32, #tpu.memory_space<vmem>>, %arg3: memref<343x27xf32, #tpu.memory_space<vmem>>, %arg4: memref<27x1024xf32, #tpu.memory_space<vmem>>, %arg5: memref<128x128xf32, #tpu.memory_space<vmem>>, %arg6: memref<1x128xf32, #tpu.memory_space<vmem>>, %arg7: memref<1x128xf32, #tpu.memory_space<vmem>>, %arg8: memref<1x3xf32, #tpu.memory_space<smem>>, %arg9: memref<2x1xf32, #tpu.memory_space<vmem>>) attributes {dimension_semantics = [#tpu.dimension_semantics<arbitrary>], iteration_bounds = array<i64: 1>, scalar_prefetch = 0 : i64, scratch_operands = 0 : i64, tpu.core_type = #tpu.core_type<tc>, window_params = [{pipeline_mode = #tpu.pipeline_mode<synchronous>, transform_indices = @transform_0, window_bounds = array<i64: 27, 2, 343>}, {pipeline_mode = #tpu.pipeline_mode<synchronous>, transform_indices = @transform_1, window_bounds = array<i64: 27, 1, 1>}, {pipeline_mode = #tpu.pipeline_mode<synchronous>, transform_indices = @transform_2, window_bounds = array<i64: 343, 27>}, {pipeline_mode = #tpu.pipeline_mode<synchronous>, transform_indices = @transform_3, window_bounds = array<i64: 27, 1024>}, {pipeline_mode = #tpu.pipeline_mode<synchronous>, transform_indices = @transform_4, window_bounds = array<i64: 128, 128>}, {pipeline_mode = #tpu.pipeline_mode<synchronous>, transform_indices = @transform_5, window_bounds = array<i64: 1, 128>}, {pipeline_mode = #tpu.pipeline_mode<synchronous>, transform_indices = @transform_6, window_bounds = array<i64: 1, 128>}, {transform_indices = @transform_7, window_bounds = array<i64: 1, 3>}, {pipeline_mode = #tpu.pipeline_mode<synchronous>, transform_indices = @transform_8, window_bounds = array<i64: 2, 1>}]} {
    %c0 = arith.constant 0 : index
    %c0_0 = arith.constant 0 : index
    %c0_1 = arith.constant 0 : index
    %0 = vector.load %arg1[%c0, %c0_0, %c0_1] : memref<27x2x343xf32, #tpu.memory_space<vmem>>, vector<27x2x343xf32>
    %c0_2 = arith.constant 0 : index
    %c0_3 = arith.constant 0 : index
    %c0_4 = arith.constant 0 : index
    %1 = vector.load %arg2[%c0_2, %c0_3, %c0_4] : memref<27x1x1xf32, #tpu.memory_space<vmem>>, vector<27x1x1xf32>
    %2 = vector.broadcast %1 : vector<27x1x1xf32> to vector<27x2x343xf32>
    %3 = arith.mulf %0, %2 : vector<27x2x343xf32>
    %cst = arith.constant dense<0.000000e+00> : vector<2x343xf32>
    %4 = vector.multi_reduction <add>, %3, %cst [0] : vector<27x2x343xf32> to vector<2x343xf32>
    %c0_5 = arith.constant 0 : index
    %c0_6 = arith.constant 0 : index
    %5 = memref.load %arg8[%c0_5, %c0_6] : memref<1x3xf32, #tpu.memory_space<smem>>
    %6 = vector.broadcast %5 : f32 to vector<2x343xf32>
    %7 = arith.addf %4, %6 : vector<2x343xf32>
    %cst_7 = arith.constant 0.000000e+00 : f32
    %8 = vector.broadcast %cst_7 : f32 to vector<2x343xf32>
    %9 = arith.maximumf %7, %8 : vector<2x343xf32>
    %c0_8 = arith.constant 0 : index
    %c0_9 = arith.constant 0 : index
    %10 = vector.load %arg3[%c0_8, %c0_9] : memref<343x27xf32, #tpu.memory_space<vmem>>, vector<343x27xf32>
    %cst_10 = arith.constant dense<0.000000e+00> : vector<2x27xf32>
    %11 = tpu.matmul %9, %10, %cst_10 {dimension_numbers = #tpu.dot_dimension_numbers<[1], [0], [0], [1], [0, 0, 1, 1], [], []>} : vector<2x343xf32>, vector<343x27xf32>, vector<2x27xf32> -> vector<2x27xf32>
    %c0_11 = arith.constant 0 : index
    %c1 = arith.constant 1 : index
    %12 = memref.load %arg8[%c0_11, %c1] : memref<1x3xf32, #tpu.memory_space<smem>>
    %13 = vector.broadcast %12 : f32 to vector<2x27xf32>
    %14 = arith.addf %11, %13 : vector<2x27xf32>
    %cst_12 = arith.constant 0.000000e+00 : f32
    %15 = vector.broadcast %cst_12 : f32 to vector<2x27xf32>
    %16 = arith.maximumf %14, %15 : vector<2x27xf32>
    %c0_13 = arith.constant 0 : index
    %c0_14 = arith.constant 0 : index
    %17 = vector.load %arg4[%c0_13, %c0_14] : memref<27x1024xf32, #tpu.memory_space<vmem>>, vector<27x1024xf32>
    %cst_15 = arith.constant dense<0.000000e+00> : vector<2x1024xf32>
    %18 = tpu.matmul %16, %17, %cst_15 {dimension_numbers = #tpu.dot_dimension_numbers<[1], [0], [0], [1], [0, 0, 1, 1], [], []>} : vector<2x27xf32>, vector<27x1024xf32>, vector<2x1024xf32> -> vector<2x1024xf32>
    %19 = vector.extract_strided_slice %18 {offsets = [0, 0], sizes = [2, 128], strides = [1, 1]} : vector<2x1024xf32> to vector<2x128xf32>
    %20 = vector.extract_strided_slice %18 {offsets = [0, 128], sizes = [2, 128], strides = [1, 1]} : vector<2x1024xf32> to vector<2x128xf32>
    %21 = arith.maximumf %19, %20 : vector<2x128xf32>
    %22 = vector.extract_strided_slice %18 {offsets = [0, 256], sizes = [2, 128], strides = [1, 1]} : vector<2x1024xf32> to vector<2x128xf32>
    %23 = arith.maximumf %21, %22 : vector<2x128xf32>
    %24 = vector.extract_strided_slice %18 {offsets = [0, 384], sizes = [2, 128], strides = [1, 1]} : vector<2x1024xf32> to vector<2x128xf32>
    %25 = arith.maximumf %23, %24 : vector<2x128xf32>
    %26 = vector.extract_strided_slice %18 {offsets = [0, 512], sizes = [2, 128], strides = [1, 1]} : vector<2x1024xf32> to vector<2x128xf32>
    %27 = arith.maximumf %25, %26 : vector<2x128xf32>
    %28 = vector.extract_strided_slice %18 {offsets = [0, 640], sizes = [2, 128], strides = [1, 1]} : vector<2x1024xf32> to vector<2x128xf32>
    %29 = arith.maximumf %27, %28 : vector<2x128xf32>
    %30 = vector.extract_strided_slice %18 {offsets = [0, 768], sizes = [2, 128], strides = [1, 1]} : vector<2x1024xf32> to vector<2x128xf32>
    %31 = arith.maximumf %29, %30 : vector<2x128xf32>
    %32 = vector.extract_strided_slice %18 {offsets = [0, 896], sizes = [2, 128], strides = [1, 1]} : vector<2x1024xf32> to vector<2x128xf32>
    %33 = arith.maximumf %31, %32 : vector<2x128xf32>
    %c0_16 = arith.constant 0 : index
    %c0_17 = arith.constant 0 : index
    %34 = vector.load %arg5[%c0_16, %c0_17] : memref<128x128xf32, #tpu.memory_space<vmem>>, vector<128x128xf32>
    %cst_18 = arith.constant dense<0.000000e+00> : vector<2x128xf32>
    %35 = tpu.matmul %33, %34, %cst_18 {dimension_numbers = #tpu.dot_dimension_numbers<[1], [0], [0], [1], [0, 0, 1, 1], [], []>} : vector<2x128xf32>, vector<128x128xf32>, vector<2x128xf32> -> vector<2x128xf32>
    %c0_19 = arith.constant 0 : index
    %c0_20 = arith.constant 0 : index
    %36 = vector.load %arg6[%c0_19, %c0_20] : memref<1x128xf32, #tpu.memory_space<vmem>>, vector<1x128xf32>
    %37 = vector.broadcast %36 : vector<1x128xf32> to vector<2x128xf32>
    %38 = arith.addf %35, %37 : vector<2x128xf32>
    %cst_21 = arith.constant 0.000000e+00 : f32
    %39 = vector.broadcast %cst_21 : f32 to vector<2x128xf32>
    %40 = arith.maximumf %38, %39 : vector<2x128xf32>
    %c0_22 = arith.constant 0 : index
    %c0_23 = arith.constant 0 : index
    %41 = vector.load %arg7[%c0_22, %c0_23] : memref<1x128xf32, #tpu.memory_space<vmem>>, vector<1x128xf32>
    %42 = vector.broadcast %41 : vector<1x128xf32> to vector<2x128xf32>
    %43 = arith.mulf %40, %42 : vector<2x128xf32>
    %cst_24 = arith.constant dense<0.000000e+00> : vector<2xf32>
    %44 = vector.multi_reduction <add>, %43, %cst_24 [1] : vector<2x128xf32> to vector<2xf32>
    %45 = vector.shape_cast %44 : vector<2xf32> to vector<2x1xf32>
    %c0_25 = arith.constant 0 : index
    %c2 = arith.constant 2 : index
    %46 = memref.load %arg8[%c0_25, %c2] : memref<1x3xf32, #tpu.memory_space<smem>>
    %47 = vector.broadcast %46 : f32 to vector<2x1xf32>
    %48 = arith.addf %45, %47 : vector<2x1xf32>
    %c0_26 = arith.constant 0 : index
    %c0_27 = arith.constant 0 : index
    %49 = vector.load %arg9[%c0_26, %c0_27] : memref<2x1xf32, #tpu.memory_space<vmem>>, vector<2x1xf32>
    tpu.vector_store %arg9[%c0_26, %c0_27], %48 {strides = array<i32>} : memref<2x1xf32, #tpu.memory_space<vmem>>, vector<2x1xf32>,
    return
  }
  func.func @transform_0(%arg0: i32) -> (i32, i32, i32) {
    %c0_i32 = arith.constant 0 : i32
    %c0_i32_0 = arith.constant 0 : i32
    %c0_i32_1 = arith.constant 0 : i32
    %c0_i32_2 = arith.constant 0 : i32
    return %c0_i32, %c0_i32_0, %c0_i32_1 : i32, i32, i32
  }
  func.func @transform_1(%arg0: i32) -> (i32, i32, i32) {
    %c0_i32 = arith.constant 0 : i32
    %c0_i32_0 = arith.constant 0 : i32
    %c0_i32_1 = arith.constant 0 : i32
    %c0_i32_2 = arith.constant 0 : i32
    return %c0_i32, %c0_i32_0, %c0_i32_1 : i32, i32, i32
  }
  func.func @transform_2(%arg0: i32) -> (i32, i32) {
    %c0_i32 = arith.constant 0 : i32
    %c0_i32_0 = arith.constant 0 : i32
    %c0_i32_1 = arith.constant 0 : i32
    return %c0_i32, %c0_i32_0 : i32, i32
  }
  func.func @transform_3(%arg0: i32) -> (i32, i32) {
    %c0_i32 = arith.constant 0 : i32
    %c0_i32_0 = arith.constant 0 : i32
    %c0_i32_1 = arith.constant 0 : i32
    return %c0_i32, %c0_i32_0 : i32, i32
  }
  func.func @transform_4(%arg0: i32) -> (i32, i32) {
    %c0_i32 = arith.constant 0 : i32
    %c0_i32_0 = arith.constant 0 : i32
    %c0_i32_1 = arith.constant 0 : i32
    return %c0_i32, %c0_i32_0 : i32, i32
  }
  func.func @transform_5(%arg0: i32) -> (i32, i32) {
    %c0_i32 = arith.constant 0 : i32
    %c0_i32_0 = arith.constant 0 : i32
    %c0_i32_1 = arith.constant 0 : i32
    return %c0_i32, %c0_i32_0 : i32, i32
  }
  func.func @transform_6(%arg0: i32) -> (i32, i32) {
    %c0_i32 = arith.constant 0 : i32
    %c0_i32_0 = arith.constant 0 : i32
    %c0_i32_1 = arith.constant 0 : i32
    return %c0_i32, %c0_i32_0 : i32, i32
  }
  func.func @transform_7(%arg0: i32) -> (i32, i32) {
    %c0_i32 = arith.constant 0 : i32
    %c0_i32_0 = arith.constant 0 : i32
    %c0_i32_1 = arith.constant 0 : i32
    return %c0_i32, %c0_i32_0 : i32, i32
  }
  func.func @transform_8(%arg0: i32) -> (i32, i32) {
    %c0_i32 = arith.constant 0 : i32
    %c0_i32_0 = arith.constant 0 : i32
    %c0_i32_1 = arith.constant 0 : i32
    return %c0_i32, %c0_i32_0 : i32, i32
  }
}

</mosaic_0001>

<llo_original>
// kernel: squeeze.2
$region0: #{squeeze.2}
  %s0 = inlined_call_operand.vmem [shape: f32[6750], index: 0, kind: input, shape index: {}]
  %s1 = inlined_call_operand.vmem [shape: f32[2,15,15,15], index: 1, kind: output, shape index: {}]
  %v2 = vld [vmem:[%s0] ss:$15 sm:$0xf]
  %vm3 = vcmask 121856
  %4 = vst.msk [vmem:[%s1] ss:$136 sm:$0x3] %vm3, %v2
  %s5 = scalar_lea.vmem %s1, 1
  %6 = vst.msk [vmem:[%s5] ss:$136 sm:$0xc] %vm3, %v2
  %s7 = scalar_lea.vmem %s0, 43
  %s8 = smov 3
  %v9 = vld [vmem:[%s7] ss:$-30 sm:%s8]
  %s10 = scalar_lea.vmem %s0, 26
  %v11 = vld [vmem:[%s10] sm:$0x4]
  %vm12 = vcmask 1042434
  %v13 = vsel %vm12, %v11, %v9
  %14 = vrot.lane.b32.xlu0 %v13, 127
  %v15 = vpop.permute.xlu0 %14
  %vm16 = vcmask 121856
  %s17 = scalar_lea.vmem %s1, 391
  %18 = vst.msk [vmem:[%s17] ss:$-273 sm:$0x3] %vm16, %v15
  %s19 = scalar_lea.vmem %s1, 252
  %20 = vst.msk [vmem:[%s19] sm:$0x4] %vm16, %v15
  %s21 = scalar_lea.vmem %s0, 11
  %v22 = vld [vmem:[%s21] ss:$15 sm:$0x7]
  %23 = vrot.lane.b32.xlu0 %v22, 126
  %v24 = vpop.permute.xlu0 %23
  %vm25 = vcmask 121856
  %s26 = scalar_lea.vmem %s1, 100
  %27 = vst.msk [vmem:[%s26] ss:$136 sm:$0x3] %vm25, %v24
  %s28 = scalar_lea.vmem %s1, 371
  %29 = vst.msk [vmem:[%s28] sm:$0x4] %vm25, %v24
  %s30 = scalar_lea.vmem %s0, 39
  %s31 = smov 3
  %v32 = vld [vmem:[%s30] ss:$-30 sm:%s31]
  %s33 = scalar_lea.vmem %s0, 22
  %v34 = vld [vmem:[%s33] sm:$0x4]
  %vm35 = vcmask 1042434
  %v36 = vsel %vm35, %v34, %v32
  %37 = vrot.lane.b32.xlu0 %v36, 125
  %v38 = vpop.permute.xlu0 %37
  %vm39 = vcmask 121856
  %s40 = scalar_lea.vmem %s1, 355
  %41 = vst.msk [vmem:[%s40] ss:$-273 sm:$0x3] %vm39, %v38
  %s42 = scalar_lea.vmem %s1, 216
  %43 = vst.msk [vmem:[%s42] sm:$0x4] %vm39, %v38
  %s44 = scalar_lea.vmem %s0, 7
  %v45 = vld [vmem:[%s44] ss:$15 sm:$0xf]
  %46 = vrot.lane.b32.xlu0 %v45, 124
  %v47 = vpop.permute.xlu0 %46
  %vm48 = vcmask 121856
  %s49 = scalar_lea.vmem %s1, 64
  %50 = vst.msk [vmem:[%s49] ss:$136 sm:$0x3] %vm48, %v47
  %s51 = scalar_lea.vmem %s1, 65
  %52 = vst.msk [vmem:[%s51] ss:$136 sm:$0xc] %vm48, %v47
  %s53 = scalar_lea.vmem %s0, 50
  %s54 = smov 3
  %v55 = vld [vmem:[%s53] ss:$-45 sm:%s54]
  %s56 = scalar_lea.vmem %s0, 4294967286
  %s57 = smov 12
  %v58 = vld [vmem:[%s56] ss:$15 sm:%s57]
  %vm59 = vcmask 1043458
  %v60 = vsel %vm59, %v58, %v55
  %61 = vrot.lane.b32.xlu0 %v60, 123
  %v62 = vpop.permute.xlu0 %61
  %vm63 = vcmask 121856
  %s64 = scalar_lea.vmem %s1, 455
  %65 = vst.msk [vmem:[%s64] ss:$-410 sm:$0x3] %vm63, %v62
  %s66 = scalar_lea.vmem %s1, 4294967206
  %67 = vst.msk [vmem:[%s66] ss:$136 sm:$0xc] %vm63, %v62
  %s68 = scalar_lea.vmem %s0, 18
  %v69 = vld [vmem:[%s68] ss:$15 sm:$0x7]
  %v70 = vld [vmem:[%s0] sm:$0x8]
  %vm71 = vcmask 1043459
  %v72 = vsel %vm71, %v70, %v69
  %73 = vrot.lane.b32.xlu0 %v72, 122
  %v74 = vpop.permute.xlu0 %73
  %vm75 = vcmask 121856
  %s76 = scalar_lea.vmem %s1, 164
  %77 = vst.msk [vmem:[%s76] ss:$136 sm:$0x3] %vm75, %v74
  %s78 = scalar_lea.vmem %s1, 1257
  %79 = vst.msk [vmem:[%s78] ss:$-410 sm:$0xc] %vm75, %v74
  %s80 = scalar_lea.vmem %s0, 46
  %s81 = smov 3
  %v82 = vld [vmem:[%s80] ss:$-45 sm:%s81]
  %s83 = scalar_lea.vmem %s0, 4294967282
  %s84 = smov 12
  %v85 = vld [vmem:[%s83] ss:$15 sm:%s84]
  %vm86 = vcmask 1043458
  %v87 = vsel %vm86, %v85, %v82
  %88 = vrot.lane.b32.xlu0 %v87, 121
  %v89 = vpop.permute.xlu0 %88
  %vm90 = vcmask 121856
  %s91 = scalar_lea.vmem %s1, 419
  %92 = vst.msk [vmem:[%s91] ss:$-410 sm:$0x3] %vm90, %v89
  %s93 = scalar_lea.vmem %s1, 4294967170
  %94 = vst.msk [vmem:[%s93] ss:$136 sm:$0xc] %vm90, %v89
  %s95 = scalar_lea.vmem %s0, 14
  %v96 = vld [vmem:[%s95] ss:$15 sm:$0x7]
  %97 = vrot.lane.b32.xlu0 %v96, 120
  %v98 = vpop.permute.xlu0 %97
  %vm99 = vcmask 121856
  %s100 = scalar_lea.vmem %s1, 128
  %101 = vst.msk [vmem:[%s100] ss:$136 sm:$0x3] %vm99, %v98
  %s102 = scalar_lea.vmem %s1, 399
  %103 = vst.msk [vmem:[%s102] sm:$0x4] %vm99, %v98
  %s104 = scalar_lea.vmem %s0, 12
  %v105 = vld [vmem:[%s104] ss:$15 sm:$0x7]
  %106 = vrot.lane.b32.xlu0 %v105, 119
  %v107 = vpop.permute.xlu0 %106
  %vm108 = vcmask 121856
  %s109 = scalar_lea.vmem %s1, 109
  %110 = vst.msk [vmem:[%s109] ss:$137 sm:$0x3] %vm108, %v107
  %s111 = scalar_lea.vmem %s1, 380
  %112 = vst.msk [vmem:[%s111] sm:$0x4] %vm108, %v107
  %s113 = scalar_lea.vmem %s0, 25
  %s114 = smov 3
  %v115 = vld [vmem:[%s113] ss:$15 sm:%s114]
  %s116 = scalar_lea.vmem %s0, 8
  %v117 = vld [vmem:[%s116] sm:$0x4]
  %vm118 = vcmask 1042434
  %v119 = vsel %vm118, %v117, %v115
  %120 = vrot.lane.b32.xlu0 %v119, 118
  %v121 = vpop.permute.xlu0 %120
  %vm122 = vcmask 121856
  %s123 = scalar_lea.vmem %s1, 228
  %124 = vst.msk [vmem:[%s123] ss:$136 sm:$0x3] %vm122, %v121
  %s125 = scalar_lea.vmem %s1, 89
  %126 = vst.msk [vmem:[%s125] sm:$0x4] %vm122, %v121
  %s127 = scalar_lea.vmem %s0, 8
  %v128 = vld [vmem:[%s127] ss:$15 sm:$0x7]
  %129 = vrot.lane.b32.xlu0 %v128, 117
  %v130 = vpop.permute.xlu0 %129
  %vm131 = vcmask 121856
  %s132 = scalar_lea.vmem %s1, 73
  %133 = vst.msk [vmem:[%s132] ss:$137 sm:$0x3] %vm131, %v130
  %s134 = scalar_lea.vmem %s1, 344
  %135 = vst.msk [vmem:[%s134] sm:$0x4] %vm131, %v130
  %s136 = scalar_lea.vmem %s0, 21
  %v137 = vld [vmem:[%s136] ss:$15 sm:$0x7]
  %s138 = scalar_lea.vmem %s0, 3
  %v139 = vld [vmem:[%s138] sm:$0x8]
  %vm140 = vcmask 1043459
  %v141 = vsel %vm140, %v139, %v137
  %142 = vrot.lane.b32.xlu0 %v141, 116
  %v143 = vpop.permute.xlu0 %142
  %vm144 = vcmask 121856
  %s145 = scalar_lea.vmem %s1, 192
  %146 = vst.msk [vmem:[%s145] ss:$136 sm:$0x3] %vm144, %v143
  %s147 = scalar_lea.vmem %s1, 1285
  %148 = vst.msk [vmem:[%s147] ss:$-410 sm:$0xc] %vm144, %v143
  %s149 = scalar_lea.vmem %s0, 4
  %v150 = vld [vmem:[%s149] ss:$15 sm:$0xf]
  %151 = vrot.lane.b32.xlu0 %v150, 115
  %v152 = vpop.permute.xlu0 %151
  %vm153 = vcmask 121856
  %s154 = scalar_lea.vmem %s1, 37
  %155 = vst.msk [vmem:[%s154] ss:$136 sm:$0x3] %vm153, %v152
  %s156 = scalar_lea.vmem %s1, 38
  %157 = vst.msk [vmem:[%s156] ss:$136 sm:$0xc] %vm153, %v152
  %s158 = scalar_lea.vmem %s0, 32
  %s159 = smov 3
  %v160 = vld [vmem:[%s158] ss:$15 sm:%s159]
  %s161 = scalar_lea.vmem %s0, 4294967268
  %s162 = smov 12
  %v163 = vld [vmem:[%s161] ss:$15 sm:%s162]
  %vm164 = vcmask 1043458
  %v165 = vsel %vm164, %v163, %v160
  %166 = vrot.lane.b32.xlu0 %v165, 114
  %v167 = vpop.permute.xlu0 %166
  %vm168 = vcmask 121856
  %s169 = scalar_lea.vmem %s1, 292
  %170 = vst.msk [vmem:[%s169] ss:$136 sm:$0x3] %vm168, %v167
  %s171 = scalar_lea.vmem %s1, 4294967043
  %172 = vst.msk [vmem:[%s171] ss:$136 sm:$0xc] %vm168, %v167
  %v173 = vld [vmem:[%s0] ss:$15 sm:$0xf]
  %174 = vrot.lane.b32.xlu0 %v173, 113
  %v175 = vpop.permute.xlu0 %174
  %vm176 = vcmask 121856
  %s177 = scalar_lea.vmem %s1, 1
  %178 = vst.msk [vmem:[%s177] ss:$136 sm:$0x3] %vm176, %v175
  %s179 = scalar_lea.vmem %s1, 2
  %180 = vst.msk [vmem:[%s179] ss:$136 sm:$0xc] %vm176, %v175
  %s181 = scalar_lea.vmem %s0, 28
  %s182 = smov 3
  %v183 = vld [vmem:[%s181] ss:$15 sm:%s182]
  %s184 = scalar_lea.vmem %s0, 11
  %v185 = vld [vmem:[%s184] sm:$0x4]
  %vm186 = vcmask 1042434
  %v187 = vsel %vm186, %v185, %v183
  %188 = vrot.lane.b32.xlu0 %v187, 112
  %v189 = vpop.permute.xlu0 %188
  %vm190 = vcmask 121856
  %s191 = scalar_lea.vmem %s1, 256
  %192 = vst.msk [vmem:[%s191] ss:$136 sm:$0x3] %vm190, %v189
  %s193 = scalar_lea.vmem %s1, 117
  %194 = vst.msk [vmem:[%s193] sm:$0x4] %vm190, %v189
  %s195 = scalar_lea.vmem %s0, 11
  %v196 = vld [vmem:[%s195] ss:$15 sm:$0x7]
  %197 = vrot.lane.b32.xlu0 %v196, 111
  %v198 = vpop.permute.xlu0 %197
  %vm199 = vcmask 121856
  %s200 = scalar_lea.vmem %s1, 101
  %201 = vst.msk [vmem:[%s200] ss:$136 sm:$0x3] %vm199, %v198
  %s202 = scalar_lea.vmem %s1, 372
  %203 = vst.msk [vmem:[%s202] sm:$0x4] %vm199, %v198
  %s204 = scalar_lea.vmem %s0, 39
  %s205 = smov 3
  %v206 = vld [vmem:[%s204] ss:$-30 sm:%s205]
  %s207 = scalar_lea.vmem %s0, 22
  %v208 = vld [vmem:[%s207] sm:$0x4]
  %vm209 = vcmask 1042434
  %v210 = vsel %vm209, %v208, %v206
  %211 = vrot.lane.b32.xlu0 %v210, 110
  %v212 = vpop.permute.xlu0 %211
  %vm213 = vcmask 121856
  %s214 = scalar_lea.vmem %s1, 356
  %215 = vst.msk [vmem:[%s214] ss:$-273 sm:$0x3] %vm213, %v212
  %s216 = scalar_lea.vmem %s1, 217
  %217 = vst.msk [vmem:[%s216] sm:$0x4] %vm213, %v212
  %s218 = scalar_lea.vmem %s0, 7
  %v219 = vld [vmem:[%s218] ss:$15 sm:$0xf]
  %220 = vrot.lane.b32.xlu0 %v219, 109
  %v221 = vpop.permute.xlu0 %220
  %vm222 = vcmask 121856
  %s223 = scalar_lea.vmem %s1, 65
  %224 = vst.msk [vmem:[%s223] ss:$136 sm:$0x3] %vm222, %v221
  %s225 = scalar_lea.vmem %s1, 66
  %226 = vst.msk [vmem:[%s225] ss:$136 sm:$0xc] %vm222, %v221
  %s227 = scalar_lea.vmem %s0, 35
  %s228 = smov 3
  %v229 = vld [vmem:[%s227] ss:$15 sm:%s228]
  %s230 = scalar_lea.vmem %s0, 4294967271
  %s231 = smov 12
  %v232 = vld [vmem:[%s230] ss:$15 sm:%s231]
  %vm233 = vcmask 1043458
  %v234 = vsel %vm233, %v232, %v229
  %235 = vrot.lane.b32.xlu0 %v234, 108
  %v236 = vpop.permute.xlu0 %235
  %vm237 = vcmask 121856
  %s238 = scalar_lea.vmem %s1, 320
  %239 = vst.msk [vmem:[%s238] ss:$136 sm:$0x3] %vm237, %v236
  %s240 = scalar_lea.vmem %s1, 4294967068
  %241 = vst.msk [vmem:[%s240] ss:$137 sm:$0xc] %vm237, %v236
  %s242 = scalar_lea.vmem %s0, 18
  %v243 = vld [vmem:[%s242] ss:$15 sm:$0x7]
  %v244 = vld [vmem:[%s0] sm:$0x8]
  %vm245 = vcmask 1043459
  %v246 = vsel %vm245, %v244, %v243
  %247 = vrot.lane.b32.xlu0 %v246, 107
  %v248 = vpop.permute.xlu0 %247
  %vm249 = vcmask 121856
  %s250 = scalar_lea.vmem %s1, 165
  %251 = vst.msk [vmem:[%s250] ss:$136 sm:$0x3] %vm249, %v248
  %s252 = scalar_lea.vmem %s1, 1258
  %253 = vst.msk [vmem:[%s252] ss:$-410 sm:$0xc] %vm249, %v248
  %s254 = scalar_lea.vmem %s0, 46
  %s255 = smov 3
  %v256 = vld [vmem:[%s254] ss:$-45 sm:%s255]
  %s257 = scalar_lea.vmem %s0, 4294967282
  %s258 = smov 12
  %v259 = vld [vmem:[%s257] ss:$15 sm:%s258]
  %vm260 = vcmask 1043458
  %v261 = vsel %vm260, %v259, %v256
  %262 = vrot.lane.b32.xlu0 %v261, 106
  %v263 = vpop.permute.xlu0 %262
  %vm264 = vcmask 121856
  %s265 = scalar_lea.vmem %s1, 420
  %266 = vst.msk [vmem:[%s265] ss:$-410 sm:$0x3] %vm264, %v263
  %s267 = scalar_lea.vmem %s1, 4294967171
  %268 = vst.msk [vmem:[%s267] ss:$136 sm:$0xc] %vm264, %v263
  %s269 = scalar_lea.vmem %s0, 14
  %v270 = vld [vmem:[%s269] ss:$15 sm:$0x7]
  %271 = vrot.lane.b32.xlu0 %v270, 105
  %v272 = vpop.permute.xlu0 %271
  %vm273 = vcmask 121856
  %s274 = scalar_lea.vmem %s1, 129
  %275 = vst.msk [vmem:[%s274] ss:$136 sm:$0x3] %vm273, %v272
  %s276 = scalar_lea.vmem %s1, 400
  %277 = vst.msk [vmem:[%s276] sm:$0x4] %vm273, %v272
  %s278 = scalar_lea.vmem %s0, 42
  %s279 = smov 3
  %v280 = vld [vmem:[%s278] ss:$-30 sm:%s279]
  %s281 = scalar_lea.vmem %s0, 25
  %v282 = vld [vmem:[%s281] sm:$0x4]
  %vm283 = vcmask 1042434
  %v284 = vsel %vm283, %v282, %v280
  %285 = vrot.lane.b32.xlu0 %v284, 104
  %v286 = vpop.permute.xlu0 %285
  %vm287 = vcmask 121856
  %s288 = scalar_lea.vmem %s1, 384
  %289 = vst.msk [vmem:[%s288] ss:$-274 sm:$0x3] %vm287, %v286
  %s290 = scalar_lea.vmem %s1, 245
  %291 = vst.msk [vmem:[%s290] sm:$0x4] %vm287, %v286
  %s292 = scalar_lea.vmem %s0, 25
  %s293 = smov 3
  %v294 = vld [vmem:[%s292] ss:$15 sm:%s293]
  %s295 = scalar_lea.vmem %s0, 8
  %v296 = vld [vmem:[%s295] sm:$0x4]
  %vm297 = vcmask 1042434
  %v298 = vsel %vm297, %v296, %v294
  %299 = vrot.lane.b32.xlu0 %v298, 103
  %v300 = vpop.permute.xlu0 %299
  %vm301 = vcmask 121856
  %s302 = scalar_lea.vmem %s1, 229
  %303 = vst.msk [vmem:[%s302] ss:$136 sm:$0x3] %vm301, %v300
  %s304 = scalar_lea.vmem %s1, 90
  %305 = vst.msk [vmem:[%s304] sm:$0x4] %vm301, %v300
  %s306 = scalar_lea.vmem %s0, 8
  %v307 = vld [vmem:[%s306] ss:$15 sm:$0x7]
  %308 = vrot.lane.b32.xlu0 %v307, 102
  %v309 = vpop.permute.xlu0 %308
  %vm310 = vcmask 121856
  %s311 = scalar_lea.vmem %s1, 74
  %312 = vst.msk [vmem:[%s311] ss:$137 sm:$0x3] %vm310, %v309
  %s313 = scalar_lea.vmem %s1, 345
  %314 = vst.msk [vmem:[%s313] sm:$0x4] %vm310, %v309
  %s315 = scalar_lea.vmem %s0, 21
  %v316 = vld [vmem:[%s315] ss:$15 sm:$0x7]
  %s317 = scalar_lea.vmem %s0, 3
  %v318 = vld [vmem:[%s317] sm:$0x8]
  %vm319 = vcmask 1043459
  %v320 = vsel %vm319, %v318, %v316
  %321 = vrot.lane.b32.xlu0 %v320, 101
  %v322 = vpop.permute.xlu0 %321
  %vm323 = vcmask 121856
  %s324 = scalar_lea.vmem %s1, 193
  %325 = vst.msk [vmem:[%s324] ss:$136 sm:$0x3] %vm323, %v322
  %s326 = scalar_lea.vmem %s1, 1286
  %327 = vst.msk [vmem:[%s326] ss:$-410 sm:$0xc] %vm323, %v322
  %s328 = scalar_lea.vmem %s0, 49
  %s329 = smov 3
  %v330 = vld [vmem:[%s328] ss:$-45 sm:%s329]
  %s331 = scalar_lea.vmem %s0, 4294967285
  %s332 = smov 12
  %v333 = vld [vmem:[%s331] ss:$15 sm:%s332]
  %vm334 = vcmask 1043458
  %v335 = vsel %vm334, %v333, %v330
  %336 = vrot.lane.b32.xlu0 %v335, 100
  %v337 = vpop.permute.xlu0 %336
  %vm338 = vcmask 121856
  %s339 = scalar_lea.vmem %s1, 448
  %340 = vst.msk [vmem:[%s339] ss:$-410 sm:$0x3] %vm338, %v337
  %s341 = scalar_lea.vmem %s1, 4294967196
  %342 = vst.msk [vmem:[%s341] ss:$137 sm:$0xc] %vm338, %v337
  %s343 = scalar_lea.vmem %s0, 32
  %s344 = smov 3
  %v345 = vld [vmem:[%s343] ss:$15 sm:%s344]
  %s346 = scalar_lea.vmem %s0, 4294967268
  %s347 = smov 12
  %v348 = vld [vmem:[%s346] ss:$15 sm:%s347]
  %vm349 = vcmask 1043458
  %v350 = vsel %vm349, %v348, %v345
  %351 = vrot.lane.b32.xlu0 %v350, 99
  %v352 = vpop.permute.xlu0 %351
  %vm353 = vcmask 121856
  %s354 = scalar_lea.vmem %s1, 293
  %355 = vst.msk [vmem:[%s354] ss:$136 sm:$0x3] %vm353, %v352
  %s356 = scalar_lea.vmem %s1, 4294967044
  %357 = vst.msk [vmem:[%s356] ss:$136 sm:$0xc] %vm353, %v352
  %v358 = vld [vmem:[%s0] ss:$15 sm:$0xf]
  %359 = vrot.lane.b32.xlu0 %v358, 98
  %v360 = vpop.permute.xlu0 %359
  %vm361 = vcmask 121856
  %s362 = scalar_lea.vmem %s1, 2
  %363 = vst.msk [vmem:[%s362] ss:$136 sm:$0x3] %vm361, %v360
  %s364 = scalar_lea.vmem %s1, 3
  %365 = vst.msk [vmem:[%s364] ss:$136 sm:$0xc] %vm361, %v360
  %s366 = scalar_lea.vmem %s0, 28
  %s367 = smov 3
  %v368 = vld [vmem:[%s366] ss:$15 sm:%s367]
  %s369 = scalar_lea.vmem %s0, 11
  %v370 = vld [vmem:[%s369] sm:$0x4]
  %vm371 = vcmask 1042434
  %v372 = vsel %vm371, %v370, %v368
  %373 = vrot.lane.b32.xlu0 %v372, 97
  %v374 = vpop.permute.xlu0 %373
  %vm375 = vcmask 121856
  %s376 = scalar_lea.vmem %s1, 257
  %377 = vst.msk [vmem:[%s376] ss:$136 sm:$0x3] %vm375, %v374
  %s378 = scalar_lea.vmem %s1, 118
  %379 = vst.msk [vmem:[%s378] sm:$0x4] %vm375, %v374
  %s380 = scalar_lea.vmem %s0, 11
  %v381 = vld [vmem:[%s380] ss:$15 sm:$0x7]
  %382 = vrot.lane.b32.xlu0 %v381, 96
  %v383 = vpop.permute.xlu0 %382
  %vm384 = vcmask 121856
  %s385 = scalar_lea.vmem %s1, 102
  %386 = vst.msk [vmem:[%s385] ss:$136 sm:$0x3] %vm384, %v383
  %s387 = scalar_lea.vmem %s1, 373
  %388 = vst.msk [vmem:[%s387] sm:$0x4] %vm384, %v383
  %s389 = scalar_lea.vmem %s0, 39
  %s390 = smov 3
  %v391 = vld [vmem:[%s389] ss:$-30 sm:%s390]
  %s392 = scalar_lea.vmem %s0, 22
  %v393 = vld [vmem:[%s392] sm:$0x4]
  %vm394 = vcmask 1042434
  %v395 = vsel %vm394, %v393, %v391
  %396 = vrot.lane.b32.xlu0 %v395, 95
  %v397 = vpop.permute.xlu0 %396
  %vm398 = vcmask 121856
  %s399 = scalar_lea.vmem %s1, 357
  %400 = vst.msk [vmem:[%s399] ss:$-273 sm:$0x3] %vm398, %v397
  %s401 = scalar_lea.vmem %s1, 218
  %402 = vst.msk [vmem:[%s401] sm:$0x4] %vm398, %v397
  %s403 = scalar_lea.vmem %s0, 7
  %v404 = vld [vmem:[%s403] ss:$15 sm:$0xf]
  %405 = vrot.lane.b32.xlu0 %v404, 94
  %v406 = vpop.permute.xlu0 %405
  %vm407 = vcmask 121856
  %s408 = scalar_lea.vmem %s1, 66
  %409 = vst.msk [vmem:[%s408] ss:$136 sm:$0x3] %vm407, %v406
  %s410 = scalar_lea.vmem %s1, 67
  %411 = vst.msk [vmem:[%s410] ss:$136 sm:$0xc] %vm407, %v406
  %s412 = scalar_lea.vmem %s0, 35
  %s413 = smov 3
  %v414 = vld [vmem:[%s412] ss:$15 sm:%s413]
  %s415 = scalar_lea.vmem %s0, 4294967271
  %s416 = smov 12
  %v417 = vld [vmem:[%s415] ss:$15 sm:%s416]
  %vm418 = vcmask 1043458
  %v419 = vsel %vm418, %v417, %v414
  %420 = vrot.lane.b32.xlu0 %v419, 93
  %v421 = vpop.permute.xlu0 %420
  %vm422 = vcmask 121856
  %s423 = scalar_lea.vmem %s1, 321
  %424 = vst.msk [vmem:[%s423] ss:$136 sm:$0x3] %vm422, %v421
  %s425 = scalar_lea.vmem %s1, 4294967072
  %426 = vst.msk [vmem:[%s425] ss:$136 sm:$0xc] %vm422, %v421
  %s427 = scalar_lea.vmem %s0, 18
  %v428 = vld [vmem:[%s427] ss:$15 sm:$0x7]
  %v429 = vld [vmem:[%s0] sm:$0x8]
  %vm430 = vcmask 1043459
  %v431 = vsel %vm430, %v429, %v428
  %432 = vrot.lane.b32.xlu0 %v431, 92
  %v433 = vpop.permute.xlu0 %432
  %vm434 = vcmask 121856
  %s435 = scalar_lea.vmem %s1, 166
  %436 = vst.msk [vmem:[%s435] ss:$136 sm:$0x3] %vm434, %v433
  %s437 = scalar_lea.vmem %s1, 1259
  %438 = vst.msk [vmem:[%s437] ss:$-410 sm:$0xc] %vm434, %v433
  %s439 = scalar_lea.vmem %s0, 46
  %s440 = smov 3
  %v441 = vld [vmem:[%s439] ss:$-45 sm:%s440]
  %s442 = scalar_lea.vmem %s0, 4294967282
  %s443 = smov 12
  %v444 = vld [vmem:[%s442] ss:$15 sm:%s443]
  %vm445 = vcmask 1043458
  %v446 = vsel %vm445, %v444, %v441
  %447 = vrot.lane.b32.xlu0 %v446, 91
  %v448 = vpop.permute.xlu0 %447
  %vm449 = vcmask 121856
  %s450 = scalar_lea.vmem %s1, 421
  %451 = vst.msk [vmem:[%s450] ss:$-410 sm:$0x3] %vm449, %v448
  %s452 = scalar_lea.vmem %s1, 4294967172
  %453 = vst.msk [vmem:[%s452] ss:$136 sm:$0xc] %vm449, %v448
  %s454 = scalar_lea.vmem %s0, 14
  %v455 = vld [vmem:[%s454] ss:$15 sm:$0x7]
  %456 = vrot.lane.b32.xlu0 %v455, 90
  %v457 = vpop.permute.xlu0 %456
  %vm458 = vcmask 121856
  %s459 = scalar_lea.vmem %s1, 130
  %460 = vst.msk [vmem:[%s459] ss:$136 sm:$0x3] %vm458, %v457
  %s461 = scalar_lea.vmem %s1, 401
  %462 = vst.msk [vmem:[%s461] sm:$0x4] %vm458, %v457
  %s463 = scalar_lea.vmem %s0, 42
  %s464 = smov 3
  %v465 = vld [vmem:[%s463] ss:$-30 sm:%s464]
  %s466 = scalar_lea.vmem %s0, 25
  %v467 = vld [vmem:[%s466] sm:$0x4]
  %vm468 = vcmask 1042434
  %v469 = vsel %vm468, %v467, %v465
  %470 = vrot.lane.b32.xlu0 %v469, 89
  %v471 = vpop.permute.xlu0 %470
  %vm472 = vcmask 121856
  %s473 = scalar_lea.vmem %s1, 385
  %474 = vst.msk [vmem:[%s473] ss:$-273 sm:$0x3] %vm472, %v471
  %s475 = scalar_lea.vmem %s1, 246
  %476 = vst.msk [vmem:[%s475] sm:$0x4] %vm472, %v471
  %s477 = scalar_lea.vmem %s0, 25
  %s478 = smov 3
  %v479 = vld [vmem:[%s477] ss:$15 sm:%s478]
  %s480 = scalar_lea.vmem %s0, 8
  %v481 = vld [vmem:[%s480] sm:$0x4]
  %vm482 = vcmask 1042434
  %v483 = vsel %vm482, %v481, %v479
  %484 = vrot.lane.b32.xlu0 %v483, 88
  %v485 = vpop.permute.xlu0 %484
  %vm486 = vcmask 121856
  %s487 = scalar_lea.vmem %s1, 230
  %488 = vst.msk [vmem:[%s487] ss:$136 sm:$0x3] %vm486, %v485
  %s489 = scalar_lea.vmem %s1, 91
  %490 = vst.msk [vmem:[%s489] sm:$0x4] %vm486, %v485
  %s491 = scalar_lea.vmem %s0, 8
  %v492 = vld [vmem:[%s491] ss:$15 sm:$0x7]
  %493 = vrot.lane.b32.xlu0 %v492, 87
  %v494 = vpop.permute.xlu0 %493
  %vm495 = vcmask 121856
  %s496 = scalar_lea.vmem %s1, 75
  %497 = vst.msk [vmem:[%s496] ss:$137 sm:$0x3] %vm495, %v494
  %s498 = scalar_lea.vmem %s1, 346
  %499 = vst.msk [vmem:[%s498] sm:$0x4] %vm495, %v494
  %s500 = scalar_lea.vmem %s0, 21
  %v501 = vld [vmem:[%s500] ss:$15 sm:$0x7]
  %s502 = scalar_lea.vmem %s0, 3
  %v503 = vld [vmem:[%s502] sm:$0x8]
  %vm504 = vcmask 1043459
  %v505 = vsel %vm504, %v503, %v501
  %506 = vrot.lane.b32.xlu0 %v505, 86
  %v507 = vpop.permute.xlu0 %506
  %vm508 = vcmask 121856
  %s509 = scalar_lea.vmem %s1, 194
  %510 = vst.msk [vmem:[%s509] ss:$136 sm:$0x3] %vm508, %v507
  %s511 = scalar_lea.vmem %s1, 1287
  %512 = vst.msk [vmem:[%s511] ss:$-410 sm:$0xc] %vm508, %v507
  %s513 = scalar_lea.vmem %s0, 49
  %s514 = smov 3
  %v515 = vld [vmem:[%s513] ss:$-45 sm:%s514]
  %s516 = scalar_lea.vmem %s0, 4294967285
  %s517 = smov 12
  %v518 = vld [vmem:[%s516] ss:$15 sm:%s517]
  %vm519 = vcmask 1043458
  %v520 = vsel %vm519, %v518, %v515
  %521 = vrot.lane.b32.xlu0 %v520, 85
  %v522 = vpop.permute.xlu0 %521
  %vm523 = vcmask 121856
  %s524 = scalar_lea.vmem %s1, 449
  %525 = vst.msk [vmem:[%s524] ss:$-410 sm:$0x3] %vm523, %v522
  %s526 = scalar_lea.vmem %s1, 4294967200
  %527 = vst.msk [vmem:[%s526] ss:$136 sm:$0xc] %vm523, %v522
  %s528 = scalar_lea.vmem %s0, 32
  %s529 = smov 3
  %v530 = vld [vmem:[%s528] ss:$15 sm:%s529]
  %s531 = scalar_lea.vmem %s0, 4294967268
  %s532 = smov 12
  %v533 = vld [vmem:[%s531] ss:$15 sm:%s532]
  %vm534 = vcmask 1043458
  %v535 = vsel %vm534, %v533, %v530
  %536 = vrot.lane.b32.xlu0 %v535, 84
  %v537 = vpop.permute.xlu0 %536
  %vm538 = vcmask 121856
  %s539 = scalar_lea.vmem %s1, 294
  %540 = vst.msk [vmem:[%s539] ss:$136 sm:$0x3] %vm538, %v537
  %s541 = scalar_lea.vmem %s1, 4294967045
  %542 = vst.msk [vmem:[%s541] ss:$136 sm:$0xc] %vm538, %v537
  %v543 = vld [vmem:[%s0] ss:$15 sm:$0xf]
  %544 = vrot.lane.b32.xlu0 %v543, 83
  %v545 = vpop.permute.xlu0 %544
  %vm546 = vcmask 121856
  %s547 = scalar_lea.vmem %s1, 3
  %548 = vst.msk [vmem:[%s547] ss:$136 sm:$0x3] %vm546, %v545
  %s549 = scalar_lea.vmem %s1, 4
  %550 = vst.msk [vmem:[%s549] ss:$136 sm:$0xc] %vm546, %v545
  %s551 = scalar_lea.vmem %s0, 28
  %s552 = smov 3
  %v553 = vld [vmem:[%s551] ss:$15 sm:%s552]
  %s554 = scalar_lea.vmem %s0, 11
  %v555 = vld [vmem:[%s554] sm:$0x4]
  %vm556 = vcmask 1042434
  %v557 = vsel %vm556, %v555, %v553
  %558 = vrot.lane.b32.xlu0 %v557, 82
  %v559 = vpop.permute.xlu0 %558
  %vm560 = vcmask 121856
  %s561 = scalar_lea.vmem %s1, 258
  %562 = vst.msk [vmem:[%s561] ss:$136 sm:$0x3] %vm560, %v559
  %s563 = scalar_lea.vmem %s1, 119
  %564 = vst.msk [vmem:[%s563] sm:$0x4] %vm560, %v559
  %s565 = scalar_lea.vmem %s0, 11
  %v566 = vld [vmem:[%s565] ss:$15 sm:$0x7]
  %567 = vrot.lane.b32.xlu0 %v566, 81
  %v568 = vpop.permute.xlu0 %567
  %vm569 = vcmask 121856
  %s570 = scalar_lea.vmem %s1, 103
  %571 = vst.msk [vmem:[%s570] ss:$137 sm:$0x3] %vm569, %v568
  %s572 = scalar_lea.vmem %s1, 374
  %573 = vst.msk [vmem:[%s572] sm:$0x4] %vm569, %v568
  %s574 = scalar_lea.vmem %s0, 39
  %s575 = smov 3
  %v576 = vld [vmem:[%s574] ss:$-30 sm:%s575]
  %s577 = scalar_lea.vmem %s0, 22
  %v578 = vld [vmem:[%s577] sm:$0x4]
  %vm579 = vcmask 1042434
  %v580 = vsel %vm579, %v578, %v576
  %581 = vrot.lane.b32.xlu0 %v580, 80
  %v582 = vpop.permute.xlu0 %581
  %vm583 = vcmask 121856
  %s584 = scalar_lea.vmem %s1, 358
  %585 = vst.msk [vmem:[%s584] ss:$-273 sm:$0x3] %vm583, %v582
  %s586 = scalar_lea.vmem %s1, 219
  %587 = vst.msk [vmem:[%s586] sm:$0x4] %vm583, %v582
  %s588 = scalar_lea.vmem %s0, 7
  %v589 = vld [vmem:[%s588] ss:$15 sm:$0xf]
  %590 = vrot.lane.b32.xlu0 %v589, 79
  %v591 = vpop.permute.xlu0 %590
  %vm592 = vcmask 121856
  %s593 = scalar_lea.vmem %s1, 67
  %594 = vst.msk [vmem:[%s593] ss:$136 sm:$0x3] %vm592, %v591
  %s595 = scalar_lea.vmem %s1, 68
  %596 = vst.msk [vmem:[%s595] ss:$136 sm:$0xc] %vm592, %v591
  %s597 = scalar_lea.vmem %s0, 35
  %s598 = smov 3
  %v599 = vld [vmem:[%s597] ss:$15 sm:%s598]
  %s600 = scalar_lea.vmem %s0, 4294967271
  %s601 = smov 12
  %v602 = vld [vmem:[%s600] ss:$15 sm:%s601]
  %vm603 = vcmask 1043458
  %v604 = vsel %vm603, %v602, %v599
  %605 = vrot.lane.b32.xlu0 %v604, 78
  %v606 = vpop.permute.xlu0 %605
  %vm607 = vcmask 121856
  %s608 = scalar_lea.vmem %s1, 322
  %609 = vst.msk [vmem:[%s608] ss:$136 sm:$0x3] %vm607, %v606
  %s610 = scalar_lea.vmem %s1, 4294967073
  %611 = vst.msk [vmem:[%s610] ss:$136 sm:$0xc] %vm607, %v606
  %s612 = scalar_lea.vmem %s0, 18
  %v613 = vld [vmem:[%s612] ss:$15 sm:$0x7]
  %v614 = vld [vmem:[%s0] sm:$0x8]
  %vm615 = vcmask 1043459
  %v616 = vsel %vm615, %v614, %v613
  %617 = vrot.lane.b32.xlu0 %v616, 77
  %v618 = vpop.permute.xlu0 %617
  %vm619 = vcmask 121856
  %s620 = scalar_lea.vmem %s1, 167
  %621 = vst.msk [vmem:[%s620] ss:$137 sm:$0x3] %vm619, %v618
  %s622 = scalar_lea.vmem %s1, 1260
  %623 = vst.msk [vmem:[%s622] ss:$-410 sm:$0xc] %vm619, %v618
  %s624 = scalar_lea.vmem %s0, 46
  %s625 = smov 3
  %v626 = vld [vmem:[%s624] ss:$-45 sm:%s625]
  %s627 = scalar_lea.vmem %s0, 4294967282
  %s628 = smov 12
  %v629 = vld [vmem:[%s627] ss:$15 sm:%s628]
  %vm630 = vcmask 1043458
  %v631 = vsel %vm630, %v629, %v626
  %632 = vrot.lane.b32.xlu0 %v631, 76
  %v633 = vpop.permute.xlu0 %632
  %vm634 = vcmask 121856
  %s635 = scalar_lea.vmem %s1, 422
  %636 = vst.msk [vmem:[%s635] ss:$-410 sm:$0x3] %vm634, %v633
  %s637 = scalar_lea.vmem %s1, 4294967173
  %638 = vst.msk [vmem:[%s637] ss:$136 sm:$0xc] %vm634, %v633
  %s639 = scalar_lea.vmem %s0, 14
  %v640 = vld [vmem:[%s639] ss:$15 sm:$0x7]
  %641 = vrot.lane.b32.xlu0 %v640, 75
  %v642 = vpop.permute.xlu0 %641
  %vm643 = vcmask 121856
  %s644 = scalar_lea.vmem %s1, 131
  %645 = vst.msk [vmem:[%s644] ss:$136 sm:$0x3] %vm643, %v642
  %s646 = scalar_lea.vmem %s1, 402
  %647 = vst.msk [vmem:[%s646] sm:$0x4] %vm643, %v642
  %s648 = scalar_lea.vmem %s0, 42
  %s649 = smov 3
  %v650 = vld [vmem:[%s648] ss:$-30 sm:%s649]
  %s651 = scalar_lea.vmem %s0, 25
  %v652 = vld [vmem:[%s651] sm:$0x4]
  %vm653 = vcmask 1042434
  %v654 = vsel %vm653, %v652, %v650
  %655 = vrot.lane.b32.xlu0 %v654, 74
  %v656 = vpop.permute.xlu0 %655
  %vm657 = vcmask 121856
  %s658 = scalar_lea.vmem %s1, 386
  %659 = vst.msk [vmem:[%s658] ss:$-273 sm:$0x3] %vm657, %v656
  %s660 = scalar_lea.vmem %s1, 247
  %661 = vst.msk [vmem:[%s660] sm:$0x4] %vm657, %v656
  %s662 = scalar_lea.vmem %s0, 25
  %s663 = smov 3
  %v664 = vld [vmem:[%s662] ss:$15 sm:%s663]
  %s665 = scalar_lea.vmem %s0, 8
  %v666 = vld [vmem:[%s665] sm:$0x4]
  %vm667 = vcmask 1042434
  %v668 = vsel %vm667, %v666, %v664
  %669 = vrot.lane.b32.xlu0 %v668, 73
  %v670 = vpop.permute.xlu0 %669
  %vm671 = vcmask 121856
  %s672 = scalar_lea.vmem %s1, 231
  %673 = vst.msk [vmem:[%s672] ss:$137 sm:$0x3] %vm671, %v670
  %s674 = scalar_lea.vmem %s1, 92
  %675 = vst.msk [vmem:[%s674] sm:$0x4] %vm671, %v670
  %s676 = scalar_lea.vmem %s0, 8
  %v677 = vld [vmem:[%s676] ss:$15 sm:$0x7]
  %678 = vrot.lane.b32.xlu0 %v677, 72
  %v679 = vpop.permute.xlu0 %678
  %vm680 = vcmask 121856
  %s681 = scalar_lea.vmem %s1, 76
  %682 = vst.msk [vmem:[%s681] ss:$137 sm:$0x3] %vm680, %v679
  %s683 = scalar_lea.vmem %s1, 347
  %684 = vst.msk [vmem:[%s683] sm:$0x4] %vm680, %v679
  %s685 = scalar_lea.vmem %s0, 21
  %v686 = vld [vmem:[%s685] ss:$15 sm:$0x7]
  %s687 = scalar_lea.vmem %s0, 3
  %v688 = vld [vmem:[%s687] sm:$0x8]
  %vm689 = vcmask 1043459
  %v690 = vsel %vm689, %v688, %v686
  %691 = vrot.lane.b32.xlu0 %v690, 71
  %v692 = vpop.permute.xlu0 %691
  %vm693 = vcmask 121856
  %s694 = scalar_lea.vmem %s1, 195
  %695 = vst.msk [vmem:[%s694] ss:$136 sm:$0x3] %vm693, %v692
  %s696 = scalar_lea.vmem %s1, 1288
  %697 = vst.msk [vmem:[%s696] ss:$-410 sm:$0xc] %vm693, %v692
  %s698 = scalar_lea.vmem %s0, 49
  %s699 = smov 3
  %v700 = vld [vmem:[%s698] ss:$-45 sm:%s699]
  %s701 = scalar_lea.vmem %s0, 4294967285
  %s702 = smov 12
  %v703 = vld [vmem:[%s701] ss:$15 sm:%s702]
  %vm704 = vcmask 1043458
  %v705 = vsel %vm704, %v703, %v700
  %706 = vrot.lane.b32.xlu0 %v705, 70
  %v707 = vpop.permute.xlu0 %706
  %vm708 = vcmask 121856
  %s709 = scalar_lea.vmem %s1, 450
  %710 = vst.msk [vmem:[%s709] ss:$-410 sm:$0x3] %vm708, %v707
  %s711 = scalar_lea.vmem %s1, 4294967201
  %712 = vst.msk [vmem:[%s711] ss:$136 sm:$0xc] %vm708, %v707
  %s713 = scalar_lea.vmem %s0, 32
  %s714 = smov 3
  %v715 = vld [vmem:[%s713] ss:$15 sm:%s714]
  %s716 = scalar_lea.vmem %s0, 4294967268
  %s717 = smov 12
  %v718 = vld [vmem:[%s716] ss:$15 sm:%s717]
  %vm719 = vcmask 1043458
  %v720 = vsel %vm719, %v718, %v715
  %721 = vrot.lane.b32.xlu0 %v720, 69
  %v722 = vpop.permute.xlu0 %721
  %vm723 = vcmask 121856
  %s724 = scalar_lea.vmem %s1, 295
  %725 = vst.msk [vmem:[%s724] ss:$137 sm:$0x3] %vm723, %v722
  %s726 = scalar_lea.vmem %s1, 4294967046
  %727 = vst.msk [vmem:[%s726] ss:$136 sm:$0xc] %vm723, %v722
  %v728 = vld [vmem:[%s0] ss:$15 sm:$0xf]
  %729 = vrot.lane.b32.xlu0 %v728, 68
  %v730 = vpop.permute.xlu0 %729
  %vm731 = vcmask 121856
  %s732 = scalar_lea.vmem %s1, 4
  %733 = vst.msk [vmem:[%s732] ss:$136 sm:$0x3] %vm731, %v730
  %s734 = scalar_lea.vmem %s1, 5
  %735 = vst.msk [vmem:[%s734] ss:$136 sm:$0xc] %vm731, %v730
  %s736 = scalar_lea.vmem %s0, 28
  %s737 = smov 3
  %v738 = vld [vmem:[%s736] ss:$15 sm:%s737]
  %s739 = scalar_lea.vmem %s0, 11
  %v740 = vld [vmem:[%s739] sm:$0x4]
  %vm741 = vcmask 1042434
  %v742 = vsel %vm741, %v740, %v738
  %743 = vrot.lane.b32.xlu0 %v742, 67
  %v744 = vpop.permute.xlu0 %743
  %vm745 = vcmask 121856
  %s746 = scalar_lea.vmem %s1, 259
  %747 = vst.msk [vmem:[%s746] ss:$136 sm:$0x3] %vm745, %v744
  %s748 = scalar_lea.vmem %s1, 120
  %749 = vst.msk [vmem:[%s748] sm:$0x4] %vm745, %v744
  %s750 = scalar_lea.vmem %s0, 11
  %v751 = vld [vmem:[%s750] ss:$15 sm:$0x7]
  %752 = vrot.lane.b32.xlu0 %v751, 66
  %v753 = vpop.permute.xlu0 %752
  %vm754 = vcmask 121856
  %s755 = scalar_lea.vmem %s1, 104
  %756 = vst.msk [vmem:[%s755] ss:$137 sm:$0x3] %vm754, %v753
  %s757 = scalar_lea.vmem %s1, 375
  %758 = vst.msk [vmem:[%s757] sm:$0x4] %vm754, %v753
  %s759 = scalar_lea.vmem %s0, 39
  %s760 = smov 3
  %v761 = vld [vmem:[%s759] ss:$-30 sm:%s760]
  %s762 = scalar_lea.vmem %s0, 22
  %v763 = vld [vmem:[%s762] sm:$0x4]
  %vm764 = vcmask 1042434
  %v765 = vsel %vm764, %v763, %v761
  %766 = vrot.lane.b32.xlu0 %v765, 65
  %v767 = vpop.permute.xlu0 %766
  %vm768 = vcmask 121856
  %s769 = scalar_lea.vmem %s1, 359
  %770 = vst.msk [vmem:[%s769] ss:$-273 sm:$0x3] %vm768, %v767
  %s771 = scalar_lea.vmem %s1, 220
  %772 = vst.msk [vmem:[%s771] sm:$0x4] %vm768, %v767
  %s773 = scalar_lea.vmem %s0, 7
  %v774 = vld [vmem:[%s773] ss:$15 sm:$0xf]
  %775 = vrot.lane.b32.xlu0 %v774, 64
  %v776 = vpop.permute.xlu0 %775
  %vm777 = vcmask 121856
  %s778 = scalar_lea.vmem %s1, 68
  %779 = vst.msk [vmem:[%s778] ss:$136 sm:$0x3] %vm777, %v776
  %s780 = scalar_lea.vmem %s1, 69
  %781 = vst.msk [vmem:[%s780] ss:$136 sm:$0xc] %vm777, %v776
  %s782 = scalar_lea.vmem %s0, 35
  %s783 = smov 3
  %v784 = vld [vmem:[%s782] ss:$15 sm:%s783]
  %s785 = scalar_lea.vmem %s0, 4294967271
  %s786 = smov 12
  %v787 = vld [vmem:[%s785] ss:$15 sm:%s786]
  %vm788 = vcmask 1043458
  %v789 = vsel %vm788, %v787, %v784
  %790 = vrot.lane.b32.xlu0 %v789, 63
  %v791 = vpop.permute.xlu0 %790
  %vm792 = vcmask 121856
  %s793 = scalar_lea.vmem %s1, 323
  %794 = vst.msk [vmem:[%s793] ss:$136 sm:$0x3] %vm792, %v791
  %s795 = scalar_lea.vmem %s1, 4294967074
  %796 = vst.msk [vmem:[%s795] ss:$136 sm:$0xc] %vm792, %v791
  %s797 = scalar_lea.vmem %s0, 3
  %v798 = vld [vmem:[%s797] ss:$15 sm:$0xf]
  %799 = vrot.lane.b32.xlu0 %v798, 62
  %v800 = vpop.permute.xlu0 %799
  %vm801 = vcmask 121856
  %s802 = scalar_lea.vmem %s1, 32
  %803 = vst.msk [vmem:[%s802] ss:$136 sm:$0x3] %vm801, %v800
  %s804 = scalar_lea.vmem %s1, 33
  %805 = vst.msk [vmem:[%s804] ss:$136 sm:$0xc] %vm801, %v800
  %s806 = scalar_lea.vmem %s0, 46
  %s807 = smov 3
  %v808 = vld [vmem:[%s806] ss:$-45 sm:%s807]
  %s809 = scalar_lea.vmem %s0, 4294967282
  %s810 = smov 12
  %v811 = vld [vmem:[%s809] ss:$15 sm:%s810]
  %vm812 = vcmask 1043458
  %v813 = vsel %vm812, %v811, %v808
  %814 = vrot.lane.b32.xlu0 %v813, 61
  %v815 = vpop.permute.xlu0 %814
  %vm816 = vcmask 121856
  %s817 = scalar_lea.vmem %s1, 423
  %818 = vst.msk [vmem:[%s817] ss:$-410 sm:$0x3] %vm816, %v815
  %s819 = scalar_lea.vmem %s1, 4294967174
  %820 = vst.msk [vmem:[%s819] ss:$136 sm:$0xc] %vm816, %v815
  %s821 = scalar_lea.vmem %s0, 14
  %v822 = vld [vmem:[%s821] ss:$15 sm:$0x7]
  %823 = vrot.lane.b32.xlu0 %v822, 60
  %v824 = vpop.permute.xlu0 %823
  %vm825 = vcmask 121856
  %s826 = scalar_lea.vmem %s1, 132
  %827 = vst.msk [vmem:[%s826] ss:$136 sm:$0x3] %vm825, %v824
  %s828 = scalar_lea.vmem %s1, 403
  %829 = vst.msk [vmem:[%s828] sm:$0x4] %vm825, %v824
  %s830 = scalar_lea.vmem %s0, 42
  %s831 = smov 3
  %v832 = vld [vmem:[%s830] ss:$-30 sm:%s831]
  %s833 = scalar_lea.vmem %s0, 25
  %v834 = vld [vmem:[%s833] sm:$0x4]
  %vm835 = vcmask 1042434
  %v836 = vsel %vm835, %v834, %v832
  %837 = vrot.lane.b32.xlu0 %v836, 59
  %v838 = vpop.permute.xlu0 %837
  %vm839 = vcmask 121856
  %s840 = scalar_lea.vmem %s1, 387
  %841 = vst.msk [vmem:[%s840] ss:$-273 sm:$0x3] %vm839, %v838
  %s842 = scalar_lea.vmem %s1, 248
  %843 = vst.msk [vmem:[%s842] sm:$0x4] %vm839, %v838
  %s844 = scalar_lea.vmem %s0, 10
  %v845 = vld [vmem:[%s844] ss:$15 sm:$0x7]
  %846 = vrot.lane.b32.xlu0 %v845, 58
  %v847 = vpop.permute.xlu0 %846
  %vm848 = vcmask 121856
  %s849 = scalar_lea.vmem %s1, 96
  %850 = vst.msk [vmem:[%s849] ss:$136 sm:$0x3] %vm848, %v847
  %s851 = scalar_lea.vmem %s1, 367
  %852 = vst.msk [vmem:[%s851] sm:$0x4] %vm848, %v847
  %s853 = scalar_lea.vmem %s0, 8
  %v854 = vld [vmem:[%s853] ss:$15 sm:$0x7]
  %855 = vrot.lane.b32.xlu0 %v854, 57
  %v856 = vpop.permute.xlu0 %855
  %vm857 = vcmask 121856
  %s858 = scalar_lea.vmem %s1, 77
  %859 = vst.msk [vmem:[%s858] ss:$137 sm:$0x3] %vm857, %v856
  %s860 = scalar_lea.vmem %s1, 348
  %861 = vst.msk [vmem:[%s860] sm:$0x4] %vm857, %v856
  %s862 = scalar_lea.vmem %s0, 21
  %v863 = vld [vmem:[%s862] ss:$15 sm:$0x7]
  %s864 = scalar_lea.vmem %s0, 3
  %v865 = vld [vmem:[%s864] sm:$0x8]
  %vm866 = vcmask 1043459
  %v867 = vsel %vm866, %v865, %v863
  %868 = vrot.lane.b32.xlu0 %v867, 56
  %v869 = vpop.permute.xlu0 %868
  %vm870 = vcmask 121856
  %s871 = scalar_lea.vmem %s1, 196
  %872 = vst.msk [vmem:[%s871] ss:$136 sm:$0x3] %vm870, %v869
  %s873 = scalar_lea.vmem %s1, 1289
  %874 = vst.msk [vmem:[%s873] ss:$-410 sm:$0xc] %vm870, %v869
  %s875 = scalar_lea.vmem %s0, 49
  %s876 = smov 3
  %v877 = vld [vmem:[%s875] ss:$-45 sm:%s876]
  %s878 = scalar_lea.vmem %s0, 4294967285
  %s879 = smov 12
  %v880 = vld [vmem:[%s878] ss:$15 sm:%s879]
  %vm881 = vcmask 1043458
  %v882 = vsel %vm881, %v880, %v877
  %883 = vrot.lane.b32.xlu0 %v882, 55
  %v884 = vpop.permute.xlu0 %883
  %vm885 = vcmask 121856
  %s886 = scalar_lea.vmem %s1, 451
  %887 = vst.msk [vmem:[%s886] ss:$-410 sm:$0x3] %vm885, %v884
  %s888 = scalar_lea.vmem %s1, 4294967202
  %889 = vst.msk [vmem:[%s888] ss:$136 sm:$0xc] %vm885, %v884
  %s890 = scalar_lea.vmem %s0, 17
  %v891 = vld [vmem:[%s890] ss:$15 sm:$0x7]
  %s892 = scalar_lea.vmem %s0, 4294967295
  %v893 = vld [vmem:[%s892] sm:$0x8]
  %vm894 = vcmask 1043459
  %v895 = vsel %vm894, %v893, %v891
  %896 = vrot.lane.b32.xlu0 %v895, 54
  %v897 = vpop.permute.xlu0 %896
  %vm898 = vcmask 121856
  %s899 = scalar_lea.vmem %s1, 160
  %900 = vst.msk [vmem:[%s899] ss:$136 sm:$0x3] %vm898, %v897
  %s901 = scalar_lea.vmem %s1, 1253
  %902 = vst.msk [vmem:[%s901] ss:$-410 sm:$0xc] %vm898, %v897
  %v903 = vld [vmem:[%s0] ss:$15 sm:$0xf]
  %904 = vrot.lane.b32.xlu0 %v903, 53
  %v905 = vpop.permute.xlu0 %904
  %vm906 = vcmask 121856
  %s907 = scalar_lea.vmem %s1, 5
  %908 = vst.msk [vmem:[%s907] ss:$136 sm:$0x3] %vm906, %v905
  %s909 = scalar_lea.vmem %s1, 6
  %910 = vst.msk [vmem:[%s909] ss:$136 sm:$0xc] %vm906, %v905
  %s911 = scalar_lea.vmem %s0, 28
  %s912 = smov 3
  %v913 = vld [vmem:[%s911] ss:$15 sm:%s912]
  %s914 = scalar_lea.vmem %s0, 11
  %v915 = vld [vmem:[%s914] sm:$0x4]
  %vm916 = vcmask 1042434
  %v917 = vsel %vm916, %v915, %v913
  %918 = vrot.lane.b32.xlu0 %v917, 52
  %v919 = vpop.permute.xlu0 %918
  %vm920 = vcmask 121856
  %s921 = scalar_lea.vmem %s1, 260
  %922 = vst.msk [vmem:[%s921] ss:$136 sm:$0x3] %vm920, %v919
  %s923 = scalar_lea.vmem %s1, 121
  %924 = vst.msk [vmem:[%s923] sm:$0x4] %vm920, %v919
  %s925 = scalar_lea.vmem %s0, 11
  %v926 = vld [vmem:[%s925] ss:$15 sm:$0x7]
  %927 = vrot.lane.b32.xlu0 %v926, 51
  %v928 = vpop.permute.xlu0 %927
  %vm929 = vcmask 121856
  %s930 = scalar_lea.vmem %s1, 105
  %931 = vst.msk [vmem:[%s930] ss:$137 sm:$0x3] %vm929, %v928
  %s932 = scalar_lea.vmem %s1, 376
  %933 = vst.msk [vmem:[%s932] sm:$0x4] %vm929, %v928
  %s934 = scalar_lea.vmem %s0, 24
  %s935 = smov 3
  %v936 = vld [vmem:[%s934] ss:$15 sm:%s935]
  %s937 = scalar_lea.vmem %s0, 7
  %v938 = vld [vmem:[%s937] sm:$0x4]
  %vm939 = vcmask 1042434
  %v940 = vsel %vm939, %v938, %v936
  %941 = vrot.lane.b32.xlu0 %v940, 50
  %v942 = vpop.permute.xlu0 %941
  %vm943 = vcmask 121856
  %s944 = scalar_lea.vmem %s1, 224
  %945 = vst.msk [vmem:[%s944] ss:$136 sm:$0x3] %vm943, %v942
  %s946 = scalar_lea.vmem %s1, 85
  %947 = vst.msk [vmem:[%s946] sm:$0x4] %vm943, %v942
  %s948 = scalar_lea.vmem %s0, 7
  %v949 = vld [vmem:[%s948] ss:$15 sm:$0xf]
  %950 = vrot.lane.b32.xlu0 %v949, 49
  %v951 = vpop.permute.xlu0 %950
  %vm952 = vcmask 121856
  %s953 = scalar_lea.vmem %s1, 69
  %954 = vst.msk [vmem:[%s953] ss:$136 sm:$0x3] %vm952, %v951
  %s955 = scalar_lea.vmem %s1, 70
  %956 = vst.msk [vmem:[%s955] ss:$136 sm:$0xc] %vm952, %v951
  %s957 = scalar_lea.vmem %s0, 35
  %s958 = smov 3
  %v959 = vld [vmem:[%s957] ss:$15 sm:%s958]
  %s960 = scalar_lea.vmem %s0, 4294967271
  %s961 = smov 12
  %v962 = vld [vmem:[%s960] ss:$15 sm:%s961]
  %vm963 = vcmask 1043458
  %v964 = vsel %vm963, %v962, %v959
  %965 = vrot.lane.b32.xlu0 %v964, 48
  %v966 = vpop.permute.xlu0 %965
  %vm967 = vcmask 121856
  %s968 = scalar_lea.vmem %s1, 324
  %969 = vst.msk [vmem:[%s968] ss:$136 sm:$0x3] %vm967, %v966
  %s970 = scalar_lea.vmem %s1, 4294967075
  %971 = vst.msk [vmem:[%s970] ss:$136 sm:$0xc] %vm967, %v966
  %s972 = scalar_lea.vmem %s0, 3
  %v973 = vld [vmem:[%s972] ss:$15 sm:$0xf]
  %974 = vrot.lane.b32.xlu0 %v973, 47
  %v975 = vpop.permute.xlu0 %974
  %vm976 = vcmask 121856
  %s977 = scalar_lea.vmem %s1, 33
  %978 = vst.msk [vmem:[%s977] ss:$136 sm:$0x3] %vm976, %v975
  %s979 = scalar_lea.vmem %s1, 34
  %980 = vst.msk [vmem:[%s979] ss:$136 sm:$0xc] %vm976, %v975
  %s981 = scalar_lea.vmem %s0, 31
  %s982 = smov 3
  %v983 = vld [vmem:[%s981] ss:$15 sm:%s982]
  %s984 = scalar_lea.vmem %s0, 4294967267
  %s985 = smov 12
  %v986 = vld [vmem:[%s984] ss:$15 sm:%s985]
  %vm987 = vcmask 1043458
  %v988 = vsel %vm987, %v986, %v983
  %989 = vrot.lane.b32.xlu0 %v988, 46
  %v990 = vpop.permute.xlu0 %989
  %vm991 = vcmask 121856
  %s992 = scalar_lea.vmem %s1, 288
  %993 = vst.msk [vmem:[%s992] ss:$136 sm:$0x3] %vm991, %v990
  %s994 = scalar_lea.vmem %s1, 4294967036
  %995 = vst.msk [vmem:[%s994] ss:$137 sm:$0xc] %vm991, %v990
  %s996 = scalar_lea.vmem %s0, 14
  %v997 = vld [vmem:[%s996] ss:$15 sm:$0x7]
  %998 = vrot.lane.b32.xlu0 %v997, 45
  %v999 = vpop.permute.xlu0 %998
  %vm1000 = vcmask 121856
  %s1001 = scalar_lea.vmem %s1, 133
  %1002 = vst.msk [vmem:[%s1001] ss:$136 sm:$0x3] %vm1000, %v999
  %s1003 = scalar_lea.vmem %s1, 404
  %1004 = vst.msk [vmem:[%s1003] sm:$0x4] %vm1000, %v999
  %s1005 = scalar_lea.vmem %s0, 42
  %s1006 = smov 3
  %v1007 = vld [vmem:[%s1005] ss:$-30 sm:%s1006]
  %s1008 = scalar_lea.vmem %s0, 25
  %v1009 = vld [vmem:[%s1008] sm:$0x4]
  %vm1010 = vcmask 1042434
  %v1011 = vsel %vm1010, %v1009, %v1007
  %1012 = vrot.lane.b32.xlu0 %v1011, 44
  %v1013 = vpop.permute.xlu0 %1012
  %vm1014 = vcmask 121856
  %s1015 = scalar_lea.vmem %s1, 388
  %1016 = vst.msk [vmem:[%s1015] ss:$-273 sm:$0x3] %vm1014, %v1013
  %s1017 = scalar_lea.vmem %s1, 249
  %1018 = vst.msk [vmem:[%s1017] sm:$0x4] %vm1014, %v1013
  %s1019 = scalar_lea.vmem %s0, 10
  %v1020 = vld [vmem:[%s1019] ss:$15 sm:$0x7]
  %1021 = vrot.lane.b32.xlu0 %v1020, 43
  %v1022 = vpop.permute.xlu0 %1021
  %vm1023 = vcmask 121856
  %s1024 = scalar_lea.vmem %s1, 97
  %1025 = vst.msk [vmem:[%s1024] ss:$136 sm:$0x3] %vm1023, %v1022
  %s1026 = scalar_lea.vmem %s1, 368
  %1027 = vst.msk [vmem:[%s1026] sm:$0x4] %vm1023, %v1022
  %s1028 = scalar_lea.vmem %s0, 38
  %s1029 = smov 3
  %v1030 = vld [vmem:[%s1028] ss:$-30 sm:%s1029]
  %s1031 = scalar_lea.vmem %s0, 21
  %v1032 = vld [vmem:[%s1031] sm:$0x4]
  %vm1033 = vcmask 1042434
  %v1034 = vsel %vm1033, %v1032, %v1030
  %1035 = vrot.lane.b32.xlu0 %v1034, 42
  %v1036 = vpop.permute.xlu0 %1035
  %vm1037 = vcmask 121856
  %s1038 = scalar_lea.vmem %s1, 352
  %1039 = vst.msk [vmem:[%s1038] ss:$-274 sm:$0x3] %vm1037, %v1036
  %s1040 = scalar_lea.vmem %s1, 213
  %1041 = vst.msk [vmem:[%s1040] sm:$0x4] %vm1037, %v1036
  %s1042 = scalar_lea.vmem %s0, 21
  %v1043 = vld [vmem:[%s1042] ss:$15 sm:$0x7]
  %s1044 = scalar_lea.vmem %s0, 3
  %v1045 = vld [vmem:[%s1044] sm:$0x8]
  %vm1046 = vcmask 1043459
  %v1047 = vsel %vm1046, %v1045, %v1043
  %1048 = vrot.lane.b32.xlu0 %v1047, 41
  %v1049 = vpop.permute.xlu0 %1048
  %vm1050 = vcmask 121856
  %s1051 = scalar_lea.vmem %s1, 197
  %1052 = vst.msk [vmem:[%s1051] ss:$136 sm:$0x3] %vm1050, %v1049
  %s1053 = scalar_lea.vmem %s1, 1290
  %1054 = vst.msk [vmem:[%s1053] ss:$-410 sm:$0xc] %vm1050, %v1049
  %s1055 = scalar_lea.vmem %s0, 49
  %s1056 = smov 3
  %v1057 = vld [vmem:[%s1055] ss:$-45 sm:%s1056]
  %s1058 = scalar_lea.vmem %s0, 4294967285
  %s1059 = smov 12
  %v1060 = vld [vmem:[%s1058] ss:$15 sm:%s1059]
  %vm1061 = vcmask 1043458
  %v1062 = vsel %vm1061, %v1060, %v1057
  %1063 = vrot.lane.b32.xlu0 %v1062, 40
  %v1064 = vpop.permute.xlu0 %1063
  %vm1065 = vcmask 121856
  %s1066 = scalar_lea.vmem %s1, 452
  %1067 = vst.msk [vmem:[%s1066] ss:$-410 sm:$0x3] %vm1065, %v1064
  %s1068 = scalar_lea.vmem %s1, 4294967203
  %1069 = vst.msk [vmem:[%s1068] ss:$136 sm:$0xc] %vm1065, %v1064
  %s1070 = scalar_lea.vmem %s0, 17
  %v1071 = vld [vmem:[%s1070] ss:$15 sm:$0x7]
  %s1072 = scalar_lea.vmem %s0, 4294967295
  %v1073 = vld [vmem:[%s1072] sm:$0x8]
  %vm1074 = vcmask 1043459
  %v1075 = vsel %vm1074, %v1073, %v1071
  %1076 = vrot.lane.b32.xlu0 %v1075, 39
  %v1077 = vpop.permute.xlu0 %1076
  %vm1078 = vcmask 121856
  %s1079 = scalar_lea.vmem %s1, 161
  %1080 = vst.msk [vmem:[%s1079] ss:$136 sm:$0x3] %vm1078, %v1077
  %s1081 = scalar_lea.vmem %s1, 1254
  %1082 = vst.msk [vmem:[%s1081] ss:$-410 sm:$0xc] %vm1078, %v1077
  %s1083 = scalar_lea.vmem %s0, 45
  %s1084 = smov 3
  %v1085 = vld [vmem:[%s1083] ss:$-45 sm:%s1084]
  %s1086 = scalar_lea.vmem %s0, 4294967281
  %s1087 = smov 12
  %v1088 = vld [vmem:[%s1086] ss:$15 sm:%s1087]
  %vm1089 = vcmask 1043458
  %v1090 = vsel %vm1089, %v1088, %v1085
  %1091 = vrot.lane.b32.xlu0 %v1090, 38
  %v1092 = vpop.permute.xlu0 %1091
  %vm1093 = vcmask 121856
  %s1094 = scalar_lea.vmem %s1, 416
  %1095 = vst.msk [vmem:[%s1094] ss:$-410 sm:$0x3] %vm1093, %v1092
  %s1096 = scalar_lea.vmem %s1, 4294967164
  %1097 = vst.msk [vmem:[%s1096] ss:$137 sm:$0xc] %vm1093, %v1092
  %s1098 = scalar_lea.vmem %s0, 28
  %s1099 = smov 3
  %v1100 = vld [vmem:[%s1098] ss:$15 sm:%s1099]
  %s1101 = scalar_lea.vmem %s0, 11
  %v1102 = vld [vmem:[%s1101] sm:$0x4]
  %vm1103 = vcmask 1042434
  %v1104 = vsel %vm1103, %v1102, %v1100
  %1105 = vrot.lane.b32.xlu0 %v1104, 37
  %v1106 = vpop.permute.xlu0 %1105
  %vm1107 = vcmask 121856
  %s1108 = scalar_lea.vmem %s1, 261
  %1109 = vst.msk [vmem:[%s1108] ss:$136 sm:$0x3] %vm1107, %v1106
  %s1110 = scalar_lea.vmem %s1, 122
  %1111 = vst.msk [vmem:[%s1110] sm:$0x4] %vm1107, %v1106
  %s1112 = scalar_lea.vmem %s0, 11
  %v1113 = vld [vmem:[%s1112] ss:$15 sm:$0x7]
  %1114 = vrot.lane.b32.xlu0 %v1113, 36
  %v1115 = vpop.permute.xlu0 %1114
  %vm1116 = vcmask 121856
  %s1117 = scalar_lea.vmem %s1, 106
  %1118 = vst.msk [vmem:[%s1117] ss:$137 sm:$0x3] %vm1116, %v1115
  %s1119 = scalar_lea.vmem %s1, 377
  %1120 = vst.msk [vmem:[%s1119] sm:$0x4] %vm1116, %v1115
  %s1121 = scalar_lea.vmem %s0, 24
  %s1122 = smov 3
  %v1123 = vld [vmem:[%s1121] ss:$15 sm:%s1122]
  %s1124 = scalar_lea.vmem %s0, 7
  %v1125 = vld [vmem:[%s1124] sm:$0x4]
  %vm1126 = vcmask 1042434
  %v1127 = vsel %vm1126, %v1125, %v1123
  %1128 = vrot.lane.b32.xlu0 %v1127, 35
  %v1129 = vpop.permute.xlu0 %1128
  %vm1130 = vcmask 121856
  %s1131 = scalar_lea.vmem %s1, 225
  %1132 = vst.msk [vmem:[%s1131] ss:$136 sm:$0x3] %vm1130, %v1129
  %s1133 = scalar_lea.vmem %s1, 86
  %1134 = vst.msk [vmem:[%s1133] sm:$0x4] %vm1130, %v1129
  %s1135 = scalar_lea.vmem %s0, 7
  %v1136 = vld [vmem:[%s1135] ss:$15 sm:$0x7]
  %1137 = vrot.lane.b32.xlu0 %v1136, 34
  %v1138 = vpop.permute.xlu0 %1137
  %vm1139 = vcmask 121856
  %s1140 = scalar_lea.vmem %s1, 70
  %1141 = vst.msk [vmem:[%s1140] ss:$136 sm:$0x3] %vm1139, %v1138
  %s1142 = scalar_lea.vmem %s1, 341
  %1143 = vst.msk [vmem:[%s1142] sm:$0x4] %vm1139, %v1138
  %s1144 = scalar_lea.vmem %s0, 35
  %s1145 = smov 3
  %v1146 = vld [vmem:[%s1144] ss:$15 sm:%s1145]
  %s1147 = scalar_lea.vmem %s0, 4294967271
  %s1148 = smov 12
  %v1149 = vld [vmem:[%s1147] ss:$15 sm:%s1148]
  %vm1150 = vcmask 1043458
  %v1151 = vsel %vm1150, %v1149, %v1146
  %1152 = vrot.lane.b32.xlu0 %v1151, 33
  %v1153 = vpop.permute.xlu0 %1152
  %vm1154 = vcmask 121856
  %s1155 = scalar_lea.vmem %s1, 325
  %1156 = vst.msk [vmem:[%s1155] ss:$136 sm:$0x3] %vm1154, %v1153
  %s1157 = scalar_lea.vmem %s1, 4294967076
  %1158 = vst.msk [vmem:[%s1157] ss:$136 sm:$0xc] %vm1154, %v1153
  %s1159 = scalar_lea.vmem %s0, 3
  %v1160 = vld [vmem:[%s1159] ss:$15 sm:$0xf]
  %1161 = vrot.lane.b32.xlu0 %v1160, 32
  %v1162 = vpop.permute.xlu0 %1161
  %vm1163 = vcmask 121856
  %s1164 = scalar_lea.vmem %s1, 34
  %1165 = vst.msk [vmem:[%s1164] ss:$136 sm:$0x3] %vm1163, %v1162
  %s1166 = scalar_lea.vmem %s1, 35
  %1167 = vst.msk [vmem:[%s1166] ss:$136 sm:$0xc] %vm1163, %v1162
  %s1168 = scalar_lea.vmem %s0, 31
  %s1169 = smov 3
  %v1170 = vld [vmem:[%s1168] ss:$15 sm:%s1169]
  %s1171 = scalar_lea.vmem %s0, 4294967267
  %s1172 = smov 12
  %v1173 = vld [vmem:[%s1171] ss:$15 sm:%s1172]
  %vm1174 = vcmask 1043458
  %v1175 = vsel %vm1174, %v1173, %v1170
  %1176 = vrot.lane.b32.xlu0 %v1175, 31
  %v1177 = vpop.permute.xlu0 %1176
  %vm1178 = vcmask 121856
  %s1179 = scalar_lea.vmem %s1, 289
  %1180 = vst.msk [vmem:[%s1179] ss:$136 sm:$0x3] %vm1178, %v1177
  %s1181 = scalar_lea.vmem %s1, 4294967040
  %1182 = vst.msk [vmem:[%s1181] ss:$136 sm:$0xc] %vm1178, %v1177
  %s1183 = scalar_lea.vmem %s0, 14
  %v1184 = vld [vmem:[%s1183] ss:$15 sm:$0x7]
  %1185 = vrot.lane.b32.xlu0 %v1184, 30
  %v1186 = vpop.permute.xlu0 %1185
  %vm1187 = vcmask 121856
  %s1188 = scalar_lea.vmem %s1, 134
  %1189 = vst.msk [vmem:[%s1188] ss:$136 sm:$0x3] %vm1187, %v1186
  %s1190 = scalar_lea.vmem %s1, 405
  %1191 = vst.msk [vmem:[%s1190] sm:$0x4] %vm1187, %v1186
  %s1192 = scalar_lea.vmem %s0, 42
  %s1193 = smov 3
  %v1194 = vld [vmem:[%s1192] ss:$-30 sm:%s1193]
  %s1195 = scalar_lea.vmem %s0, 25
  %v1196 = vld [vmem:[%s1195] sm:$0x4]
  %vm1197 = vcmask 1042434
  %v1198 = vsel %vm1197, %v1196, %v1194
  %1199 = vrot.lane.b32.xlu0 %v1198, 29
  %v1200 = vpop.permute.xlu0 %1199
  %vm1201 = vcmask 121856
  %s1202 = scalar_lea.vmem %s1, 389
  %1203 = vst.msk [vmem:[%s1202] ss:$-273 sm:$0x3] %vm1201, %v1200
  %s1204 = scalar_lea.vmem %s1, 250
  %1205 = vst.msk [vmem:[%s1204] sm:$0x4] %vm1201, %v1200
  %s1206 = scalar_lea.vmem %s0, 10
  %v1207 = vld [vmem:[%s1206] ss:$15 sm:$0x7]
  %1208 = vrot.lane.b32.xlu0 %v1207, 28
  %v1209 = vpop.permute.xlu0 %1208
  %vm1210 = vcmask 121856
  %s1211 = scalar_lea.vmem %s1, 98
  %1212 = vst.msk [vmem:[%s1211] ss:$136 sm:$0x3] %vm1210, %v1209
  %s1213 = scalar_lea.vmem %s1, 369
  %1214 = vst.msk [vmem:[%s1213] sm:$0x4] %vm1210, %v1209
  %s1215 = scalar_lea.vmem %s0, 38
  %s1216 = smov 3
  %v1217 = vld [vmem:[%s1215] ss:$-30 sm:%s1216]
  %s1218 = scalar_lea.vmem %s0, 21
  %v1219 = vld [vmem:[%s1218] sm:$0x4]
  %vm1220 = vcmask 1042434
  %v1221 = vsel %vm1220, %v1219, %v1217
  %1222 = vrot.lane.b32.xlu0 %v1221, 27
  %v1223 = vpop.permute.xlu0 %1222
  %vm1224 = vcmask 121856
  %s1225 = scalar_lea.vmem %s1, 353
  %1226 = vst.msk [vmem:[%s1225] ss:$-273 sm:$0x3] %vm1224, %v1223
  %s1227 = scalar_lea.vmem %s1, 214
  %1228 = vst.msk [vmem:[%s1227] sm:$0x4] %vm1224, %v1223
  %s1229 = scalar_lea.vmem %s0, 21
  %v1230 = vld [vmem:[%s1229] ss:$15 sm:$0x7]
  %s1231 = scalar_lea.vmem %s0, 3
  %v1232 = vld [vmem:[%s1231] sm:$0x8]
  %vm1233 = vcmask 1043459
  %v1234 = vsel %vm1233, %v1232, %v1230
  %1235 = vrot.lane.b32.xlu0 %v1234, 26
  %v1236 = vpop.permute.xlu0 %1235
  %vm1237 = vcmask 121856
  %s1238 = scalar_lea.vmem %s1, 198
  %1239 = vst.msk [vmem:[%s1238] ss:$136 sm:$0x3] %vm1237, %v1236
  %s1240 = scalar_lea.vmem %s1, 1291
  %1241 = vst.msk [vmem:[%s1240] ss:$-410 sm:$0xc] %vm1237, %v1236
  %s1242 = scalar_lea.vmem %s0, 49
  %s1243 = smov 3
  %v1244 = vld [vmem:[%s1242] ss:$-45 sm:%s1243]
  %s1245 = scalar_lea.vmem %s0, 4294967285
  %s1246 = smov 12
  %v1247 = vld [vmem:[%s1245] ss:$15 sm:%s1246]
  %vm1248 = vcmask 1043458
  %v1249 = vsel %vm1248, %v1247, %v1244
  %1250 = vrot.lane.b32.xlu0 %v1249, 25
  %v1251 = vpop.permute.xlu0 %1250
  %vm1252 = vcmask 121856
  %s1253 = scalar_lea.vmem %s1, 453
  %1254 = vst.msk [vmem:[%s1253] ss:$-410 sm:$0x3] %vm1252, %v1251
  %s1255 = scalar_lea.vmem %s1, 4294967204
  %1256 = vst.msk [vmem:[%s1255] ss:$136 sm:$0xc] %vm1252, %v1251
  %s1257 = scalar_lea.vmem %s0, 17
  %v1258 = vld [vmem:[%s1257] ss:$15 sm:$0x7]
  %s1259 = scalar_lea.vmem %s0, 4294967295
  %v1260 = vld [vmem:[%s1259] sm:$0x8]
  %vm1261 = vcmask 1043459
  %v1262 = vsel %vm1261, %v1260, %v1258
  %1263 = vrot.lane.b32.xlu0 %v1262, 24
  %v1264 = vpop.permute.xlu0 %1263
  %vm1265 = vcmask 121856
  %s1266 = scalar_lea.vmem %s1, 162
  %1267 = vst.msk [vmem:[%s1266] ss:$136 sm:$0x3] %vm1265, %v1264
  %s1268 = scalar_lea.vmem %s1, 1255
  %1269 = vst.msk [vmem:[%s1268] ss:$-410 sm:$0xc] %vm1265, %v1264
  %s1270 = scalar_lea.vmem %s0, 45
  %s1271 = smov 3
  %v1272 = vld [vmem:[%s1270] ss:$-45 sm:%s1271]
  %s1273 = scalar_lea.vmem %s0, 4294967281
  %s1274 = smov 12
  %v1275 = vld [vmem:[%s1273] ss:$15 sm:%s1274]
  %vm1276 = vcmask 1043458
  %v1277 = vsel %vm1276, %v1275, %v1272
  %1278 = vrot.lane.b32.xlu0 %v1277, 23
  %v1279 = vpop.permute.xlu0 %1278
  %vm1280 = vcmask 121856
  %s1281 = scalar_lea.vmem %s1, 417
  %1282 = vst.msk [vmem:[%s1281] ss:$-410 sm:$0x3] %vm1280, %v1279
  %s1283 = scalar_lea.vmem %s1, 4294967168
  %1284 = vst.msk [vmem:[%s1283] ss:$136 sm:$0xc] %vm1280, %v1279
  %s1285 = scalar_lea.vmem %s0, 28
  %s1286 = smov 3
  %v1287 = vld [vmem:[%s1285] ss:$15 sm:%s1286]
  %s1288 = scalar_lea.vmem %s0, 11
  %v1289 = vld [vmem:[%s1288] sm:$0x4]
  %vm1290 = vcmask 1042434
  %v1291 = vsel %vm1290, %v1289, %v1287
  %1292 = vrot.lane.b32.xlu0 %v1291, 22
  %v1293 = vpop.permute.xlu0 %1292
  %vm1294 = vcmask 121856
  %s1295 = scalar_lea.vmem %s1, 262
  %1296 = vst.msk [vmem:[%s1295] ss:$136 sm:$0x3] %vm1294, %v1293
  %s1297 = scalar_lea.vmem %s1, 123
  %1298 = vst.msk [vmem:[%s1297] sm:$0x4] %vm1294, %v1293
  %s1299 = scalar_lea.vmem %s0, 11
  %v1300 = vld [vmem:[%s1299] ss:$15 sm:$0x7]
  %1301 = vrot.lane.b32.xlu0 %v1300, 21
  %v1302 = vpop.permute.xlu0 %1301
  %vm1303 = vcmask 121856
  %s1304 = scalar_lea.vmem %s1, 107
  %1305 = vst.msk [vmem:[%s1304] ss:$137 sm:$0x3] %vm1303, %v1302
  %s1306 = scalar_lea.vmem %s1, 378
  %1307 = vst.msk [vmem:[%s1306] sm:$0x4] %vm1303, %v1302
  %s1308 = scalar_lea.vmem %s0, 24
  %s1309 = smov 3
  %v1310 = vld [vmem:[%s1308] ss:$15 sm:%s1309]
  %s1311 = scalar_lea.vmem %s0, 7
  %v1312 = vld [vmem:[%s1311] sm:$0x4]
  %vm1313 = vcmask 1042434
  %v1314 = vsel %vm1313, %v1312, %v1310
  %1315 = vrot.lane.b32.xlu0 %v1314, 20
  %v1316 = vpop.permute.xlu0 %1315
  %vm1317 = vcmask 121856
  %s1318 = scalar_lea.vmem %s1, 226
  %1319 = vst.msk [vmem:[%s1318] ss:$136 sm:$0x3] %vm1317, %v1316
  %s1320 = scalar_lea.vmem %s1, 87
  %1321 = vst.msk [vmem:[%s1320] sm:$0x4] %vm1317, %v1316
  %s1322 = scalar_lea.vmem %s0, 7
  %v1323 = vld [vmem:[%s1322] ss:$15 sm:$0x7]
  %1324 = vrot.lane.b32.xlu0 %v1323, 19
  %v1325 = vpop.permute.xlu0 %1324
  %vm1326 = vcmask 121856
  %s1327 = scalar_lea.vmem %s1, 71
  %1328 = vst.msk [vmem:[%s1327] ss:$137 sm:$0x3] %vm1326, %v1325
  %s1329 = scalar_lea.vmem %s1, 342
  %1330 = vst.msk [vmem:[%s1329] sm:$0x4] %vm1326, %v1325
  %s1331 = scalar_lea.vmem %s0, 35
  %s1332 = smov 3
  %v1333 = vld [vmem:[%s1331] ss:$15 sm:%s1332]
  %s1334 = scalar_lea.vmem %s0, 4294967271
  %s1335 = smov 12
  %v1336 = vld [vmem:[%s1334] ss:$15 sm:%s1335]
  %vm1337 = vcmask 1043458
  %v1338 = vsel %vm1337, %v1336, %v1333
  %1339 = vrot.lane.b32.xlu0 %v1338, 18
  %v1340 = vpop.permute.xlu0 %1339
  %vm1341 = vcmask 121856
  %s1342 = scalar_lea.vmem %s1, 326
  %1343 = vst.msk [vmem:[%s1342] ss:$136 sm:$0x3] %vm1341, %v1340
  %s1344 = scalar_lea.vmem %s1, 4294967077
  %1345 = vst.msk [vmem:[%s1344] ss:$136 sm:$0xc] %vm1341, %v1340
  %s1346 = scalar_lea.vmem %s0, 3
  %v1347 = vld [vmem:[%s1346] ss:$15 sm:$0xf]
  %1348 = vrot.lane.b32.xlu0 %v1347, 17
  %v1349 = vpop.permute.xlu0 %1348
  %vm1350 = vcmask 121856
  %s1351 = scalar_lea.vmem %s1, 35
  %1352 = vst.msk [vmem:[%s1351] ss:$136 sm:$0x3] %vm1350, %v1349
  %s1353 = scalar_lea.vmem %s1, 36
  %1354 = vst.msk [vmem:[%s1353] ss:$136 sm:$0xc] %vm1350, %v1349
  %s1355 = scalar_lea.vmem %s0, 31
  %s1356 = smov 3
  %v1357 = vld [vmem:[%s1355] ss:$15 sm:%s1356]
  %s1358 = scalar_lea.vmem %s0, 4294967267
  %s1359 = smov 12
  %v1360 = vld [vmem:[%s1358] ss:$15 sm:%s1359]
  %vm1361 = vcmask 1043458
  %v1362 = vsel %vm1361, %v1360, %v1357
  %1363 = vrot.lane.b32.xlu0 %v1362, 16
  %v1364 = vpop.permute.xlu0 %1363
  %vm1365 = vcmask 121856
  %s1366 = scalar_lea.vmem %s1, 290
  %1367 = vst.msk [vmem:[%s1366] ss:$136 sm:$0x3] %vm1365, %v1364
  %s1368 = scalar_lea.vmem %s1, 4294967041
  %1369 = vst.msk [vmem:[%s1368] ss:$136 sm:$0xc] %vm1365, %v1364
  %s1370 = scalar_lea.vmem %s0, 14
  %v1371 = vld [vmem:[%s1370] ss:$15 sm:$0x7]
  %1372 = vrot.lane.b32.xlu0 %v1371, 15
  %v1373 = vpop.permute.xlu0 %1372
  %vm1374 = vcmask 121856
  %s1375 = scalar_lea.vmem %s1, 135
  %1376 = vst.msk [vmem:[%s1375] ss:$137 sm:$0x3] %vm1374, %v1373
  %s1377 = scalar_lea.vmem %s1, 406
  %1378 = vst.msk [vmem:[%s1377] sm:$0x4] %vm1374, %v1373
  %s1379 = scalar_lea.vmem %s0, 42
  %s1380 = smov 3
  %v1381 = vld [vmem:[%s1379] ss:$-30 sm:%s1380]
  %s1382 = scalar_lea.vmem %s0, 25
  %v1383 = vld [vmem:[%s1382] sm:$0x4]
  %vm1384 = vcmask 1042434
  %v1385 = vsel %vm1384, %v1383, %v1381
  %s1386 = scalar_lea.vmem %s0, 43
  %s1387 = smov 3
  %v1388 = vld [vmem:[%s1386] ss:$-30 sm:%s1387]
  %s1389 = scalar_lea.vmem %s0, 26
  %v1390 = vld [vmem:[%s1389] sm:$0x4]
  %vm1391 = vcmask 1042434
  %v1392 = vsel %vm1391, %v1390, %v1388
  %vm1393 = vcmask 932864
  %v1394 = vsel %vm1393, %v1392, %v1385
  %1395 = vrot.lane.b32.xlu0 %v1394, 14
  %v1396 = vpop.permute.xlu0 %1395
  %vm1397 = vcmask 113664
  %s1398 = scalar_lea.vmem %s1, 390
  %1399 = vst.msk [vmem:[%s1398] ss:$-273 sm:$0x3] %vm1397, %v1396
  %s1400 = scalar_lea.vmem %s1, 251
  %1401 = vst.msk [vmem:[%s1400] sm:$0x4] %vm1397, %v1396
  %vm1402 = vcmask 121968
  %s1403 = scalar_lea.vmem %s1, 390
  %1404 = vst.msk [vmem:[%s1403] ss:$-273 sm:$0x3] %vm1402, %v1396
  %s1405 = scalar_lea.vmem %s1, 251
  %1406 = vst.msk [vmem:[%s1405] sm:$0x4] %vm1402, %v1396
  %s1407 = scalar_lea.vmem %s0, 10
  %v1408 = vld [vmem:[%s1407] ss:$15 sm:$0x7]
  %s1409 = scalar_lea.vmem %s0, 11
  %v1410 = vld [vmem:[%s1409] ss:$15 sm:$0x7]
  %vm1411 = vcmask 941056
  %v1412 = vsel %vm1411, %v1410, %v1408
  %1413 = vrot.lane.b32.xlu0 %v1412, 13
  %v1414 = vpop.permute.xlu0 %1413
  %vm1415 = vcmask 105472
  %s1416 = scalar_lea.vmem %s1, 99
  %1417 = vst.msk [vmem:[%s1416] ss:$136 sm:$0x3] %vm1415, %v1414
  %s1418 = scalar_lea.vmem %s1, 370
  %1419 = vst.msk [vmem:[%s1418] sm:$0x4] %vm1415, %v1414
  %vm1420 = vcmask 121960
  %s1421 = scalar_lea.vmem %s1, 99
  %1422 = vst.msk [vmem:[%s1421] ss:$136 sm:$0x3] %vm1420, %v1414
  %s1423 = scalar_lea.vmem %s1, 370
  %1424 = vst.msk [vmem:[%s1423] sm:$0x4] %vm1420, %v1414
  %s1425 = scalar_lea.vmem %s0, 38
  %s1426 = smov 3
  %v1427 = vld [vmem:[%s1425] ss:$-30 sm:%s1426]
  %s1428 = scalar_lea.vmem %s0, 21
  %v1429 = vld [vmem:[%s1428] sm:$0x4]
  %vm1430 = vcmask 1042434
  %v1431 = vsel %vm1430, %v1429, %v1427
  %s1432 = scalar_lea.vmem %s0, 39
  %s1433 = smov 3
  %v1434 = vld [vmem:[%s1432] ss:$-30 sm:%s1433]
  %s1435 = scalar_lea.vmem %s0, 22
  %v1436 = vld [vmem:[%s1435] sm:$0x4]
  %vm1437 = vcmask 1042434
  %v1438 = vsel %vm1437, %v1436, %v1434
  %vm1439 = vcmask 949248
  %v1440 = vsel %vm1439, %v1438, %v1431
  %1441 = vrot.lane.b32.xlu0 %v1440, 12
  %v1442 = vpop.permute.xlu0 %1441
  %vm1443 = vcmask 97280
  %s1444 = scalar_lea.vmem %s1, 354
  %1445 = vst.msk [vmem:[%s1444] ss:$-273 sm:$0x3] %vm1443, %v1442
  %s1446 = scalar_lea.vmem %s1, 215
  %1447 = vst.msk [vmem:[%s1446] sm:$0x4] %vm1443, %v1442
  %vm1448 = vcmask 121952
  %s1449 = scalar_lea.vmem %s1, 354
  %1450 = vst.msk [vmem:[%s1449] ss:$-273 sm:$0x3] %vm1448, %v1442
  %s1451 = scalar_lea.vmem %s1, 215
  %1452 = vst.msk [vmem:[%s1451] sm:$0x4] %vm1448, %v1442
  %s1453 = scalar_lea.vmem %s0, 21
  %v1454 = vld [vmem:[%s1453] ss:$15 sm:$0x7]
  %s1455 = scalar_lea.vmem %s0, 3
  %v1456 = vld [vmem:[%s1455] sm:$0x8]
  %vm1457 = vcmask 1043459
  %v1458 = vsel %vm1457, %v1456, %v1454
  %s1459 = scalar_lea.vmem %s0, 22
  %v1460 = vld [vmem:[%s1459] ss:$15 sm:$0x7]
  %s1461 = scalar_lea.vmem %s0, 4
  %v1462 = vld [vmem:[%s1461] sm:$0x8]
  %vm1463 = vcmask 1043459
  %v1464 = vsel %vm1463, %v1462, %v1460
  %vm1465 = vcmask 957440
  %v1466 = vsel %vm1465, %v1464, %v1458
  %1467 = vrot.lane.b32.xlu0 %v1466, 11
  %v1468 = vpop.permute.xlu0 %1467
  %vm1469 = vcmask 89088
  %s1470 = scalar_lea.vmem %s1, 199
  %1471 = vst.msk [vmem:[%s1470] ss:$137 sm:$0x3] %vm1469, %v1468
  %s1472 = scalar_lea.vmem %s1, 1292
  %1473 = vst.msk [vmem:[%s1472] ss:$-410 sm:$0xc] %vm1469, %v1468
  %vm1474 = vcmask 121944
  %s1475 = scalar_lea.vmem %s1, 199
  %1476 = vst.msk [vmem:[%s1475] ss:$137 sm:$0x3] %vm1474, %v1468
  %s1477 = scalar_lea.vmem %s1, 1292
  %1478 = vst.msk [vmem:[%s1477] ss:$-410 sm:$0xc] %vm1474, %v1468
  %s1479 = scalar_lea.vmem %s0, 49
  %s1480 = smov 3
  %v1481 = vld [vmem:[%s1479] ss:$-45 sm:%s1480]
  %s1482 = scalar_lea.vmem %s0, 4294967285
  %s1483 = smov 12
  %v1484 = vld [vmem:[%s1482] ss:$15 sm:%s1483]
  %vm1485 = vcmask 1043458
  %v1486 = vsel %vm1485, %v1484, %v1481
  %s1487 = scalar_lea.vmem %s0, 50
  %s1488 = smov 3
  %v1489 = vld [vmem:[%s1487] ss:$-45 sm:%s1488]
  %s1490 = scalar_lea.vmem %s0, 4294967286
  %s1491 = smov 12
  %v1492 = vld [vmem:[%s1490] ss:$15 sm:%s1491]
  %vm1493 = vcmask 1043458
  %v1494 = vsel %vm1493, %v1492, %v1489
  %vm1495 = vcmask 965632
  %v1496 = vsel %vm1495, %v1494, %v1486
  %1497 = vrot.lane.b32.xlu0 %v1496, 10
  %v1498 = vpop.permute.xlu0 %1497
  %vm1499 = vcmask 80896
  %s1500 = scalar_lea.vmem %s1, 454
  %1501 = vst.msk [vmem:[%s1500] ss:$-410 sm:$0x3] %vm1499, %v1498
  %s1502 = scalar_lea.vmem %s1, 4294967205
  %1503 = vst.msk [vmem:[%s1502] ss:$136 sm:$0xc] %vm1499, %v1498
  %vm1504 = vcmask 121936
  %s1505 = scalar_lea.vmem %s1, 454
  %1506 = vst.msk [vmem:[%s1505] ss:$-410 sm:$0x3] %vm1504, %v1498
  %s1507 = scalar_lea.vmem %s1, 4294967205
  %1508 = vst.msk [vmem:[%s1507] ss:$136 sm:$0xc] %vm1504, %v1498
  %s1509 = scalar_lea.vmem %s0, 17
  %v1510 = vld [vmem:[%s1509] ss:$15 sm:$0x7]
  %s1511 = scalar_lea.vmem %s0, 4294967295
  %v1512 = vld [vmem:[%s1511] sm:$0x8]
  %vm1513 = vcmask 1043459
  %v1514 = vsel %vm1513, %v1512, %v1510
  %s1515 = scalar_lea.vmem %s0, 18
  %v1516 = vld [vmem:[%s1515] ss:$15 sm:$0x7]
  %v1517 = vld [vmem:[%s0] sm:$0x8]
  %vm1518 = vcmask 1043459
  %v1519 = vsel %vm1518, %v1517, %v1516
  %vm1520 = vcmask 973824
  %v1521 = vsel %vm1520, %v1519, %v1514
  %1522 = vrot.lane.b32.xlu0 %v1521, 9
  %v1523 = vpop.permute.xlu0 %1522
  %vm1524 = vcmask 72704
  %s1525 = scalar_lea.vmem %s1, 163
  %1526 = vst.msk [vmem:[%s1525] ss:$136 sm:$0x3] %vm1524, %v1523
  %s1527 = scalar_lea.vmem %s1, 1256
  %1528 = vst.msk [vmem:[%s1527] ss:$-410 sm:$0xc] %vm1524, %v1523
  %vm1529 = vcmask 121928
  %s1530 = scalar_lea.vmem %s1, 163
  %1531 = vst.msk [vmem:[%s1530] ss:$136 sm:$0x3] %vm1529, %v1523
  %s1532 = scalar_lea.vmem %s1, 1256
  %1533 = vst.msk [vmem:[%s1532] ss:$-410 sm:$0xc] %vm1529, %v1523
  %s1534 = scalar_lea.vmem %s0, 45
  %s1535 = smov 3
  %v1536 = vld [vmem:[%s1534] ss:$-45 sm:%s1535]
  %s1537 = scalar_lea.vmem %s0, 4294967281
  %s1538 = smov 12
  %v1539 = vld [vmem:[%s1537] ss:$15 sm:%s1538]
  %vm1540 = vcmask 1043458
  %v1541 = vsel %vm1540, %v1539, %v1536
  %s1542 = scalar_lea.vmem %s0, 46
  %s1543 = smov 3
  %v1544 = vld [vmem:[%s1542] ss:$-45 sm:%s1543]
  %s1545 = scalar_lea.vmem %s0, 4294967282
  %s1546 = smov 12
  %v1547 = vld [vmem:[%s1545] ss:$15 sm:%s1546]
  %vm1548 = vcmask 1043458
  %v1549 = vsel %vm1548, %v1547, %v1544
  %vm1550 = vcmask 982016
  %v1551 = vsel %vm1550, %v1549, %v1541
  %1552 = vrot.lane.b32.xlu0 %v1551, 8
  %v1553 = vpop.permute.xlu0 %1552
  %vm1554 = vcmask 64512
  %s1555 = scalar_lea.vmem %s1, 418
  %1556 = vst.msk [vmem:[%s1555] ss:$-410 sm:$0x3] %vm1554, %v1553
  %s1557 = scalar_lea.vmem %s1, 4294967169
  %1558 = vst.msk [vmem:[%s1557] ss:$136 sm:$0xc] %vm1554, %v1553
  %vm1559 = vcmask 121920
  %s1560 = scalar_lea.vmem %s1, 418
  %1561 = vst.msk [vmem:[%s1560] ss:$-410 sm:$0x3] %vm1559, %v1553
  %s1562 = scalar_lea.vmem %s1, 4294967169
  %1563 = vst.msk [vmem:[%s1562] ss:$136 sm:$0xc] %vm1559, %v1553
  %s1564 = scalar_lea.vmem %s0, 28
  %s1565 = smov 3
  %v1566 = vld [vmem:[%s1564] ss:$15 sm:%s1565]
  %s1567 = scalar_lea.vmem %s0, 11
  %v1568 = vld [vmem:[%s1567] sm:$0x4]
  %vm1569 = vcmask 1042434
  %v1570 = vsel %vm1569, %v1568, %v1566
  %s1571 = scalar_lea.vmem %s0, 29
  %s1572 = smov 3
  %v1573 = vld [vmem:[%s1571] ss:$15 sm:%s1572]
  %s1574 = scalar_lea.vmem %s0, 12
  %v1575 = vld [vmem:[%s1574] sm:$0x4]
  %vm1576 = vcmask 1042434
  %v1577 = vsel %vm1576, %v1575, %v1573
  %vm1578 = vcmask 990208
  %v1579 = vsel %vm1578, %v1577, %v1570
  %1580 = vrot.lane.b32.xlu0 %v1579, 7
  %v1581 = vpop.permute.xlu0 %1580
  %vm1582 = vcmask 56320
  %s1583 = scalar_lea.vmem %s1, 263
  %1584 = vst.msk [vmem:[%s1583] ss:$137 sm:$0x3] %vm1582, %v1581
  %s1585 = scalar_lea.vmem %s1, 124
  %1586 = vst.msk [vmem:[%s1585] sm:$0x4] %vm1582, %v1581
  %vm1587 = vcmask 121912
  %s1588 = scalar_lea.vmem %s1, 263
  %1589 = vst.msk [vmem:[%s1588] ss:$137 sm:$0x3] %vm1587, %v1581
  %s1590 = scalar_lea.vmem %s1, 124
  %1591 = vst.msk [vmem:[%s1590] sm:$0x4] %vm1587, %v1581
  %s1592 = scalar_lea.vmem %s0, 11
  %v1593 = vld [vmem:[%s1592] ss:$15 sm:$0x7]
  %s1594 = scalar_lea.vmem %s0, 12
  %v1595 = vld [vmem:[%s1594] ss:$15 sm:$0x7]
  %vm1596 = vcmask 998400
  %v1597 = vsel %vm1596, %v1595, %v1593
  %1598 = vrot.lane.b32.xlu0 %v1597, 6
  %v1599 = vpop.permute.xlu0 %1598
  %vm1600 = vcmask 48128
  %s1601 = scalar_lea.vmem %s1, 108
  %1602 = vst.msk [vmem:[%s1601] ss:$137 sm:$0x3] %vm1600, %v1599
  %s1603 = scalar_lea.vmem %s1, 379
  %1604 = vst.msk [vmem:[%s1603] sm:$0x4] %vm1600, %v1599
  %vm1605 = vcmask 121904
  %s1606 = scalar_lea.vmem %s1, 108
  %1607 = vst.msk [vmem:[%s1606] ss:$137 sm:$0x3] %vm1605, %v1599
  %s1608 = scalar_lea.vmem %s1, 379
  %1609 = vst.msk [vmem:[%s1608] sm:$0x4] %vm1605, %v1599
  %s1610 = scalar_lea.vmem %s0, 24
  %s1611 = smov 3
  %v1612 = vld [vmem:[%s1610] ss:$15 sm:%s1611]
  %s1613 = scalar_lea.vmem %s0, 7
  %v1614 = vld [vmem:[%s1613] sm:$0x4]
  %vm1615 = vcmask 1042434
  %v1616 = vsel %vm1615, %v1614, %v1612
  %s1617 = scalar_lea.vmem %s0, 25
  %s1618 = smov 3
  %v1619 = vld [vmem:[%s1617] ss:$15 sm:%s1618]
  %s1620 = scalar_lea.vmem %s0, 8
  %v1621 = vld [vmem:[%s1620] sm:$0x4]
  %vm1622 = vcmask 1042434
  %v1623 = vsel %vm1622, %v1621, %v1619
  %vm1624 = vcmask 1006592
  %v1625 = vsel %vm1624, %v1623, %v1616
  %1626 = vrot.lane.b32.xlu0 %v1625, 5
  %v1627 = vpop.permute.xlu0 %1626
  %vm1628 = vcmask 39936
  %s1629 = scalar_lea.vmem %s1, 227
  %1630 = vst.msk [vmem:[%s1629] ss:$136 sm:$0x3] %vm1628, %v1627
  %s1631 = scalar_lea.vmem %s1, 88
  %1632 = vst.msk [vmem:[%s1631] sm:$0x4] %vm1628, %v1627
  %vm1633 = vcmask 121896
  %s1634 = scalar_lea.vmem %s1, 227
  %1635 = vst.msk [vmem:[%s1634] ss:$136 sm:$0x3] %vm1633, %v1627
  %s1636 = scalar_lea.vmem %s1, 88
  %1637 = vst.msk [vmem:[%s1636] sm:$0x4] %vm1633, %v1627
  %s1638 = scalar_lea.vmem %s0, 7
  %v1639 = vld [vmem:[%s1638] ss:$15 sm:$0x7]
  %s1640 = scalar_lea.vmem %s0, 8
  %v1641 = vld [vmem:[%s1640] ss:$15 sm:$0x7]
  %vm1642 = vcmask 1014784
  %v1643 = vsel %vm1642, %v1641, %v1639
  %1644 = vrot.lane.b32.xlu0 %v1643, 4
  %v1645 = vpop.permute.xlu0 %1644
  %vm1646 = vcmask 31744
  %s1647 = scalar_lea.vmem %s1, 72
  %1648 = vst.msk [vmem:[%s1647] ss:$137 sm:$0x3] %vm1646, %v1645
  %s1649 = scalar_lea.vmem %s1, 343
  %1650 = vst.msk [vmem:[%s1649] sm:$0x4] %vm1646, %v1645
  %vm1651 = vcmask 121888
  %s1652 = scalar_lea.vmem %s1, 72
  %1653 = vst.msk [vmem:[%s1652] ss:$137 sm:$0x3] %vm1651, %v1645
  %s1654 = scalar_lea.vmem %s1, 343
  %1655 = vst.msk [vmem:[%s1654] sm:$0x4] %vm1651, %v1645
  %s1656 = scalar_lea.vmem %s0, 35
  %s1657 = smov 3
  %v1658 = vld [vmem:[%s1656] ss:$15 sm:%s1657]
  %s1659 = scalar_lea.vmem %s0, 4294967271
  %s1660 = smov 12
  %v1661 = vld [vmem:[%s1659] ss:$15 sm:%s1660]
  %vm1662 = vcmask 1043458
  %v1663 = vsel %vm1662, %v1661, %v1658
  %s1664 = scalar_lea.vmem %s0, 36
  %s1665 = smov 3
  %v1666 = vld [vmem:[%s1664] ss:$15 sm:%s1665]
  %s1667 = scalar_lea.vmem %s0, 4294967272
  %s1668 = smov 12
  %v1669 = vld [vmem:[%s1667] ss:$15 sm:%s1668]
  %vm1670 = vcmask 1043458
  %v1671 = vsel %vm1670, %v1669, %v1666
  %vm1672 = vcmask 1022976
  %v1673 = vsel %vm1672, %v1671, %v1663
  %1674 = vrot.lane.b32.xlu0 %v1673, 3
  %v1675 = vpop.permute.xlu0 %1674
  %vm1676 = vcmask 23552
  %s1677 = scalar_lea.vmem %s1, 327
  %1678 = vst.msk [vmem:[%s1677] ss:$137 sm:$0x3] %vm1676, %v1675
  %s1679 = scalar_lea.vmem %s1, 4294967078
  %1680 = vst.msk [vmem:[%s1679] ss:$136 sm:$0xc] %vm1676, %v1675
  %vm1681 = vcmask 121880
  %s1682 = scalar_lea.vmem %s1, 327
  %1683 = vst.msk [vmem:[%s1682] ss:$137 sm:$0x3] %vm1681, %v1675
  %s1684 = scalar_lea.vmem %s1, 4294967078
  %1685 = vst.msk [vmem:[%s1684] ss:$136 sm:$0xc] %vm1681, %v1675
  %s1686 = scalar_lea.vmem %s0, 3
  %v1687 = vld [vmem:[%s1686] ss:$15 sm:$0xf]
  %s1688 = scalar_lea.vmem %s0, 4
  %v1689 = vld [vmem:[%s1688] ss:$15 sm:$0xf]
  %vm1690 = vcmask 1031168
  %v1691 = vsel %vm1690, %v1689, %v1687
  %1692 = vrot.lane.b32.xlu0 %v1691, 2
  %v1693 = vpop.permute.xlu0 %1692
  %vm1694 = vcmask 15360
  %s1695 = scalar_lea.vmem %s1, 36
  %1696 = vst.msk [vmem:[%s1695] ss:$136 sm:$0x3] %vm1694, %v1693
  %s1697 = scalar_lea.vmem %s1, 37
  %1698 = vst.msk [vmem:[%s1697] ss:$136 sm:$0xc] %vm1694, %v1693
  %vm1699 = vcmask 121872
  %s1700 = scalar_lea.vmem %s1, 36
  %1701 = vst.msk [vmem:[%s1700] ss:$136 sm:$0x3] %vm1699, %v1693
  %s1702 = scalar_lea.vmem %s1, 37
  %1703 = vst.msk [vmem:[%s1702] ss:$136 sm:$0xc] %vm1699, %v1693
  %s1704 = scalar_lea.vmem %s0, 31
  %s1705 = smov 3
  %v1706 = vld [vmem:[%s1704] ss:$15 sm:%s1705]
  %s1707 = scalar_lea.vmem %s0, 4294967267
  %s1708 = smov 12
  %v1709 = vld [vmem:[%s1707] ss:$15 sm:%s1708]
  %vm1710 = vcmask 1043458
  %v1711 = vsel %vm1710, %v1709, %v1706
  %s1712 = scalar_lea.vmem %s0, 32
  %s1713 = smov 3
  %v1714 = vld [vmem:[%s1712] ss:$15 sm:%s1713]
  %s1715 = scalar_lea.vmem %s0, 4294967268
  %s1716 = smov 12
  %v1717 = vld [vmem:[%s1715] ss:$15 sm:%s1716]
  %vm1718 = vcmask 1043458
  %v1719 = vsel %vm1718, %v1717, %v1714
  %vm1720 = vcmask 1039360
  %v1721 = vsel %vm1720, %v1719, %v1711
  %1722 = vrot.lane.b32.xlu0 %v1721, 1
  %v1723 = vpop.permute.xlu0 %1722
  %vm1724 = vcmask 7168
  %s1725 = scalar_lea.vmem %s1, 291
  %1726 = vst.msk [vmem:[%s1725] ss:$136 sm:$0x3] %vm1724, %v1723
  %s1727 = scalar_lea.vmem %s1, 4294967042
  %1728 = vst.msk [vmem:[%s1727] ss:$136 sm:$0xc] %vm1724, %v1723
  %vm1729 = vcmask 121864
  %s1730 = scalar_lea.vmem %s1, 291
  %1731 = vst.msk [vmem:[%s1730] ss:$136 sm:$0x3] %vm1729, %v1723
  %s1732 = scalar_lea.vmem %s1, 4294967042
  %1733 = vst.msk [vmem:[%s1732] ss:$136 sm:$0xc] %vm1729, %v1723

// kernel: unet_to_regression.2
$region0: #{unet_to_regression.2}
  #allocation0 [shape = 'u32[]', space=smem, size = 0x4, offset = 0x4, fixed_abs, tag = 'smem constant byte address 0x4 - core index']
  #allocation1 [shape = 'u32[72,128]{1,0:T(1,128)}', space=vmem, size = 0x9000, scoped, tag = 'internal scratch']
  #allocation2 [shape = 'f32[1,1]{1,0:T(1,128)S(6)}', space=smem, size = 0x200, scoped, tag = 'scoped memory for unet_to_regression.2']
  %s0 = inlined_call_operand.vmem [shape: f32[108,6750], index: 0, kind: input, shape index: {}]
  %s1 = inlined_call_operand.vmem [shape: f32[108,1], index: 1, kind: input, shape index: {}]
  %s2 = inlined_call_operand.<no memory space> [shape: f32[1,1], index: 2, kind: input, shape index: {}]
  %s3 = inlined_call_operand.vmem [shape: f32[1,6750], index: 3, kind: output, shape index: {}]
  %s4 = sld [smem:[#allocation0]]
  $region173: #{unet_to_regression.2} parent=0
    _
  %s6 = ssub.s32 1, %s4
  %s7 = scalar_select 0, %s6, %s4
  %8 = sst [smem:[#allocation2]] %s2
  $region1: #{unet_to_regression.2} parent=0
    #allocation3 [shape = 'u8[3096576]{0}', space=vmem, size = 0x2f4000, scoped, tag = 'input window, operand 0']
    #allocation4 [shape = 'u8[27648]{0}', space=vmem, size = 0x6c00, scoped, tag = 'output window, operand 0']
    loop: start=0, step=1, limit=4
    $region2: #{unet_to_regression.2} parent=1 // loop_pre_header
      _
    $region3: #{unet_to_regression.2} parent=1 // loop_header
      %s10 = sphi 0, %s14
      %p11 = scmp.ge.s32.totalorder %s10, 4
      %s20 = sphi 0, %s22
      %s23 = sphi 0, %s20
      %s24 = sphi 0, %s23
      %s40 = sphi 0, %s24
      %s44 = sphi 0, %s44
      %s46 = sphi 0, %s44
      %s47 = sphi 0, %s46
      %s61 = sphi 0, %s47
      %s65 = sphi 0, %s65
      %s67 = sphi 0, %s65
      %s68 = sphi 0, %s67
      %s82 = sphi 0, %s68
      %s88 = sphi 0, %s90
      %s91 = sphi 0, %s88
      %s92 = sphi 0, %s91
      %s108 = sphi 0, %s92
    $region4: #{unet_to_regression.2} parent=1 // loop_header_branch
      %13 = sbr.rel (%p11) target = $region8
    $region5: #{unet_to_regression.2} parent=1 // loop_body
      %s15 = ssub.s32 %s10, 1
      %s16 = ssub.s32 %s10, 2
      %s17 = sadd.s32 %s10, 1
      %s18 = ssub.s32 %s10, %s17
      %p19 = scmp.eq.s32.totalorder %s18, 0
      %s21 = sadd.s32 %s20, 1
      %s22 = scalar_select %p19, %s20, %s21
      %p25 = pneg %p19
      %p26 = scmp.eq.s32.totalorder %s10, 1
      %p27 = por %p25, %p26
      %p28 = scmp.ne.s32.totalorder %s20, %s23
      %p29 = scmp.eq.s32.totalorder %s10, 0
      %p30 = por %p28, %p29
      %p31 = scmp.ne.s32.totalorder %s20, %s23
      %p32 = scmp.eq.s32.totalorder %s15, 1
      %p33 = por %p31, %p32
      %p34 = scmp.ne.s32.totalorder %s23, %s24
      %p35 = scmp.eq.s32.totalorder %s15, 0
      %p36 = por %p34, %p35
      %p37 = scmp.ne.s32.totalorder %s23, %s24
      %p38 = scmp.eq.s32.totalorder %s16, 1
      %p39 = por %p37, %p38
      %p41 = scmp.ne.s32.totalorder %s24, %s40
      %p42 = scmp.eq.s32.totalorder %s16, 0
      %p43 = por %p41, %p42
      %s45 = sadd.s32 %s44, 1
      %p48 = scmp.eq.s32.totalorder %s10, 1
      %p49 = scmp.ne.s32.totalorder %s44, %s46
      %p50 = scmp.eq.s32.totalorder %s10, 0
      %p51 = por %p49, %p50
      %p52 = scmp.ne.s32.totalorder %s44, %s46
      %p53 = scmp.eq.s32.totalorder %s15, 1
      %p54 = por %p52, %p53
      %p55 = scmp.ne.s32.totalorder %s46, %s47
      %p56 = scmp.eq.s32.totalorder %s15, 0
      %p57 = por %p55, %p56
      %p58 = scmp.ne.s32.totalorder %s46, %s47
      %p59 = scmp.eq.s32.totalorder %s16, 1
      %p60 = por %p58, %p59
      %p62 = scmp.ne.s32.totalorder %s47, %s61
      %p63 = scmp.eq.s32.totalorder %s16, 0
      %p64 = por %p62, %p63
      %s66 = sadd.s32 %s65, 1
      %p69 = scmp.eq.s32.totalorder %s10, 1
      %p70 = scmp.ne.s32.totalorder %s65, %s67
      %p71 = scmp.eq.s32.totalorder %s10, 0
      %p72 = por %p70, %p71
      %p73 = scmp.ne.s32.totalorder %s65, %s67
      %p74 = scmp.eq.s32.totalorder %s15, 1
      %p75 = por %p73, %p74
      %p76 = scmp.ne.s32.totalorder %s67, %s68
      %p77 = scmp.eq.s32.totalorder %s15, 0
      %p78 = por %p76, %p77
      %p79 = scmp.ne.s32.totalorder %s67, %s68
      %p80 = scmp.eq.s32.totalorder %s16, 1
      %p81 = por %p79, %p80
      %p83 = scmp.ne.s32.totalorder %s68, %s82
      %p84 = scmp.eq.s32.totalorder %s16, 0
      %p85 = por %p83, %p84
      %s86 = ssub.s32 %s10, %s17
      %p87 = scmp.eq.s32.totalorder %s86, 0
      %s89 = sadd.s32 %s88, 1
      %s90 = scalar_select %p87, %s88, %s89
      %p93 = pneg %p87
      %p94 = scmp.eq.s32.totalorder %s10, 1
      %p95 = por %p93, %p94
      %p96 = scmp.ne.s32.totalorder %s88, %s91
      %p97 = scmp.eq.s32.totalorder %s10, 0
      %p98 = por %p96, %p97
      %p99 = scmp.ne.s32.totalorder %s88, %s91
      %p100 = scmp.eq.s32.totalorder %s15, 1
      %p101 = por %p99, %p100
      %p102 = scmp.ne.s32.totalorder %s91, %s92
      %p103 = scmp.eq.s32.totalorder %s15, 0
      %p104 = por %p102, %p103
      %p105 = scmp.ne.s32.totalorder %s91, %s92
      %p106 = scmp.eq.s32.totalorder %s16, 1
      %p107 = por %p105, %p106
      %p109 = scmp.ne.s32.totalorder %s92, %s108
      %p110 = scmp.eq.s32.totalorder %s16, 0
      %p111 = por %p109, %p110
      %p112 = scmp.le.s32.totalorder 1, %s10
      %p113 = scmp.lt.s32.totalorder %s10, 3
      %p114 = pnand %p112, %p113
      %p115 = pneg %p114
      // Predicated region
      $region9: #{unet_to_regression.2} parent=5 // pred_check
        _
      $region10: #{unet_to_regression.2} parent=5 // pred_check_branch
        %117 = sbr.rel (%p114) target = $region12
      $region11: #{unet_to_regression.2} parent=5 // pred_region
        %s118 = ssub.s32 %s10, 1
        // Predicated region
        $region13: #{unet_to_regression.2} parent=11 // pred_check
          %p119 = pneg %p57
        $region14: #{unet_to_regression.2} parent=11 // pred_check_branch
          %121 = sbr.rel (%p119) target = $region16
        $region15: #{unet_to_regression.2} parent=11 // pred_region
          _
        $region16: #{unet_to_regression.2} parent=11 // pred_fallthru
          _
        // Predicated region
        $region17: #{unet_to_regression.2} parent=11 // pred_check
          %p122 = pneg %p78
        $region18: #{unet_to_regression.2} parent=11 // pred_check_branch
          %124 = sbr.rel (%p122) target = $region20
        $region19: #{unet_to_regression.2} parent=11 // pred_region
          _
        $region20: #{unet_to_regression.2} parent=11 // pred_fallthru
          _
      $region12: #{unet_to_regression.2} parent=5 // pred_fallthru
        _
      %p125 = scmp.lt.s32.totalorder %s10, 2
      // Predicated region
      $region21: #{unet_to_regression.2} parent=5 // pred_check
        %p126 = pneg %p125
      $region22: #{unet_to_regression.2} parent=5 // pred_check_branch
        %128 = sbr.rel (%p126) target = $region24
      $region23: #{unet_to_regression.2} parent=5 // pred_region
        // Predicated region
        $region25: #{unet_to_regression.2} parent=23 // pred_check
          %p129 = pneg %p30
        $region26: #{unet_to_regression.2} parent=23 // pred_check_branch
          %131 = sbr.rel (%p129) target = $region28
        $region27: #{unet_to_regression.2} parent=23 // pred_region
          %s132 = sand.u32 %s20, 1
          %s133 = sand.u32 %s20, 1
          %s134 = smul.addr %s133, 3024
          %s135 = scalar_lea.vmem [#allocation3], %s134
          %s136 = smul.u32 27, %s10
          %s137 = ssub.s32 53, %s136
          %p138 = scmp.lt.s32.totalorder %s137, 27
          %s139 = scalar_select %p138, %s137, 27
          %s140 = smul.u32 112, %s139
          %p141 = scmp.ne.s32.totalorder 0, %s140
          %s142 = smul.addr %s136, 8
          %s143 = scalar_lea.vmem %s0, %s142
          %s144 = smul.u32 %s139, 8
          // Predicated region
          $region29: #{unet_to_regression.2} parent=27 // pred_check
            %p145 = pneg %p141
          $region30: #{unet_to_regression.2} parent=27 // pred_check_branch
            %147 = sbr.rel (%p145) target = $region32
          $region31: #{unet_to_regression.2} parent=27 // pred_region
            %p148 = scmp.lt.u32.totalorder %s144, 8
            %p149 = pneg %p148
            // Predicated region
            $region33: #{unet_to_regression.2} parent=31 // pred_check
              _
            $region34: #{unet_to_regression.2} parent=31 // pred_check_branch
              %151 = sbr.rel (%p148) target = $region36
            $region35: #{unet_to_regression.2} parent=31 // pred_region
              %s193 = sand.u32 %s144, 7
              %p194 = scmp.eq.s32.totalorder %s193, 0
              // Predicated region
              $region48: #{unet_to_regression.2} parent=35 // pred_check
                %p195 = pneg %p194
              $region49: #{unet_to_regression.2} parent=35 // pred_check_branch
                %197 = sbr.rel (%p195) target = $region51
              $region50: #{unet_to_regression.2} parent=35 // pred_region
                %s198 = sshrl.u32 %s144, 3
                %s199 = sshrl.u32 %s198, 2
                // While loop
                $region52: #{unet_to_regression.2} parent=50 // loop_pre_header
                  _
                $region53: #{unet_to_regression.2} parent=50 // loop_header
                  %s201 = sphi 0, %s203
                  %p202 = scmp.ge.s32.totalorder %s201, %s199
                  %s206 = sphi 0, %s323
                  %s207 = sphi %s143, %s326
                  %s208 = sphi %s135, %s327
                $region54: #{unet_to_regression.2} parent=50 // loop_header_branch
                  %205 = sbr.rel (%p202) target = $region58
                $region55: #{unet_to_regression.2} parent=50 // loop_body
                  %v209 = vld [vmem:[%s207] sm:$0xff]
                  %210 = vst [vmem:[%s208] sm:$0xff] %v209
                  %v211 = vld [vmem:[%s207 + $0x8] sm:$0xff]
                  %212 = vst [vmem:[%s208 + $0x8] sm:$0xff] %v211
                  %v213 = vld [vmem:[%s207 + $0x10] sm:$0xff]
                  %214 = vst [vmem:[%s208 + $0x10] sm:$0xff] %v213
                  %v215 = vld [vmem:[%s207 + $0x18] sm:$0xff]
                  %216 = vst [vmem:[%s208 + $0x18] sm:$0xff] %v215
                  %v217 = vld [vmem:[%s207 + $0x1a8] sm:$0xff]
                  %218 = vst [vmem:[%s208 + $0xd8] sm:$0xff] %v217
                  %v219 = vld [vmem:[%s207 + $0x1b0] sm:$0xff]
                  %220 = vst [vmem:[%s208 + $0xe0] sm:$0xff] %v219
                  %v221 = vld [vmem:[%s207 + $0x1b8] sm:$0xff]
                  %222 = vst [vmem:[%s208 + $0xe8] sm:$0xff] %v221
                  %v223 = vld [vmem:[%s207 + $0x1c0] sm:$0xff]
                  %224 = vst [vmem:[%s208 + $0xf0] sm:$0xff] %v223
                  %v225 = vld [vmem:[%s207 + $0x350] sm:$0xff]
                  %226 = vst [vmem:[%s208 + $0x1b0] sm:$0xff] %v225
                  %v227 = vld [vmem:[%s207 + $0x358] sm:$0xff]
                  %228 = vst [vmem:[%s208 + $0x1b8] sm:$0xff] %v227
                  %v229 = vld [vmem:[%s207 + $0x360] sm:$0xff]
                  %230 = vst [vmem:[%s208 + $0x1c0] sm:$0xff] %v229
                  %v231 = vld [vmem:[%s207 + $0x368] sm:$0xff]
                  %232 = vst [vmem:[%s208 + $0x1c8] sm:$0xff] %v231
                  %v233 = vld [vmem:[%s207 + $0x4f8] sm:$0xff]
                  %234 = vst [vmem:[%s208 + $0x288] sm:$0xff] %v233
                  %v235 = vld [vmem:[%s207 + $0x500] sm:$0xff]
                  %236 = vst [vmem:[%s208 + $0x290] sm:$0xff] %v235
                  %v237 = vld [vmem:[%s207 + $0x508] sm:$0xff]
                  %238 = vst [vmem:[%s208 + $0x298] sm:$0xff] %v237
                  %v239 = vld [vmem:[%s207 + $0x510] sm:$0xff]
                  %240 = vst [vmem:[%s208 + $0x2a0] sm:$0xff] %v239
                  %v241 = vld [vmem:[%s207 + $0x6a0] sm:$0xff]
                  %242 = vst [vmem:[%s208 + $0x360] sm:$0xff] %v241
                  %v243 = vld [vmem:[%s207 + $0x6a8] sm:$0xff]
                  %244 = vst [vmem:[%s208 + $0x368] sm:$0xff] %v243
                  %v245 = vld [vmem:[%s207 + $0x6b0] sm:$0xff]
                  %246 = vst [vmem:[%s208 + $0x370] sm:$0xff] %v245
                  %v247 = vld [vmem:[%s207 + $0x6b8] sm:$0xff]
                  %248 = vst [vmem:[%s208 + $0x378] sm:$0xff] %v247
                  %v249 = vld [vmem:[%s207 + $0x848] sm:$0xff]
                  %250 = vst [vmem:[%s208 + $0x438] sm:$0xff] %v249
                  %v251 = vld [vmem:[%s207 + $0x850] sm:$0xff]
                  %252 = vst [vmem:[%s208 + $0x440] sm:$0xff] %v251
                  %v253 = vld [vmem:[%s207 + $0x858] sm:$0xff]
                  %254 = vst [vmem:[%s208 + $0x448] sm:$0xff] %v253
                  %v255 = vld [vmem:[%s207 + $0x860] sm:$0xff]
                  %256 = vst [vmem:[%s208 + $0x450] sm:$0xff] %v255
                  %v257 = vld [vmem:[%s207 + $0x9f0] sm:$0xff]
                  %258 = vst [vmem:[%s208 + $0x510] sm:$0xff] %v257
                  %v259 = vld [vmem:[%s207 + $0x9f8] sm:$0xff]
                  %260 = vst [vmem:[%s208 + $0x518] sm:$0xff] %v259
                  %v261 = vld [vmem:[%s207 + $0xa00] sm:$0xff]
                  %262 = vst [vmem:[%s208 + $0x520] sm:$0xff] %v261
                  %v263 = vld [vmem:[%s207 + $0xa08] sm:$0xff]
                  %264 = vst [vmem:[%s208 + $0x528] sm:$0xff] %v263
                  %v265 = vld [vmem:[%s207 + $0xb98] sm:$0xff]
                  %266 = vst [vmem:[%s208 + $0x5e8] sm:$0xff] %v265
                  %v267 = vld [vmem:[%s207 + $0xba0] sm:$0xff]
                  %268 = vst [vmem:[%s208 + $0x5f0] sm:$0xff] %v267
                  %v269 = vld [vmem:[%s207 + $0xba8] sm:$0xff]
                  %270 = vst [vmem:[%s208 + $0x5f8] sm:$0xff] %v269
                  %v271 = vld [vmem:[%s207 + $0xbb0] sm:$0xff]
                  %272 = vst [vmem:[%s208 + $0x600] sm:$0xff] %v271
                  %v273 = vld [vmem:[%s207 + $0xd40] sm:$0xff]
                  %274 = vst [vmem:[%s208 + $0x6c0] sm:$0xff] %v273
                  %v275 = vld [vmem:[%s207 + $0xd48] sm:$0xff]
                  %276 = vst [vmem:[%s208 + $0x6c8] sm:$0xff] %v275
                  %v277 = vld [vmem:[%s207 + $0xd50] sm:$0xff]
                  %278 = vst [vmem:[%s208 + $0x6d0] sm:$0xff] %v277
                  %v279 = vld [vmem:[%s207 + $0xd58] sm:$0xff]
                  %280 = vst [vmem:[%s208 + $0x6d8] sm:$0xff] %v279
                  %v281 = vld [vmem:[%s207 + $0xee8] sm:$0xff]
                  %282 = vst [vmem:[%s208 + $0x798] sm:$0xff] %v281
                  %v283 = vld [vmem:[%s207 + $0xef0] sm:$0xff]
                  %284 = vst [vmem:[%s208 + $0x7a0] sm:$0xff] %v283
                  %v285 = vld [vmem:[%s207 + $0xef8] sm:$0xff]
                  %286 = vst [vmem:[%s208 + $0x7a8] sm:$0xff] %v285
                  %v287 = vld [vmem:[%s207 + $0xf00] sm:$0xff]
                  %288 = vst [vmem:[%s208 + $0x7b0] sm:$0xff] %v287
                  %v289 = vld [vmem:[%s207 + $0x1090] sm:$0xff]
                  %290 = vst [vmem:[%s208 + $0x870] sm:$0xff] %v289
                  %v291 = vld [vmem:[%s207 + $0x1098] sm:$0xff]
                  %292 = vst [vmem:[%s208 + $0x878] sm:$0xff] %v291
                  %v293 = vld [vmem:[%s207 + $0x10a0] sm:$0xff]
                  %294 = vst [vmem:[%s208 + $0x880] sm:$0xff] %v293
                  %v295 = vld [vmem:[%s207 + $0x10a8] sm:$0xff]
                  %296 = vst [vmem:[%s208 + $0x888] sm:$0xff] %v295
                  %v297 = vld [vmem:[%s207 + $0x1238] sm:$0xff]
                  %298 = vst [vmem:[%s208 + $0x948] sm:$0xff] %v297
                  %v299 = vld [vmem:[%s207 + $0x1240] sm:$0xff]
                  %300 = vst [vmem:[%s208 + $0x950] sm:$0xff] %v299
                  %v301 = vld [vmem:[%s207 + $0x1248] sm:$0xff]
                  %302 = vst [vmem:[%s208 + $0x958] sm:$0xff] %v301
                  %v303 = vld [vmem:[%s207 + $0x1250] sm:$0xff]
                  %304 = vst [vmem:[%s208 + $0x960] sm:$0xff] %v303
                  %v305 = vld [vmem:[%s207 + $0x13e0] sm:$0xff]
                  %306 = vst [vmem:[%s208 + $0xa20] sm:$0xff] %v305
                  %v307 = vld [vmem:[%s207 + $0x13e8] sm:$0xff]
                  %308 = vst [vmem:[%s208 + $0xa28] sm:$0xff] %v307
                  %v309 = vld [vmem:[%s207 + $0x13f0] sm:$0xff]
                  %310 = vst [vmem:[%s208 + $0xa30] sm:$0xff] %v309
                  %v311 = vld [vmem:[%s207 + $0x13f8] sm:$0xff]
                  %312 = vst [vmem:[%s208 + $0xa38] sm:$0xff] %v311
                  %v313 = vld [vmem:[%s207 + $0x1588] sm:$0xff]
                  %314 = vst [vmem:[%s208 + $0xaf8] sm:$0xff] %v313
                  %v315 = vld [vmem:[%s207 + $0x1590] sm:$0xff]
                  %316 = vst [vmem:[%s208 + $0xb00] sm:$0xff] %v315
                  %v317 = vld [vmem:[%s207 + $0x1598] sm:$0xff]
                  %318 = vst [vmem:[%s208 + $0xb08] sm:$0xff] %v317
                  %v319 = vld [vmem:[%s207 + $0x15a0] sm:$0xff]
                  %320 = vst [vmem:[%s208 + $0xb10] sm:$0xff] %v319
                  %s321 = sadd.s32 1, %s206
                  %p322 = scmp.ge.s32.totalorder %s321, %s199
                  %s323 = scalar_select %p322, 0, %s321
                  %s324 = smul.u32 %s323, 32
                  %s325 = smul.u32 %s323, 32
                  %s326 = scalar_lea.vmem %s143, %s324
                  %s327 = scalar_lea.vmem %s135, %s325 [#allocation3]
                $region56: #{unet_to_regression.2} parent=50 // loop_footer
                  %s203 = sadd.s32 %s201, 1
                $region57: #{unet_to_regression.2} parent=50 // loop_footer_branch
                  %200 = sbr.rel target = $region53
                $region58: #{unet_to_regression.2} parent=50 // loop_exit
                  _
                %s328 = sshrl.u32 %s198, 2
                %s329 = sand.u32 %s198, 3
                %s330 = smul.u32 %s328, 4
                %s331 = smul.u32 8, %s330
                %s332 = scalar_lea.vmem %s143, %s331
                %s333 = smul.u32 8, %s330
                %s334 = scalar_lea.vmem %s135, %s333 [#allocation3]
                // While loop
                $region59: #{unet_to_regression.2} parent=50 // loop_pre_header
                  _
                $region60: #{unet_to_regression.2} parent=50 // loop_header
                  %s336 = sphi 0, %s338
                  %p337 = scmp.ge.s32.totalorder %s336, %s329
                  %s341 = sphi 0, %s374
                  %s342 = sphi %s332, %s377
                  %s343 = sphi %s334, %s378
                $region61: #{unet_to_regression.2} parent=50 // loop_header_branch
                  %340 = sbr.rel (%p337) target = $region65
                $region62: #{unet_to_regression.2} parent=50 // loop_body
                  %v344 = vld [vmem:[%s342] sm:$0xff]
                  %345 = vst [vmem:[%s343] sm:$0xff] %v344
                  %v346 = vld [vmem:[%s342 + $0x1a8] sm:$0xff]
                  %347 = vst [vmem:[%s343 + $0xd8] sm:$0xff] %v346
                  %v348 = vld [vmem:[%s342 + $0x350] sm:$0xff]
                  %349 = vst [vmem:[%s343 + $0x1b0] sm:$0xff] %v348
                  %v350 = vld [vmem:[%s342 + $0x4f8] sm:$0xff]
                  %351 = vst [vmem:[%s343 + $0x288] sm:$0xff] %v350
                  %v352 = vld [vmem:[%s342 + $0x6a0] sm:$0xff]
                  %353 = vst [vmem:[%s343 + $0x360] sm:$0xff] %v352
                  %v354 = vld [vmem:[%s342 + $0x848] sm:$0xff]
                  %355 = vst [vmem:[%s343 + $0x438] sm:$0xff] %v354
                  %v356 = vld [vmem:[%s342 + $0x9f0] sm:$0xff]
                  %357 = vst [vmem:[%s343 + $0x510] sm:$0xff] %v356
                  %v358 = vld [vmem:[%s342 + $0xb98] sm:$0xff]
                  %359 = vst [vmem:[%s343 + $0x5e8] sm:$0xff] %v358
                  %v360 = vld [vmem:[%s342 + $0xd40] sm:$0xff]
                  %361 = vst [vmem:[%s343 + $0x6c0] sm:$0xff] %v360
                  %v362 = vld [vmem:[%s342 + $0xee8] sm:$0xff]
                  %363 = vst [vmem:[%s343 + $0x798] sm:$0xff] %v362
                  %v364 = vld [vmem:[%s342 + $0x1090] sm:$0xff]
                  %365 = vst [vmem:[%s343 + $0x870] sm:$0xff] %v364
                  %v366 = vld [vmem:[%s342 + $0x1238] sm:$0xff]
                  %367 = vst [vmem:[%s343 + $0x948] sm:$0xff] %v366
                  %v368 = vld [vmem:[%s342 + $0x13e0] sm:$0xff]
                  %369 = vst [vmem:[%s343 + $0xa20] sm:$0xff] %v368
                  %v370 = vld [vmem:[%s342 + $0x1588] sm:$0xff]
                  %371 = vst [vmem:[%s343 + $0xaf8] sm:$0xff] %v370
                  %s372 = sadd.s32 1, %s341
                  %p373 = scmp.ge.s32.totalorder %s372, %s329
                  %s374 = scalar_select %p373, 0, %s372
                  %s375 = smul.u32 %s374, 8
                  %s376 = smul.u32 %s374, 8
                  %s377 = scalar_lea.vmem %s332, %s375
                  %s378 = scalar_lea.vmem %s334, %s376 [#allocation3]
                $region63: #{unet_to_regression.2} parent=50 // loop_footer
                  %s338 = sadd.s32 %s336, 1
                $region64: #{unet_to_regression.2} parent=50 // loop_footer_branch
                  %335 = sbr.rel target = $region60
                $region65: #{unet_to_regression.2} parent=50 // loop_exit
                  _
              $region51: #{unet_to_regression.2} parent=35 // pred_fallthru
                _
              %p379 = pneg %p194
              // Predicated region
              $region66: #{unet_to_regression.2} parent=35 // pred_check
                _
              $region67: #{unet_to_regression.2} parent=35 // pred_check_branch
                %381 = sbr.rel (%p194) target = $region69
              $region68: #{unet_to_regression.2} parent=35 // pred_region
                %s382 = sand.u32 %s144, 7
                %s383 = ssub.s32 %s144, %s382
                %s384 = scalar_lea.vmem %s143, %s383
                %s385 = ssub.s32 %s144, %s382
                %s386 = scalar_lea.vmem %s135, %s385 [#allocation3]
                %s387 = sshrl.u32 %s144, 3
                %s388 = sshrl.u32 %s387, 2
                // While loop
                $region70: #{unet_to_regression.2} parent=68 // loop_pre_header
                  _
                $region71: #{unet_to_regression.2} parent=68 // loop_header
                  %s390 = sphi 0, %s392
                  %p391 = scmp.ge.s32.totalorder %s390, %s388
                  %s395 = sphi 0, %s512
                  %s396 = sphi %s143, %s515
                  %s397 = sphi %s135, %s516
                $region72: #{unet_to_regression.2} parent=68 // loop_header_branch
                  %394 = sbr.rel (%p391) target = $region76
                $region73: #{unet_to_regression.2} parent=68 // loop_body
                  %v398 = vld [vmem:[%s396] sm:$0xff]
                  %399 = vst [vmem:[%s397] sm:$0xff] %v398
                  %v400 = vld [vmem:[%s396 + $0x8] sm:$0xff]
                  %401 = vst [vmem:[%s397 + $0x8] sm:$0xff] %v400
                  %v402 = vld [vmem:[%s396 + $0x10] sm:$0xff]
                  %403 = vst [vmem:[%s397 + $0x10] sm:$0xff] %v402
                  %v404 = vld [vmem:[%s396 + $0x18] sm:$0xff]
                  %405 = vst [vmem:[%s397 + $0x18] sm:$0xff] %v404
                  %v406 = vld [vmem:[%s396 + $0x1a8] sm:$0xff]
                  %407 = vst [vmem:[%s397 + $0xd8] sm:$0xff] %v406
                  %v408 = vld [vmem:[%s396 + $0x1b0] sm:$0xff]
                  %409 = vst [vmem:[%s397 + $0xe0] sm:$0xff] %v408
                  %v410 = vld [vmem:[%s396 + $0x1b8] sm:$0xff]
                  %411 = vst [vmem:[%s397 + $0xe8] sm:$0xff] %v410
                  %v412 = vld [vmem:[%s396 + $0x1c0] sm:$0xff]
                  %413 = vst [vmem:[%s397 + $0xf0] sm:$0xff] %v412
                  %v414 = vld [vmem:[%s396 + $0x350] sm:$0xff]
                  %415 = vst [vmem:[%s397 + $0x1b0] sm:$0xff] %v414
                  %v416 = vld [vmem:[%s396 + $0x358] sm:$0xff]
                  %417 = vst [vmem:[%s397 + $0x1b8] sm:$0xff] %v416
                  %v418 = vld [vmem:[%s396 + $0x360] sm:$0xff]
                  %419 = vst [vmem:[%s397 + $0x1c0] sm:$0xff] %v418
                  %v420 = vld [vmem:[%s396 + $0x368] sm:$0xff]
                  %421 = vst [vmem:[%s397 + $0x1c8] sm:$0xff] %v420
                  %v422 = vld [vmem:[%s396 + $0x4f8] sm:$0xff]
                  %423 = vst [vmem:[%s397 + $0x288] sm:$0xff] %v422
                  %v424 = vld [vmem:[%s396 + $0x500] sm:$0xff]
                  %425 = vst [vmem:[%s397 + $0x290] sm:$0xff] %v424
                  %v426 = vld [vmem:[%s396 + $0x508] sm:$0xff]
                  %427 = vst [vmem:[%s397 + $0x298] sm:$0xff] %v426
                  %v428 = vld [vmem:[%s396 + $0x510] sm:$0xff]
                  %429 = vst [vmem:[%s397 + $0x2a0] sm:$0xff] %v428
                  %v430 = vld [vmem:[%s396 + $0x6a0] sm:$0xff]
                  %431 = vst [vmem:[%s397 + $0x360] sm:$0xff] %v430
                  %v432 = vld [vmem:[%s396 + $0x6a8] sm:$0xff]
                  %433 = vst [vmem:[%s397 + $0x368] sm:$0xff] %v432
                  %v434 = vld [vmem:[%s396 + $0x6b0] sm:$0xff]
                  %435 = vst [vmem:[%s397 + $0x370] sm:$0xff] %v434
                  %v436 = vld [vmem:[%s396 + $0x6b8] sm:$0xff]
                  %437 = vst [vmem:[%s397 + $0x378] sm:$0xff] %v436
                  %v438 = vld [vmem:[%s396 + $0x848] sm:$0xff]
                  %439 = vst [vmem:[%s397 + $0x438] sm:$0xff] %v438
                  %v440 = vld [vmem:[%s396 + $0x850] sm:$0xff]
                  %441 = vst [vmem:[%s397 + $0x440] sm:$0xff] %v440
                  %v442 = vld [vmem:[%s396 + $0x858] sm:$0xff]
                  %443 = vst [vmem:[%s397 + $0x448] sm:$0xff] %v442
                  %v444 = vld [vmem:[%s396 + $0x860] sm:$0xff]
                  %445 = vst [vmem:[%s397 + $0x450] sm:$0xff] %v444
                  %v446 = vld [vmem:[%s396 + $0x9f0] sm:$0xff]
                  %447 = vst [vmem:[%s397 + $0x510] sm:$0xff] %v446
                  %v448 = vld [vmem:[%s396 + $0x9f8] sm:$0xff]
                  %449 = vst [vmem:[%s397 + $0x518] sm:$0xff] %v448
                  %v450 = vld [vmem:[%s396 + $0xa00] sm:$0xff]
                  %451 = vst [vmem:[%s397 + $0x520] sm:$0xff] %v450
                  %v452 = vld [vmem:[%s396 + $0xa08] sm:$0xff]
                  %453 = vst [vmem:[%s397 + $0x528] sm:$0xff] %v452
                  %v454 = vld [vmem:[%s396 + $0xb98] sm:$0xff]
                  %455 = vst [vmem:[%s397 + $0x5e8] sm:$0xff] %v454
                  %v456 = vld [vmem:[%s396 + $0xba0] sm:$0xff]
                  %457 = vst [vmem:[%s397 + $0x5f0] sm:$0xff] %v456
                  %v458 = vld [vmem:[%s396 + $0xba8] sm:$0xff]
                  %459 = vst [vmem:[%s397 + $0x5f8] sm:$0xff] %v458
                  %v460 = vld [vmem:[%s396 + $0xbb0] sm:$0xff]
                  %461 = vst [vmem:[%s397 + $0x600] sm:$0xff] %v460
                  %v462 = vld [vmem:[%s396 + $0xd40] sm:$0xff]
                  %463 = vst [vmem:[%s397 + $0x6c0] sm:$0xff] %v462
                  %v464 = vld [vmem:[%s396 + $0xd48] sm:$0xff]
                  %465 = vst [vmem:[%s397 + $0x6c8] sm:$0xff] %v464
                  %v466 = vld [vmem:[%s396 + $0xd50] sm:$0xff]
                  %467 = vst [vmem:[%s397 + $0x6d0] sm:$0xff] %v466
                  %v468 = vld [vmem:[%s396 + $0xd58] sm:$0xff]
                  %469 = vst [vmem:[%s397 + $0x6d8] sm:$0xff] %v468
                  %v470 = vld [vmem:[%s396 + $0xee8] sm:$0xff]
                  %471 = vst [vmem:[%s397 + $0x798] sm:$0xff] %v470
                  %v472 = vld [vmem:[%s396 + $0xef0] sm:$0xff]
                  %473 = vst [vmem:[%s397 + $0x7a0] sm:$0xff] %v472
                  %v474 = vld [vmem:[%s396 + $0xef8] sm:$0xff]
                  %475 = vst [vmem:[%s397 + $0x7a8] sm:$0xff] %v474
                  %v476 = vld [vmem:[%s396 + $0xf00] sm:$0xff]
                  %477 = vst [vmem:[%s397 + $0x7b0] sm:$0xff] %v476
                  %v478 = vld [vmem:[%s396 + $0x1090] sm:$0xff]
                  %479 = vst [vmem:[%s397 + $0x870] sm:$0xff] %v478
                  %v480 = vld [vmem:[%s396 + $0x1098] sm:$0xff]
                  %481 = vst [vmem:[%s397 + $0x878] sm:$0xff] %v480
                  %v482 = vld [vmem:[%s396 + $0x10a0] sm:$0xff]
                  %483 = vst [vmem:[%s397 + $0x880] sm:$0xff] %v482
                  %v484 = vld [vmem:[%s396 + $0x10a8] sm:$0xff]
                  %485 = vst [vmem:[%s397 + $0x888] sm:$0xff] %v484
                  %v486 = vld [vmem:[%s396 + $0x1238] sm:$0xff]
                  %487 = vst [vmem:[%s397 + $0x948] sm:$0xff] %v486
                  %v488 = vld [vmem:[%s396 + $0x1240] sm:$0xff]
                  %489 = vst [vmem:[%s397 + $0x950] sm:$0xff] %v488
                  %v490 = vld [vmem:[%s396 + $0x1248] sm:$0xff]
                  %491 = vst [vmem:[%s397 + $0x958] sm:$0xff] %v490
                  %v492 = vld [vmem:[%s396 + $0x1250] sm:$0xff]
                  %493 = vst [vmem:[%s397 + $0x960] sm:$0xff] %v492
                  %v494 = vld [vmem:[%s396 + $0x13e0] sm:$0xff]
                  %495 = vst [vmem:[%s397 + $0xa20] sm:$0xff] %v494
                  %v496 = vld [vmem:[%s396 + $0x13e8] sm:$0xff]
                  %497 = vst [vmem:[%s397 + $0xa28] sm:$0xff] %v496
                  %v498 = vld [vmem:[%s396 + $0x13f0] sm:$0xff]
                  %499 = vst [vmem:[%s397 + $0xa30] sm:$0xff] %v498
                  %v500 = vld [vmem:[%s396 + $0x13f8] sm:$0xff]
                  %501 = vst [vmem:[%s397 + $0xa38] sm:$0xff] %v500
                  %v502 = vld [vmem:[%s396 + $0x1588] sm:$0xff]
                  %503 = vst [vmem:[%s397 + $0xaf8] sm:$0xff] %v502
                  %v504 = vld [vmem:[%s396 + $0x1590] sm:$0xff]
                  %505 = vst [vmem:[%s397 + $0xb00] sm:$0xff] %v504
                  %v506 = vld [vmem:[%s396 + $0x1598] sm:$0xff]
                  %507 = vst [vmem:[%s397 + $0xb08] sm:$0xff] %v506
                  %v508 = vld [vmem:[%s396 + $0x15a0] sm:$0xff]
                  %509 = vst [vmem:[%s397 + $0xb10] sm:$0xff] %v508
                  %s510 = sadd.s32 1, %s395
                  %p511 = scmp.ge.s32.totalorder %s510, %s388
                  %s512 = scalar_select %p511, 0, %s510
                  %s513 = smul.u32 %s512, 32
                  %s514 = smul.u32 %s512, 32
                  %s515 = scalar_lea.vmem %s143, %s513
                  %s516 = scalar_lea.vmem %s135, %s514 [#allocation3]
                $region74: #{unet_to_regression.2} parent=68 // loop_footer
                  %s392 = sadd.s32 %s390, 1
                $region75: #{unet_to_regression.2} parent=68 // loop_footer_branch
                  %389 = sbr.rel target = $region71
                $region76: #{unet_to_regression.2} parent=68 // loop_exit
                  _
                %s517 = sshrl.u32 %s387, 2
                %s518 = sand.u32 %s387, 3
                %s519 = smul.u32 %s517, 4
                %s520 = smul.u32 8, %s519
                %s521 = scalar_lea.vmem %s143, %s520
                %s522 = smul.u32 8, %s519
                %s523 = scalar_lea.vmem %s135, %s522 [#allocation3]
                // While loop
                $region77: #{unet_to_regression.2} parent=68 // loop_pre_header
                  _
                $region78: #{unet_to_regression.2} parent=68 // loop_header
                  %s525 = sphi 0, %s527
                  %p526 = scmp.ge.s32.totalorder %s525, %s518
                  %s530 = sphi 0, %s563
                  %s531 = sphi %s521, %s566
                  %s532 = sphi %s523, %s567
                $region79: #{unet_to_regression.2} parent=68 // loop_header_branch
                  %529 = sbr.rel (%p526) target = $region83
                $region80: #{unet_to_regression.2} parent=68 // loop_body
                  %v533 = vld [vmem:[%s531] sm:$0xff]
                  %534 = vst [vmem:[%s532] sm:$0xff] %v533
                  %v535 = vld [vmem:[%s531 + $0x1a8] sm:$0xff]
                  %536 = vst [vmem:[%s532 + $0xd8] sm:$0xff] %v535
                  %v537 = vld [vmem:[%s531 + $0x350] sm:$0xff]
                  %538 = vst [vmem:[%s532 + $0x1b0] sm:$0xff] %v537
                  %v539 = vld [vmem:[%s531 + $0x4f8] sm:$0xff]
                  %540 = vst [vmem:[%s532 + $0x288] sm:$0xff] %v539
                  %v541 = vld [vmem:[%s531 + $0x6a0] sm:$0xff]
                  %542 = vst [vmem:[%s532 + $0x360] sm:$0xff] %v541
                  %v543 = vld [vmem:[%s531 + $0x848] sm:$0xff]
                  %544 = vst [vmem:[%s532 + $0x438] sm:$0xff] %v543
                  %v545 = vld [vmem:[%s531 + $0x9f0] sm:$0xff]
                  %546 = vst [vmem:[%s532 + $0x510] sm:$0xff] %v545
                  %v547 = vld [vmem:[%s531 + $0xb98] sm:$0xff]
                  %548 = vst [vmem:[%s532 + $0x5e8] sm:$0xff] %v547
                  %v549 = vld [vmem:[%s531 + $0xd40] sm:$0xff]
                  %550 = vst [vmem:[%s532 + $0x6c0] sm:$0xff] %v549
                  %v551 = vld [vmem:[%s531 + $0xee8] sm:$0xff]
                  %552 = vst [vmem:[%s532 + $0x798] sm:$0xff] %v551
                  %v553 = vld [vmem:[%s531 + $0x1090] sm:$0xff]
                  %554 = vst [vmem:[%s532 + $0x870] sm:$0xff] %v553
                  %v555 = vld [vmem:[%s531 + $0x1238] sm:$0xff]
                  %556 = vst [vmem:[%s532 + $0x948] sm:$0xff] %v555
                  %v557 = vld [vmem:[%s531 + $0x13e0] sm:$0xff]
                  %558 = vst [vmem:[%s532 + $0xa20] sm:$0xff] %v557
                  %v559 = vld [vmem:[%s531 + $0x1588] sm:$0xff]
                  %560 = vst [vmem:[%s532 + $0xaf8] sm:$0xff] %v559
                  %s561 = sadd.s32 1, %s530
                  %p562 = scmp.ge.s32.totalorder %s561, %s518
                  %s563 = scalar_select %p562, 0, %s561
                  %s564 = smul.u32 %s563, 8
                  %s565 = smul.u32 %s563, 8
                  %s566 = scalar_lea.vmem %s521, %s564
                  %s567 = scalar_lea.vmem %s523, %s565 [#allocation3]
                $region81: #{unet_to_regression.2} parent=68 // loop_footer
                  %s527 = sadd.s32 %s525, 1
                $region82: #{unet_to_regression.2} parent=68 // loop_footer_branch
                  %524 = sbr.rel target = $region78
                $region83: #{unet_to_regression.2} parent=68 // loop_exit
                  _
                %s568 = sshll.u32 1, %s382
                %s569 = ssub.s32 %s568, 1
                loop: start=0, step=1, limit=1
                $region84: #{unet_to_regression.2} parent=68 // loop_pre_header
                  _
                $region85: #{unet_to_regression.2} parent=68 // loop_header
                  %s571 = sphi 0, %s575
                  %p572 = scmp.ge.s32.totalorder %s571, 1
                  %s576 = sphi %s384, %s384
                  %s577 = sphi %s386, %s386
                $region86: #{unet_to_regression.2} parent=68 // loop_header_branch
                  %574 = sbr.rel (%p572) target = $region90
                $region87: #{unet_to_regression.2} parent=68 // loop_body
                  %v578 = vld [vmem:[%s576] sm:%s569]
                  %579 = vst [vmem:[%s577] sm:%s569] %v578
                  %v580 = vld [vmem:[%s576 + $0x1a8] sm:%s569]
                  %581 = vst [vmem:[%s577 + $0xd8] sm:%s569] %v580
                  %v582 = vld [vmem:[%s576 + $0x350] sm:%s569]
                  %583 = vst [vmem:[%s577 + $0x1b0] sm:%s569] %v582
                  %v584 = vld [vmem:[%s576 + $0x4f8] sm:%s569]
                  %585 = vst [vmem:[%s577 + $0x288] sm:%s569] %v584
                  %v586 = vld [vmem:[%s576 + $0x6a0] sm:%s569]
                  %587 = vst [vmem:[%s577 + $0x360] sm:%s569] %v586
                  %v588 = vld [vmem:[%s576 + $0x848] sm:%s569]
                  %589 = vst [vmem:[%s577 + $0x438] sm:%s569] %v588
                  %v590 = vld [vmem:[%s576 + $0x9f0] sm:%s569]
                  %591 = vst [vmem:[%s577 + $0x510] sm:%s569] %v590
                  %v592 = vld [vmem:[%s576 + $0xb98] sm:%s569]
                  %593 = vst [vmem:[%s577 + $0x5e8] sm:%s569] %v592
                  %v594 = vld [vmem:[%s576 + $0xd40] sm:%s569]
                  %595 = vst [vmem:[%s577 + $0x6c0] sm:%s569] %v594
                  %v596 = vld [vmem:[%s576 + $0xee8] sm:%s569]
                  %597 = vst [vmem:[%s577 + $0x798] sm:%s569] %v596
                  %v598 = vld [vmem:[%s576 + $0x1090] sm:%s569]
                  %599 = vst [vmem:[%s577 + $0x870] sm:%s569] %v598
                  %v600 = vld [vmem:[%s576 + $0x1238] sm:%s569]
                  %601 = vst [vmem:[%s577 + $0x948] sm:%s569] %v600
                  %v602 = vld [vmem:[%s576 + $0x13e0] sm:%s569]
                  %603 = vst [vmem:[%s577 + $0xa20] sm:%s569] %v602
                  %v604 = vld [vmem:[%s576 + $0x1588] sm:%s569]
                  %605 = vst [vmem:[%s577 + $0xaf8] sm:%s569] %v604
                $region88: #{unet_to_regression.2} parent=68 // loop_footer
                  %s575 = sadd.s32 1, %s571
                $region89: #{unet_to_regression.2} parent=68 // loop_footer_branch
                  %570 = sbr.rel target = $region85
                $region90: #{unet_to_regression.2} parent=68 // loop_exit
                  _
              $region69: #{unet_to_regression.2} parent=35 // pred_fallthru
                _
            $region36: #{unet_to_regression.2} parent=31 // pred_fallthru
              _
            // Predicated region
            $region37: #{unet_to_regression.2} parent=31 // pred_check
              %p152 = pneg %p148
            $region38: #{unet_to_regression.2} parent=31 // pred_check_branch
              %154 = sbr.rel (%p152) target = $region40
            $region39: #{unet_to_regression.2} parent=31 // pred_region
              %s155 = sshll.u32 1, %s144
              %s156 = ssub.s32 %s155, 1
              loop: start=0, step=1, limit=1
              $region41: #{unet_to_regression.2} parent=39 // loop_pre_header
                _
              $region42: #{unet_to_regression.2} parent=39 // loop_header
                %s158 = sphi 0, %s162
                %p159 = scmp.ge.s32.totalorder %s158, 1
                %s163 = sphi %s143, %s143
                %s164 = sphi %s135, %s135
              $region43: #{unet_to_regression.2} parent=39 // loop_header_branch
                %161 = sbr.rel (%p159) target = $region47
              $region44: #{unet_to_regression.2} parent=39 // loop_body
                %v165 = vld [vmem:[%s163] sm:%s156]
                %166 = vst [vmem:[%s164] sm:%s156] %v165
                %v167 = vld [vmem:[%s163 + $0x1a8] sm:%s156]
                %168 = vst [vmem:[%s164 + $0xd8] sm:%s156] %v167
                %v169 = vld [vmem:[%s163 + $0x350] sm:%s156]
                %170 = vst [vmem:[%s164 + $0x1b0] sm:%s156] %v169
                %v171 = vld [vmem:[%s163 + $0x4f8] sm:%s156]
                %172 = vst [vmem:[%s164 + $0x288] sm:%s156] %v171
                %v173 = vld [vmem:[%s163 + $0x6a0] sm:%s156]
                %174 = vst [vmem:[%s164 + $0x360] sm:%s156] %v173
                %v175 = vld [vmem:[%s163 + $0x848] sm:%s156]
                %176 = vst [vmem:[%s164 + $0x438] sm:%s156] %v175
                %v177 = vld [vmem:[%s163 + $0x9f0] sm:%s156]
                %178 = vst [vmem:[%s164 + $0x510] sm:%s156] %v177
                %v179 = vld [vmem:[%s163 + $0xb98] sm:%s156]
                %180 = vst [vmem:[%s164 + $0x5e8] sm:%s156] %v179
                %v181 = vld [vmem:[%s163 + $0xd40] sm:%s156]
                %182 = vst [vmem:[%s164 + $0x6c0] sm:%s156] %v181
                %v183 = vld [vmem:[%s163 + $0xee8] sm:%s156]
                %184 = vst [vmem:[%s164 + $0x798] sm:%s156] %v183
                %v185 = vld [vmem:[%s163 + $0x1090] sm:%s156]
                %186 = vst [vmem:[%s164 + $0x870] sm:%s156] %v185
                %v187 = vld [vmem:[%s163 + $0x1238] sm:%s156]
                %188 = vst [vmem:[%s164 + $0x948] sm:%s156] %v187
                %v189 = vld [vmem:[%s163 + $0x13e0] sm:%s156]
                %190 = vst [vmem:[%s164 + $0xa20] sm:%s156] %v189
                %v191 = vld [vmem:[%s163 + $0x1588] sm:%s156]
                %192 = vst [vmem:[%s164 + $0xaf8] sm:%s156] %v191
              $region45: #{unet_to_regression.2} parent=39 // loop_footer
                %s162 = sadd.s32 1, %s158
              $region46: #{unet_to_regression.2} parent=39 // loop_footer_branch
                %157 = sbr.rel target = $region42
              $region47: #{unet_to_regression.2} parent=39 // loop_exit
                _
            $region40: #{unet_to_regression.2} parent=31 // pred_fallthru
              _
          $region32: #{unet_to_regression.2} parent=27 // pred_fallthru
            _
          %606 = vnop
        $region28: #{unet_to_regression.2} parent=23 // pred_fallthru
          _
      $region24: #{unet_to_regression.2} parent=5 // pred_fallthru
        _
      %p607 = scmp.le.s32.totalorder 1, %s10
      %p608 = scmp.lt.s32.totalorder %s10, 3
      %p609 = pnand %p607, %p608
      %p610 = pneg %p609
      // Predicated region
      $region91: #{unet_to_regression.2} parent=5 // pred_check
        _
      $region92: #{unet_to_regression.2} parent=5 // pred_check_branch
        %612 = sbr.rel (%p609) target = $region94
      $region93: #{unet_to_regression.2} parent=5 // pred_region
        %s613 = ssub.s32 %s10, 1
        %s614 = sand.u32 %s23, 1
        %s615 = sand.u32 %s23, 1
        %s616 = smul.addr %s615, 3024
        %s617 = scalar_lea.vmem [#allocation3], %s616
        // Predicated region
        $region95: #{unet_to_regression.2} parent=93 // pred_check
          %p618 = pneg %p36
        $region96: #{unet_to_regression.2} parent=93 // pred_check_branch
          %620 = sbr.rel (%p618) target = $region98
        $region97: #{unet_to_regression.2} parent=93 // pred_region
          _
        $region98: #{unet_to_regression.2} parent=93 // pred_fallthru
          _
        %s621 = sand.u32 %s23, 1
        %s622 = sand.u32 %s23, 1
        %s623 = smul.addr %s622, 3024
        %s624 = scalar_lea.vmem [#allocation3], %s623
        %p625 = pneg %p36
        %p626 = pneg %p33
        %p627 = pneg %p57
        %p628 = pneg %p54
        %p629 = pneg %p78
        %p630 = pneg %p75
        %p631 = pneg %p104
        %p632 = pneg %p101
        %s633 = sand.u32 %s91, 1
        %s634 = sand.u32 %s91, 1
        %s635 = smul.addr %s634, 27
        %s636 = scalar_lea.vmem [#allocation4], %s635
        %s637 = smul.u32 27, %s15
        %s638 = ssub.s32 53, %s637
        %p639 = scmp.lt.s32.totalorder %s638, 27
        %s640 = scalar_select %p639, %s638, 27
        %s641 = smul.u32 112, %s640
        %s642 = smul.u32 27, %s15
        %s643 = ssub.s32 53, %s642
        %p644 = scmp.lt.s32.totalorder %s643, 27
        %s645 = scalar_select %p644, %s643, 27
        %v646 = vld [vmem:[%s617] sm:$0xff]
        %v647 = vld [vmem:[%s617 + $0x8] sm:$0xff]
        %v648 = vld [vmem:[%s617 + $0x10] sm:$0xff]
        %v649 = vld [vmem:[%s617 + $0x18] sm:$0xff]
        %v650 = vld [vmem:[%s617 + $0x20] sm:$0xff]
        %v651 = vld [vmem:[%s617 + $0x28] sm:$0xff]
        %v652 = vld [vmem:[%s617 + $0x30] sm:$0xff]
        %v653 = vld [vmem:[%s617 + $0x38] sm:$0xff]
        %v654 = vld [vmem:[%s617 + $0x40] sm:$0xff]
        %v655 = vld [vmem:[%s617 + $0x48] sm:$0xff]
        %v656 = vld [vmem:[%s617 + $0x50] sm:$0xff]
        %v657 = vld [vmem:[%s617 + $0x58] sm:$0xff]
        %v658 = vld [vmem:[%s617 + $0x60] sm:$0xff]
        %v659 = vld [vmem:[%s617 + $0x68] sm:$0xff]
        %v660 = vld [vmem:[%s617 + $0x70] sm:$0xff]
        %v661 = vld [vmem:[%s617 + $0x78] sm:$0xff]
        %v662 = vld [vmem:[%s617 + $0x80] sm:$0xff]
        %v663 = vld [vmem:[%s617 + $0x88] sm:$0xff]
        %v664 = vld [vmem:[%s617 + $0x90] sm:$0xff]
        %v665 = vld [vmem:[%s617 + $0x98] sm:$0xff]
        %v666 = vld [vmem:[%s617 + $0xa0] sm:$0xff]
        %v667 = vld [vmem:[%s617 + $0xa8] sm:$0xff]
        %v668 = vld [vmem:[%s617 + $0xb0] sm:$0xff]
        %v669 = vld [vmem:[%s617 + $0xb8] sm:$0xff]
        %v670 = vld [vmem:[%s617 + $0xc0] sm:$0xff]
        %v671 = vld [vmem:[%s617 + $0xc8] sm:$0xff]
        %v672 = vld [vmem:[%s617 + $0xd0] sm:$0xff]
        %v673 = vld [vmem:[%s617 + $0xd8] sm:$0xff]
        %v674 = vld [vmem:[%s617 + $0xe0] sm:$0xff]
        %v675 = vld [vmem:[%s617 + $0xe8] sm:$0xff]
        %v676 = vld [vmem:[%s617 + $0xf0] sm:$0xff]
        %v677 = vld [vmem:[%s617 + $0xf8] sm:$0xff]
        %v678 = vld [vmem:[%s617 + $0x100] sm:$0xff]
        %v679 = vld [vmem:[%s617 + $0x108] sm:$0xff]
        %v680 = vld [vmem:[%s617 + $0x110] sm:$0xff]
        %v681 = vld [vmem:[%s617 + $0x118] sm:$0xff]
        %v682 = vld [vmem:[%s617 + $0x120] sm:$0xff]
        %v683 = vld [vmem:[%s617 + $0x128] sm:$0xff]
        %v684 = vld [vmem:[%s617 + $0x130] sm:$0xff]
        %v685 = vld [vmem:[%s617 + $0x138] sm:$0xff]
        %v686 = vld [vmem:[%s617 + $0x140] sm:$0xff]
        %v687 = vld [vmem:[%s617 + $0x148] sm:$0xff]
        %v688 = vld [vmem:[%s617 + $0x150] sm:$0xff]
        %v689 = vld [vmem:[%s617 + $0x158] sm:$0xff]
        %v690 = vld [vmem:[%s617 + $0x160] sm:$0xff]
        %v691 = vld [vmem:[%s617 + $0x168] sm:$0xff]
        %v692 = vld [vmem:[%s617 + $0x170] sm:$0xff]
        %v693 = vld [vmem:[%s617 + $0x178] sm:$0xff]
        %v694 = vld [vmem:[%s617 + $0x180] sm:$0xff]
        %v695 = vld [vmem:[%s617 + $0x188] sm:$0xff]
        %v696 = vld [vmem:[%s617 + $0x190] sm:$0xff]
        %v697 = vld [vmem:[%s617 + $0x198] sm:$0xff]
        %v698 = vld [vmem:[%s617 + $0x1a0] sm:$0xff]
        %v699 = vld [vmem:[%s617 + $0x1a8] sm:$0xff]
        %v700 = vld [vmem:[%s617 + $0x1b0] sm:$0xff]
        %v701 = vld [vmem:[%s617 + $0x1b8] sm:$0xff]
        %v702 = vld [vmem:[%s617 + $0x1c0] sm:$0xff]
        %v703 = vld [vmem:[%s617 + $0x1c8] sm:$0xff]
        %v704 = vld [vmem:[%s617 + $0x1d0] sm:$0xff]
        %v705 = vld [vmem:[%s617 + $0x1d8] sm:$0xff]
        %v706 = vld [vmem:[%s617 + $0x1e0] sm:$0xff]
        %v707 = vld [vmem:[%s617 + $0x1e8] sm:$0xff]
        %v708 = vld [vmem:[%s617 + $0x1f0] sm:$0xff]
        %v709 = vld [vmem:[%s617 + $0x1f8] sm:$0xff]
        %v710 = vld [vmem:[%s617 + $0x200] sm:$0xff]
        %v711 = vld [vmem:[%s617 + $0x208] sm:$0xff]
        %v712 = vld [vmem:[%s617 + $0x210] sm:$0xff]
        %v713 = vld [vmem:[%s617 + $0x218] sm:$0xff]
        %v714 = vld [vmem:[%s617 + $0x220] sm:$0xff]
        %v715 = vld [vmem:[%s617 + $0x228] sm:$0xff]
        %v716 = vld [vmem:[%s617 + $0x230] sm:$0xff]
        %v717 = vld [vmem:[%s617 + $0x238] sm:$0xff]
        %v718 = vld [vmem:[%s617 + $0x240] sm:$0xff]
        %v719 = vld [vmem:[%s617 + $0x248] sm:$0xff]
        %v720 = vld [vmem:[%s617 + $0x250] sm:$0xff]
        %v721 = vld [vmem:[%s617 + $0x258] sm:$0xff]
        %v722 = vld [vmem:[%s617 + $0x260] sm:$0xff]
        %v723 = vld [vmem:[%s617 + $0x268] sm:$0xff]
        %v724 = vld [vmem:[%s617 + $0x270] sm:$0xff]
        %v725 = vld [vmem:[%s617 + $0x278] sm:$0xff]
        %v726 = vld [vmem:[%s617 + $0x280] sm:$0xff]
        %v727 = vld [vmem:[%s617 + $0x288] sm:$0xff]
        %v728 = vld [vmem:[%s617 + $0x290] sm:$0xff]
        %v729 = vld [vmem:[%s617 + $0x298] sm:$0xff]
        %v730 = vld [vmem:[%s617 + $0x2a0] sm:$0xff]
        %v731 = vld [vmem:[%s617 + $0x2a8] sm:$0xff]
        %v732 = vld [vmem:[%s617 + $0x2b0] sm:$0xff]
        %v733 = vld [vmem:[%s617 + $0x2b8] sm:$0xff]
        %v734 = vld [vmem:[%s617 + $0x2c0] sm:$0xff]
        %v735 = vld [vmem:[%s617 + $0x2c8] sm:$0xff]
        %v736 = vld [vmem:[%s617 + $0x2d0] sm:$0xff]
        %v737 = vld [vmem:[%s617 + $0x2d8] sm:$0xff]
        %v738 = vld [vmem:[%s617 + $0x2e0] sm:$0xff]
        %v739 = vld [vmem:[%s617 + $0x2e8] sm:$0xff]
        %v740 = vld [vmem:[%s617 + $0x2f0] sm:$0xff]
        %v741 = vld [vmem:[%s617 + $0x2f8] sm:$0xff]
        %v742 = vld [vmem:[%s617 + $0x300] sm:$0xff]
        %v743 = vld [vmem:[%s617 + $0x308] sm:$0xff]
        %v744 = vld [vmem:[%s617 + $0x310] sm:$0xff]
        %v745 = vld [vmem:[%s617 + $0x318] sm:$0xff]
        %v746 = vld [vmem:[%s617 + $0x320] sm:$0xff]
        %v747 = vld [vmem:[%s617 + $0x328] sm:$0xff]
        %v748 = vld [vmem:[%s617 + $0x330] sm:$0xff]
        %v749 = vld [vmem:[%s617 + $0x338] sm:$0xff]
        %v750 = vld [vmem:[%s617 + $0x340] sm:$0xff]
        %v751 = vld [vmem:[%s617 + $0x348] sm:$0xff]
        %v752 = vld [vmem:[%s617 + $0x350] sm:$0xff]
        %v753 = vld [vmem:[%s617 + $0x358] sm:$0xff]
        %v754 = vld [vmem:[%s617 + $0x360] sm:$0xff]
        %v755 = vld [vmem:[%s617 + $0x368] sm:$0xff]
        %v756 = vld [vmem:[%s617 + $0x370] sm:$0xff]
        %v757 = vld [vmem:[%s617 + $0x378] sm:$0xff]
        %v758 = vld [vmem:[%s617 + $0x380] sm:$0xff]
        %v759 = vld [vmem:[%s617 + $0x388] sm:$0xff]
        %v760 = vld [vmem:[%s617 + $0x390] sm:$0xff]
        %v761 = vld [vmem:[%s617 + $0x398] sm:$0xff]
        %v762 = vld [vmem:[%s617 + $0x3a0] sm:$0xff]
        %v763 = vld [vmem:[%s617 + $0x3a8] sm:$0xff]
        %v764 = vld [vmem:[%s617 + $0x3b0] sm:$0xff]
        %v765 = vld [vmem:[%s617 + $0x3b8] sm:$0xff]
        %v766 = vld [vmem:[%s617 + $0x3c0] sm:$0xff]
        %v767 = vld [vmem:[%s617 + $0x3c8] sm:$0xff]
        %v768 = vld [vmem:[%s617 + $0x3d0] sm:$0xff]
        %v769 = vld [vmem:[%s617 + $0x3d8] sm:$0xff]
        %v770 = vld [vmem:[%s617 + $0x3e0] sm:$0xff]
        %v771 = vld [vmem:[%s617 + $0x3e8] sm:$0xff]
        %v772 = vld [vmem:[%s617 + $0x3f0] sm:$0xff]
        %v773 = vld [vmem:[%s617 + $0x3f8] sm:$0xff]
        %v774 = vld [vmem:[%s617 + $0x400] sm:$0xff]
        %v775 = vld [vmem:[%s617 + $0x408] sm:$0xff]
        %v776 = vld [vmem:[%s617 + $0x410] sm:$0xff]
        %v777 = vld [vmem:[%s617 + $0x418] sm:$0xff]
        %v778 = vld [vmem:[%s617 + $0x420] sm:$0xff]
        %v779 = vld [vmem:[%s617 + $0x428] sm:$0xff]
        %v780 = vld [vmem:[%s617 + $0x430] sm:$0xff]
        %v781 = vld [vmem:[%s617 + $0x438] sm:$0xff]
        %v782 = vld [vmem:[%s617 + $0x440] sm:$0xff]
        %v783 = vld [vmem:[%s617 + $0x448] sm:$0xff]
        %v784 = vld [vmem:[%s617 + $0x450] sm:$0xff]
        %v785 = vld [vmem:[%s617 + $0x458] sm:$0xff]
        %v786 = vld [vmem:[%s617 + $0x460] sm:$0xff]
        %v787 = vld [vmem:[%s617 + $0x468] sm:$0xff]
        %v788 = vld [vmem:[%s617 + $0x470] sm:$0xff]
        %v789 = vld [vmem:[%s617 + $0x478] sm:$0xff]
        %v790 = vld [vmem:[%s617 + $0x480] sm:$0xff]
        %v791 = vld [vmem:[%s617 + $0x488] sm:$0xff]
        %v792 = vld [vmem:[%s617 + $0x490] sm:$0xff]
        %v793 = vld [vmem:[%s617 + $0x498] sm:$0xff]
        %v794 = vld [vmem:[%s617 + $0x4a0] sm:$0xff]
        %v795 = vld [vmem:[%s617 + $0x4a8] sm:$0xff]
        %v796 = vld [vmem:[%s617 + $0x4b0] sm:$0xff]
        %v797 = vld [vmem:[%s617 + $0x4b8] sm:$0xff]
        %v798 = vld [vmem:[%s617 + $0x4c0] sm:$0xff]
        %v799 = vld [vmem:[%s617 + $0x4c8] sm:$0xff]
        %v800 = vld [vmem:[%s617 + $0x4d0] sm:$0xff]
        %v801 = vld [vmem:[%s617 + $0x4d8] sm:$0xff]
        %v802 = vld [vmem:[%s617 + $0x4e0] sm:$0xff]
        %v803 = vld [vmem:[%s617 + $0x4e8] sm:$0xff]
        %v804 = vld [vmem:[%s617 + $0x4f0] sm:$0xff]
        %v805 = vld [vmem:[%s617 + $0x4f8] sm:$0xff]
        %v806 = vld [vmem:[%s617 + $0x500] sm:$0xff]
        %v807 = vld [vmem:[%s617 + $0x508] sm:$0xff]
        %v808 = vld [vmem:[%s617 + $0x510] sm:$0xff]
        %v809 = vld [vmem:[%s617 + $0x518] sm:$0xff]
        %v810 = vld [vmem:[%s617 + $0x520] sm:$0xff]
        %v811 = vld [vmem:[%s617 + $0x528] sm:$0xff]
        %v812 = vld [vmem:[%s617 + $0x530] sm:$0xff]
        %v813 = vld [vmem:[%s617 + $0x538] sm:$0xff]
        %v814 = vld [vmem:[%s617 + $0x540] sm:$0xff]
        %v815 = vld [vmem:[%s617 + $0x548] sm:$0xff]
        %v816 = vld [vmem:[%s617 + $0x550] sm:$0xff]
        %v817 = vld [vmem:[%s617 + $0x558] sm:$0xff]
        %v818 = vld [vmem:[%s617 + $0x560] sm:$0xff]
        %v819 = vld [vmem:[%s617 + $0x568] sm:$0xff]
        %v820 = vld [vmem:[%s617 + $0x570] sm:$0xff]
        %v821 = vld [vmem:[%s617 + $0x578] sm:$0xff]
        %v822 = vld [vmem:[%s617 + $0x580] sm:$0xff]
        %v823 = vld [vmem:[%s617 + $0x588] sm:$0xff]
        %v824 = vld [vmem:[%s617 + $0x590] sm:$0xff]
        %v825 = vld [vmem:[%s617 + $0x598] sm:$0xff]
        %v826 = vld [vmem:[%s617 + $0x5a0] sm:$0xff]
        %v827 = vld [vmem:[%s617 + $0x5a8] sm:$0xff]
        %v828 = vld [vmem:[%s617 + $0x5b0] sm:$0xff]
        %v829 = vld [vmem:[%s617 + $0x5b8] sm:$0xff]
        %v830 = vld [vmem:[%s617 + $0x5c0] sm:$0xff]
        %v831 = vld [vmem:[%s617 + $0x5c8] sm:$0xff]
        %v832 = vld [vmem:[%s617 + $0x5d0] sm:$0xff]
        %v833 = vld [vmem:[%s617 + $0x5d8] sm:$0xff]
        %v834 = vld [vmem:[%s617 + $0x5e0] sm:$0xff]
        %v835 = vld [vmem:[%s617 + $0x5e8] sm:$0xff]
        %v836 = vld [vmem:[%s617 + $0x5f0] sm:$0xff]
        %v837 = vld [vmem:[%s617 + $0x5f8] sm:$0xff]
        %v838 = vld [vmem:[%s617 + $0x600] sm:$0xff]
        %v839 = vld [vmem:[%s617 + $0x608] sm:$0xff]
        %v840 = vld [vmem:[%s617 + $0x610] sm:$0xff]
        %v841 = vld [vmem:[%s617 + $0x618] sm:$0xff]
        %v842 = vld [vmem:[%s617 + $0x620] sm:$0xff]
        %v843 = vld [vmem:[%s617 + $0x628] sm:$0xff]
        %v844 = vld [vmem:[%s617 + $0x630] sm:$0xff]
        %v845 = vld [vmem:[%s617 + $0x638] sm:$0xff]
        %v846 = vld [vmem:[%s617 + $0x640] sm:$0xff]
        %v847 = vld [vmem:[%s617 + $0x648] sm:$0xff]
        %v848 = vld [vmem:[%s617 + $0x650] sm:$0xff]
        %v849 = vld [vmem:[%s617 + $0x658] sm:$0xff]
        %v850 = vld [vmem:[%s617 + $0x660] sm:$0xff]
        %v851 = vld [vmem:[%s617 + $0x668] sm:$0xff]
        %v852 = vld [vmem:[%s617 + $0x670] sm:$0xff]
        %v853 = vld [vmem:[%s617 + $0x678] sm:$0xff]
        %v854 = vld [vmem:[%s617 + $0x680] sm:$0xff]
        %v855 = vld [vmem:[%s617 + $0x688] sm:$0xff]
        %v856 = vld [vmem:[%s617 + $0x690] sm:$0xff]
        %v857 = vld [vmem:[%s617 + $0x698] sm:$0xff]
        %v858 = vld [vmem:[%s617 + $0x6a0] sm:$0xff]
        %v859 = vld [vmem:[%s617 + $0x6a8] sm:$0xff]
        %v860 = vld [vmem:[%s617 + $0x6b0] sm:$0xff]
        %v861 = vld [vmem:[%s617 + $0x6b8] sm:$0xff]
        %v862 = vld [vmem:[%s617 + $0x6c0] sm:$0xff]
        %v863 = vld [vmem:[%s617 + $0x6c8] sm:$0xff]
        %v864 = vld [vmem:[%s617 + $0x6d0] sm:$0xff]
        %v865 = vld [vmem:[%s617 + $0x6d8] sm:$0xff]
        %v866 = vld [vmem:[%s617 + $0x6e0] sm:$0xff]
        %v867 = vld [vmem:[%s617 + $0x6e8] sm:$0xff]
        %v868 = vld [vmem:[%s617 + $0x6f0] sm:$0xff]
        %v869 = vld [vmem:[%s617 + $0x6f8] sm:$0xff]
        %v870 = vld [vmem:[%s617 + $0x700] sm:$0xff]
        %v871 = vld [vmem:[%s617 + $0x708] sm:$0xff]
        %v872 = vld [vmem:[%s617 + $0x710] sm:$0xff]
        %v873 = vld [vmem:[%s617 + $0x718] sm:$0xff]
        %v874 = vld [vmem:[%s617 + $0x720] sm:$0xff]
        %v875 = vld [vmem:[%s617 + $0x728] sm:$0xff]
        %v876 = vld [vmem:[%s617 + $0x730] sm:$0xff]
        %v877 = vld [vmem:[%s617 + $0x738] sm:$0xff]
        %v878 = vld [vmem:[%s617 + $0x740] sm:$0xff]
        %v879 = vld [vmem:[%s617 + $0x748] sm:$0xff]
        %v880 = vld [vmem:[%s617 + $0x750] sm:$0xff]
        %v881 = vld [vmem:[%s617 + $0x758] sm:$0xff]
        %v882 = vld [vmem:[%s617 + $0x760] sm:$0xff]
        %v883 = vld [vmem:[%s617 + $0x768] sm:$0xff]
        %v884 = vld [vmem:[%s617 + $0x770] sm:$0xff]
        %v885 = vld [vmem:[%s617 + $0x778] sm:$0xff]
        %v886 = vld [vmem:[%s617 + $0x780] sm:$0xff]
        %v887 = vld [vmem:[%s617 + $0x788] sm:$0xff]
        %v888 = vld [vmem:[%s617 + $0x790] sm:$0xff]
        %v889 = vld [vmem:[%s617 + $0x798] sm:$0xff]
        %v890 = vld [vmem:[%s617 + $0x7a0] sm:$0xff]
        %v891 = vld [vmem:[%s617 + $0x7a8] sm:$0xff]
        %v892 = vld [vmem:[%s617 + $0x7b0] sm:$0xff]
        %v893 = vld [vmem:[%s617 + $0x7b8] sm:$0xff]
        %v894 = vld [vmem:[%s617 + $0x7c0] sm:$0xff]
        %v895 = vld [vmem:[%s617 + $0x7c8] sm:$0xff]
        %v896 = vld [vmem:[%s617 + $0x7d0] sm:$0xff]
        %v897 = vld [vmem:[%s617 + $0x7d8] sm:$0xff]
        %v898 = vld [vmem:[%s617 + $0x7e0] sm:$0xff]
        %v899 = vld [vmem:[%s617 + $0x7e8] sm:$0xff]
        %v900 = vld [vmem:[%s617 + $0x7f0] sm:$0xff]
        %v901 = vld [vmem:[%s617 + $0x7f8] sm:$0xff]
        %v902 = vld [vmem:[%s617 + $0x800] sm:$0xff]
        %v903 = vld [vmem:[%s617 + $0x808] sm:$0xff]
        %v904 = vld [vmem:[%s617 + $0x810] sm:$0xff]
        %v905 = vld [vmem:[%s617 + $0x818] sm:$0xff]
        %v906 = vld [vmem:[%s617 + $0x820] sm:$0xff]
        %v907 = vld [vmem:[%s617 + $0x828] sm:$0xff]
        %v908 = vld [vmem:[%s617 + $0x830] sm:$0xff]
        %v909 = vld [vmem:[%s617 + $0x838] sm:$0xff]
        %v910 = vld [vmem:[%s617 + $0x840] sm:$0xff]
        %v911 = vld [vmem:[%s617 + $0x848] sm:$0xff]
        %v912 = vld [vmem:[%s617 + $0x850] sm:$0xff]
        %v913 = vld [vmem:[%s617 + $0x858] sm:$0xff]
        %v914 = vld [vmem:[%s617 + $0x860] sm:$0xff]
        %v915 = vld [vmem:[%s617 + $0x868] sm:$0xff]
        %v916 = vld [vmem:[%s617 + $0x870] sm:$0xff]
        %v917 = vld [vmem:[%s617 + $0x878] sm:$0xff]
        %v918 = vld [vmem:[%s617 + $0x880] sm:$0xff]
        %v919 = vld [vmem:[%s617 + $0x888] sm:$0xff]
        %v920 = vld [vmem:[%s617 + $0x890] sm:$0xff]
        %v921 = vld [vmem:[%s617 + $0x898] sm:$0xff]
        %v922 = vld [vmem:[%s617 + $0x8a0] sm:$0xff]
        %v923 = vld [vmem:[%s617 + $0x8a8] sm:$0xff]
        %v924 = vld [vmem:[%s617 + $0x8b0] sm:$0xff]
        %v925 = vld [vmem:[%s617 + $0x8b8] sm:$0xff]
        %v926 = vld [vmem:[%s617 + $0x8c0] sm:$0xff]
        %v927 = vld [vmem:[%s617 + $0x8c8] sm:$0xff]
        %v928 = vld [vmem:[%s617 + $0x8d0] sm:$0xff]
        %v929 = vld [vmem:[%s617 + $0x8d8] sm:$0xff]
        %v930 = vld [vmem:[%s617 + $0x8e0] sm:$0xff]
        %v931 = vld [vmem:[%s617 + $0x8e8] sm:$0xff]
        %v932 = vld [vmem:[%s617 + $0x8f0] sm:$0xff]
        %v933 = vld [vmem:[%s617 + $0x8f8] sm:$0xff]
        %v934 = vld [vmem:[%s617 + $0x900] sm:$0xff]
        %v935 = vld [vmem:[%s617 + $0x908] sm:$0xff]
        %v936 = vld [vmem:[%s617 + $0x910] sm:$0xff]
        %v937 = vld [vmem:[%s617 + $0x918] sm:$0xff]
        %v938 = vld [vmem:[%s617 + $0x920] sm:$0xff]
        %v939 = vld [vmem:[%s617 + $0x928] sm:$0xff]
        %v940 = vld [vmem:[%s617 + $0x930] sm:$0xff]
        %v941 = vld [vmem:[%s617 + $0x938] sm:$0xff]
        %v942 = vld [vmem:[%s617 + $0x940] sm:$0xff]
        %v943 = vld [vmem:[%s617 + $0x948] sm:$0xff]
        %v944 = vld [vmem:[%s617 + $0x950] sm:$0xff]
        %v945 = vld [vmem:[%s617 + $0x958] sm:$0xff]
        %v946 = vld [vmem:[%s617 + $0x960] sm:$0xff]
        %v947 = vld [vmem:[%s617 + $0x968] sm:$0xff]
        %v948 = vld [vmem:[%s617 + $0x970] sm:$0xff]
        %v949 = vld [vmem:[%s617 + $0x978] sm:$0xff]
        %v950 = vld [vmem:[%s617 + $0x980] sm:$0xff]
        %v951 = vld [vmem:[%s617 + $0x988] sm:$0xff]
        %v952 = vld [vmem:[%s617 + $0x990] sm:$0xff]
        %v953 = vld [vmem:[%s617 + $0x998] sm:$0xff]
        %v954 = vld [vmem:[%s617 + $0x9a0] sm:$0xff]
        %v955 = vld [vmem:[%s617 + $0x9a8] sm:$0xff]
        %v956 = vld [vmem:[%s617 + $0x9b0] sm:$0xff]
        %v957 = vld [vmem:[%s617 + $0x9b8] sm:$0xff]
        %v958 = vld [vmem:[%s617 + $0x9c0] sm:$0xff]
        %v959 = vld [vmem:[%s617 + $0x9c8] sm:$0xff]
        %v960 = vld [vmem:[%s617 + $0x9d0] sm:$0xff]
        %v961 = vld [vmem:[%s617 + $0x9d8] sm:$0xff]
        %v962 = vld [vmem:[%s617 + $0x9e0] sm:$0xff]
        %v963 = vld [vmem:[%s617 + $0x9e8] sm:$0xff]
        %v964 = vld [vmem:[%s617 + $0x9f0] sm:$0xff]
        %v965 = vld [vmem:[%s617 + $0x9f8] sm:$0xff]
        %v966 = vld [vmem:[%s617 + $0xa00] sm:$0xff]
        %v967 = vld [vmem:[%s617 + $0xa08] sm:$0xff]
        %v968 = vld [vmem:[%s617 + $0xa10] sm:$0xff]
        %v969 = vld [vmem:[%s617 + $0xa18] sm:$0xff]
        %v970 = vld [vmem:[%s617 + $0xa20] sm:$0xff]
        %v971 = vld [vmem:[%s617 + $0xa28] sm:$0xff]
        %v972 = vld [vmem:[%s617 + $0xa30] sm:$0xff]
        %v973 = vld [vmem:[%s617 + $0xa38] sm:$0xff]
        %v974 = vld [vmem:[%s617 + $0xa40] sm:$0xff]
        %v975 = vld [vmem:[%s617 + $0xa48] sm:$0xff]
        %v976 = vld [vmem:[%s617 + $0xa50] sm:$0xff]
        %v977 = vld [vmem:[%s617 + $0xa58] sm:$0xff]
        %v978 = vld [vmem:[%s617 + $0xa60] sm:$0xff]
        %v979 = vld [vmem:[%s617 + $0xa68] sm:$0xff]
        %v980 = vld [vmem:[%s617 + $0xa70] sm:$0xff]
        %v981 = vld [vmem:[%s617 + $0xa78] sm:$0xff]
        %v982 = vld [vmem:[%s617 + $0xa80] sm:$0xff]
        %v983 = vld [vmem:[%s617 + $0xa88] sm:$0xff]
        %v984 = vld [vmem:[%s617 + $0xa90] sm:$0xff]
        %v985 = vld [vmem:[%s617 + $0xa98] sm:$0xff]
        %v986 = vld [vmem:[%s617 + $0xaa0] sm:$0xff]
        %v987 = vld [vmem:[%s617 + $0xaa8] sm:$0xff]
        %v988 = vld [vmem:[%s617 + $0xab0] sm:$0xff]
        %v989 = vld [vmem:[%s617 + $0xab8] sm:$0xff]
        %v990 = vld [vmem:[%s617 + $0xac0] sm:$0xff]
        %v991 = vld [vmem:[%s617 + $0xac8] sm:$0xff]
        %v992 = vld [vmem:[%s617 + $0xad0] sm:$0xff]
        %v993 = vld [vmem:[%s617 + $0xad8] sm:$0xff]
        %v994 = vld [vmem:[%s617 + $0xae0] sm:$0xff]
        %v995 = vld [vmem:[%s617 + $0xae8] sm:$0xff]
        %v996 = vld [vmem:[%s617 + $0xaf0] sm:$0xff]
        %v997 = vld [vmem:[%s617 + $0xaf8] sm:$0xf]
        %v998 = vld [vmem:[%s617 + $0xb00] sm:$0xf]
        %v999 = vld [vmem:[%s617 + $0xb08] sm:$0xf]
        %v1000 = vld [vmem:[%s617 + $0xb10] sm:$0xf]
        %v1001 = vld [vmem:[%s617 + $0xb18] sm:$0xf]
        %v1002 = vld [vmem:[%s617 + $0xb20] sm:$0xf]
        %v1003 = vld [vmem:[%s617 + $0xb28] sm:$0xf]
        %v1004 = vld [vmem:[%s617 + $0xb30] sm:$0xf]
        %v1005 = vld [vmem:[%s617 + $0xb38] sm:$0xf]
        %v1006 = vld [vmem:[%s617 + $0xb40] sm:$0xf]
        %v1007 = vld [vmem:[%s617 + $0xb48] sm:$0xf]
        %v1008 = vld [vmem:[%s617 + $0xb50] sm:$0xf]
        %v1009 = vld [vmem:[%s617 + $0xb58] sm:$0xf]
        %v1010 = vld [vmem:[%s617 + $0xb60] sm:$0xf]
        %v1011 = vld [vmem:[%s617 + $0xb68] sm:$0xf]
        %v1012 = vld [vmem:[%s617 + $0xb70] sm:$0xf]
        %v1013 = vld [vmem:[%s617 + $0xb78] sm:$0xf]
        %v1014 = vld [vmem:[%s617 + $0xb80] sm:$0xf]
        %v1015 = vld [vmem:[%s617 + $0xb88] sm:$0xf]
        %v1016 = vld [vmem:[%s617 + $0xb90] sm:$0xf]
        %v1017 = vld [vmem:[%s617 + $0xb98] sm:$0xf]
        %v1018 = vld [vmem:[%s617 + $0xba0] sm:$0xf]
        %v1019 = vld [vmem:[%s617 + $0xba8] sm:$0xf]
        %v1020 = vld [vmem:[%s617 + $0xbb0] sm:$0xf]
        %v1021 = vld [vmem:[%s617 + $0xbb8] sm:$0xf]
        %v1022 = vld [vmem:[%s617 + $0xbc0] sm:$0xf]
        %v1023 = vld [vmem:[%s617 + $0xbc8] sm:$0xf]
        %v1024 = vld [vmem:[%s1] sm:$0xff]
        %v1025 = vld [vmem:[%s1 + $0x8] sm:$0xff]
        %v1026 = vld [vmem:[%s1 + $0x10] sm:$0xff]
        %v1027 = vld [vmem:[%s1 + $0x18] sm:$0xff]
        %v1028 = vld [vmem:[%s1 + $0x20] sm:$0xff]
        %v1029 = vld [vmem:[%s1 + $0x28] sm:$0xff]
        %v1030 = vld [vmem:[%s1 + $0x30] sm:$0xff]
        %v1031 = vld [vmem:[%s1 + $0x38] sm:$0xff]
        %v1032 = vld [vmem:[%s1 + $0x40] sm:$0xff]
        %v1033 = vld [vmem:[%s1 + $0x48] sm:$0xff]
        %v1034 = vld [vmem:[%s1 + $0x50] sm:$0xff]
        %v1035 = vld [vmem:[%s1 + $0x58] sm:$0xff]
        %v1036 = vld [vmem:[%s1 + $0x60] sm:$0xff]
        %v1037 = vld [vmem:[%s1 + $0x68] sm:$0xf]
        %1039 = vset.pattern.permute.xlu0 0
        %1040 = vperm.xlu0 %1039, %v1024
        %v1041 = vpop.permute.xlu0 %1040
        %1044 = vset.pattern.permute.xlu0 0
        %1045 = vperm.xlu0 %1044, %v1025
        %v1046 = vpop.permute.xlu0 %1045
        %1049 = vset.pattern.permute.xlu0 0
        %1050 = vperm.xlu0 %1049, %v1026
        %v1051 = vpop.permute.xlu0 %1050
        %1054 = vset.pattern.permute.xlu0 0
        %1055 = vperm.xlu0 %1054, %v1027
        %v1056 = vpop.permute.xlu0 %1055
        %1059 = vset.pattern.permute.xlu0 0
        %1060 = vperm.xlu0 %1059, %v1028
        %v1061 = vpop.permute.xlu0 %1060
        %1064 = vset.pattern.permute.xlu0 0
        %1065 = vperm.xlu0 %1064, %v1029
        %v1066 = vpop.permute.xlu0 %1065
        %1069 = vset.pattern.permute.xlu0 0
        %1070 = vperm.xlu0 %1069, %v1030
        %v1071 = vpop.permute.xlu0 %1070
        %1074 = vset.pattern.permute.xlu0 0
        %1075 = vperm.xlu0 %1074, %v1031
        %v1076 = vpop.permute.xlu0 %1075
        %1079 = vset.pattern.permute.xlu0 0
        %1080 = vperm.xlu0 %1079, %v1032
        %v1081 = vpop.permute.xlu0 %1080
        %1084 = vset.pattern.permute.xlu0 0
        %1085 = vperm.xlu0 %1084, %v1033
        %v1086 = vpop.permute.xlu0 %1085
        %1089 = vset.pattern.permute.xlu0 0
        %1090 = vperm.xlu0 %1089, %v1034
        %v1091 = vpop.permute.xlu0 %1090
        %1094 = vset.pattern.permute.xlu0 0
        %1095 = vperm.xlu0 %1094, %v1035
        %v1096 = vpop.permute.xlu0 %1095
        %1099 = vset.pattern.permute.xlu0 0
        %1100 = vperm.xlu0 %1099, %v1036
        %v1101 = vpop.permute.xlu0 %1100
        %1104 = vset.pattern.permute.xlu0 0
        %1105 = vperm.xlu0 %1104, %v1037
        %v1106 = vpop.permute.xlu0 %1105
        %v1108 = vmul.f32 %v646, %v1041
        %v1109 = vmul.f32 %v647, %v1041
        %v1110 = vmul.f32 %v648, %v1041
        %v1111 = vmul.f32 %v649, %v1041
        %v1112 = vmul.f32 %v650, %v1041
        %v1113 = vmul.f32 %v651, %v1041
        %v1114 = vmul.f32 %v652, %v1041
        %v1115 = vmul.f32 %v653, %v1041
        %v1116 = vmul.f32 %v654, %v1041
        %v1117 = vmul.f32 %v655, %v1041
        %v1118 = vmul.f32 %v656, %v1041
        %v1119 = vmul.f32 %v657, %v1041
        %v1120 = vmul.f32 %v658, %v1041
        %v1121 = vmul.f32 %v659, %v1041
        %v1122 = vmul.f32 %v660, %v1041
        %v1123 = vmul.f32 %v661, %v1041
        %v1124 = vmul.f32 %v662, %v1041
        %v1125 = vmul.f32 %v663, %v1041
        %v1126 = vmul.f32 %v664, %v1041
        %v1127 = vmul.f32 %v665, %v1041
        %v1128 = vmul.f32 %v666, %v1041
        %v1129 = vmul.f32 %v667, %v1041
        %v1130 = vmul.f32 %v668, %v1041
        %v1131 = vmul.f32 %v669, %v1041
        %v1132 = vmul.f32 %v670, %v1041
        %v1133 = vmul.f32 %v671, %v1041
        %v1134 = vmul.f32 %v672, %v1041
        %v1135 = vmul.f32 %v673, %v1046
        %v1136 = vmul.f32 %v674, %v1046
        %v1137 = vmul.f32 %v675, %v1046
        %v1138 = vmul.f32 %v676, %v1046
        %v1139 = vmul.f32 %v677, %v1046
        %v1140 = vmul.f32 %v678, %v1046
        %v1141 = vmul.f32 %v679, %v1046
        %v1142 = vmul.f32 %v680, %v1046
        %v1143 = vmul.f32 %v681, %v1046
        %v1144 = vmul.f32 %v682, %v1046
        %v1145 = vmul.f32 %v683, %v1046
        %v1146 = vmul.f32 %v684, %v1046
        %v1147 = vmul.f32 %v685, %v1046
        %v1148 = vmul.f32 %v686, %v1046
        %v1149 = vmul.f32 %v687, %v1046
        %v1150 = vmul.f32 %v688, %v1046
        %v1151 = vmul.f32 %v689, %v1046
        %v1152 = vmul.f32 %v690, %v1046
        %v1153 = vmul.f32 %v691, %v1046
        %v1154 = vmul.f32 %v692, %v1046
        %v1155 = vmul.f32 %v693, %v1046
        %v1156 = vmul.f32 %v694, %v1046
        %v1157 = vmul.f32 %v695, %v1046
        %v1158 = vmul.f32 %v696, %v1046
        %v1159 = vmul.f32 %v697, %v1046
        %v1160 = vmul.f32 %v698, %v1046
        %v1161 = vmul.f32 %v699, %v1046
        %v1162 = vmul.f32 %v700, %v1051
        %v1163 = vmul.f32 %v701, %v1051
        %v1164 = vmul.f32 %v702, %v1051
        %v1165 = vmul.f32 %v703, %v1051
        %v1166 = vmul.f32 %v704, %v1051
        %v1167 = vmul.f32 %v705, %v1051
        %v1168 = vmul.f32 %v706, %v1051
        %v1169 = vmul.f32 %v707, %v1051
        %v1170 = vmul.f32 %v708, %v1051
        %v1171 = vmul.f32 %v709, %v1051
        %v1172 = vmul.f32 %v710, %v1051
        %v1173 = vmul.f32 %v711, %v1051
        %v1174 = vmul.f32 %v712, %v1051
        %v1175 = vmul.f32 %v713, %v1051
        %v1176 = vmul.f32 %v714, %v1051
        %v1177 = vmul.f32 %v715, %v1051
        %v1178 = vmul.f32 %v716, %v1051
        %v1179 = vmul.f32 %v717, %v1051
        %v1180 = vmul.f32 %v718, %v1051
        %v1181 = vmul.f32 %v719, %v1051
        %v1182 = vmul.f32 %v720, %v1051
        %v1183 = vmul.f32 %v721, %v1051
        %v1184 = vmul.f32 %v722, %v1051
        %v1185 = vmul.f32 %v723, %v1051
        %v1186 = vmul.f32 %v724, %v1051
        %v1187 = vmul.f32 %v725, %v1051
        %v1188 = vmul.f32 %v726, %v1051
        %v1189 = vmul.f32 %v727, %v1056
        %v1190 = vmul.f32 %v728, %v1056
        %v1191 = vmul.f32 %v729, %v1056
        %v1192 = vmul.f32 %v730, %v1056
        %v1193 = vmul.f32 %v731, %v1056
        %v1194 = vmul.f32 %v732, %v1056
        %v1195 = vmul.f32 %v733, %v1056
        %v1196 = vmul.f32 %v734, %v1056
        %v1197 = vmul.f32 %v735, %v1056
        %v1198 = vmul.f32 %v736, %v1056
        %v1199 = vmul.f32 %v737, %v1056
        %v1200 = vmul.f32 %v738, %v1056
        %v1201 = vmul.f32 %v739, %v1056
        %v1202 = vmul.f32 %v740, %v1056
        %v1203 = vmul.f32 %v741, %v1056
        %v1204 = vmul.f32 %v742, %v1056
        %v1205 = vmul.f32 %v743, %v1056
        %v1206 = vmul.f32 %v744, %v1056
        %v1207 = vmul.f32 %v745, %v1056
        %v1208 = vmul.f32 %v746, %v1056
        %v1209 = vmul.f32 %v747, %v1056
        %v1210 = vmul.f32 %v748, %v1056
        %v1211 = vmul.f32 %v749, %v1056
        %v1212 = vmul.f32 %v750, %v1056
        %v1213 = vmul.f32 %v751, %v1056
        %v1214 = vmul.f32 %v752, %v1056
        %v1215 = vmul.f32 %v753, %v1056
        %v1216 = vmul.f32 %v754, %v1061
        %v1217 = vmul.f32 %v755, %v1061
        %v1218 = vmul.f32 %v756, %v1061
        %v1219 = vmul.f32 %v757, %v1061
        %v1220 = vmul.f32 %v758, %v1061
        %v1221 = vmul.f32 %v759, %v1061
        %v1222 = vmul.f32 %v760, %v1061
        %v1223 = vmul.f32 %v761, %v1061
        %v1224 = vmul.f32 %v762, %v1061
        %v1225 = vmul.f32 %v763, %v1061
        %v1226 = vmul.f32 %v764, %v1061
        %v1227 = vmul.f32 %v765, %v1061
        %v1228 = vmul.f32 %v766, %v1061
        %v1229 = vmul.f32 %v767, %v1061
        %v1230 = vmul.f32 %v768, %v1061
        %v1231 = vmul.f32 %v769, %v1061
        %v1232 = vmul.f32 %v770, %v1061
        %v1233 = vmul.f32 %v771, %v1061
        %v1234 = vmul.f32 %v772, %v1061
        %v1235 = vmul.f32 %v773, %v1061
        %v1236 = vmul.f32 %v774, %v1061
        %v1237 = vmul.f32 %v775, %v1061
        %v1238 = vmul.f32 %v776, %v1061
        %v1239 = vmul.f32 %v777, %v1061
        %v1240 = vmul.f32 %v778, %v1061
        %v1241 = vmul.f32 %v779, %v1061
        %v1242 = vmul.f32 %v780, %v1061
        %v1243 = vmul.f32 %v781, %v1066
        %v1244 = vmul.f32 %v782, %v1066
        %v1245 = vmul.f32 %v783, %v1066
        %v1246 = vmul.f32 %v784, %v1066
        %v1247 = vmul.f32 %v785, %v1066
        %v1248 = vmul.f32 %v786, %v1066
        %v1249 = vmul.f32 %v787, %v1066
        %v1250 = vmul.f32 %v788, %v1066
        %v1251 = vmul.f32 %v789, %v1066
        %v1252 = vmul.f32 %v790, %v1066
        %v1253 = vmul.f32 %v791, %v1066
        %v1254 = vmul.f32 %v792, %v1066
        %v1255 = vmul.f32 %v793, %v1066
        %v1256 = vmul.f32 %v794, %v1066
        %v1257 = vmul.f32 %v795, %v1066
        %v1258 = vmul.f32 %v796, %v1066
        %v1259 = vmul.f32 %v797, %v1066
        %v1260 = vmul.f32 %v798, %v1066
        %v1261 = vmul.f32 %v799, %v1066
        %v1262 = vmul.f32 %v800, %v1066
        %v1263 = vmul.f32 %v801, %v1066
        %v1264 = vmul.f32 %v802, %v1066
        %v1265 = vmul.f32 %v803, %v1066
        %v1266 = vmul.f32 %v804, %v1066
        %v1267 = vmul.f32 %v805, %v1066
        %v1268 = vmul.f32 %v806, %v1066
        %v1269 = vmul.f32 %v807, %v1066
        %v1270 = vmul.f32 %v808, %v1071
        %v1271 = vmul.f32 %v809, %v1071
        %v1272 = vmul.f32 %v810, %v1071
        %v1273 = vmul.f32 %v811, %v1071
        %v1274 = vmul.f32 %v812, %v1071
        %v1275 = vmul.f32 %v813, %v1071
        %v1276 = vmul.f32 %v814, %v1071
        %v1277 = vmul.f32 %v815, %v1071
        %v1278 = vmul.f32 %v816, %v1071
        %v1279 = vmul.f32 %v817, %v1071
        %v1280 = vmul.f32 %v818, %v1071
        %v1281 = vmul.f32 %v819, %v1071
        %v1282 = vmul.f32 %v820, %v1071
        %v1283 = vmul.f32 %v821, %v1071
        %v1284 = vmul.f32 %v822, %v1071
        %v1285 = vmul.f32 %v823, %v1071
        %v1286 = vmul.f32 %v824, %v1071
        %v1287 = vmul.f32 %v825, %v1071
        %v1288 = vmul.f32 %v826, %v1071
        %v1289 = vmul.f32 %v827, %v1071
        %v1290 = vmul.f32 %v828, %v1071
        %v1291 = vmul.f32 %v829, %v1071
        %v1292 = vmul.f32 %v830, %v1071
        %v1293 = vmul.f32 %v831, %v1071
        %v1294 = vmul.f32 %v832, %v1071
        %v1295 = vmul.f32 %v833, %v1071
        %v1296 = vmul.f32 %v834, %v1071
        %v1297 = vmul.f32 %v835, %v1076
        %v1298 = vmul.f32 %v836, %v1076
        %v1299 = vmul.f32 %v837, %v1076
        %v1300 = vmul.f32 %v838, %v1076
        %v1301 = vmul.f32 %v839, %v1076
        %v1302 = vmul.f32 %v840, %v1076
        %v1303 = vmul.f32 %v841, %v1076
        %v1304 = vmul.f32 %v842, %v1076
        %v1305 = vmul.f32 %v843, %v1076
        %v1306 = vmul.f32 %v844, %v1076
        %v1307 = vmul.f32 %v845, %v1076
        %v1308 = vmul.f32 %v846, %v1076
        %v1309 = vmul.f32 %v847, %v1076
        %v1310 = vmul.f32 %v848, %v1076
        %v1311 = vmul.f32 %v849, %v1076
        %v1312 = vmul.f32 %v850, %v1076
        %v1313 = vmul.f32 %v851, %v1076
        %v1314 = vmul.f32 %v852, %v1076
        %v1315 = vmul.f32 %v853, %v1076
        %v1316 = vmul.f32 %v854, %v1076
        %v1317 = vmul.f32 %v855, %v1076
        %v1318 = vmul.f32 %v856, %v1076
        %v1319 = vmul.f32 %v857, %v1076
        %v1320 = vmul.f32 %v858, %v1076
        %v1321 = vmul.f32 %v859, %v1076
        %v1322 = vmul.f32 %v860, %v1076
        %v1323 = vmul.f32 %v861, %v1076
        %v1324 = vmul.f32 %v862, %v1081
        %v1325 = vmul.f32 %v863, %v1081
        %v1326 = vmul.f32 %v864, %v1081
        %v1327 = vmul.f32 %v865, %v1081
        %v1328 = vmul.f32 %v866, %v1081
        %v1329 = vmul.f32 %v867, %v1081
        %v1330 = vmul.f32 %v868, %v1081
        %v1331 = vmul.f32 %v869, %v1081
        %v1332 = vmul.f32 %v870, %v1081
        %v1333 = vmul.f32 %v871, %v1081
        %v1334 = vmul.f32 %v872, %v1081
        %v1335 = vmul.f32 %v873, %v1081
        %v1336 = vmul.f32 %v874, %v1081
        %v1337 = vmul.f32 %v875, %v1081
        %v1338 = vmul.f32 %v876, %v1081
        %v1339 = vmul.f32 %v877, %v1081
        %v1340 = vmul.f32 %v878, %v1081
        %v1341 = vmul.f32 %v879, %v1081
        %v1342 = vmul.f32 %v880, %v1081
        %v1343 = vmul.f32 %v881, %v1081
        %v1344 = vmul.f32 %v882, %v1081
        %v1345 = vmul.f32 %v883, %v1081
        %v1346 = vmul.f32 %v884, %v1081
        %v1347 = vmul.f32 %v885, %v1081
        %v1348 = vmul.f32 %v886, %v1081
        %v1349 = vmul.f32 %v887, %v1081
        %v1350 = vmul.f32 %v888, %v1081
        %v1351 = vmul.f32 %v889, %v1086
        %v1352 = vmul.f32 %v890, %v1086
        %v1353 = vmul.f32 %v891, %v1086
        %v1354 = vmul.f32 %v892, %v1086
        %v1355 = vmul.f32 %v893, %v1086
        %v1356 = vmul.f32 %v894, %v1086
        %v1357 = vmul.f32 %v895, %v1086
        %v1358 = vmul.f32 %v896, %v1086
        %v1359 = vmul.f32 %v897, %v1086
        %v1360 = vmul.f32 %v898, %v1086
        %v1361 = vmul.f32 %v899, %v1086
        %v1362 = vmul.f32 %v900, %v1086
        %v1363 = vmul.f32 %v901, %v1086
        %v1364 = vmul.f32 %v902, %v1086
        %v1365 = vmul.f32 %v903, %v1086
        %v1366 = vmul.f32 %v904, %v1086
        %v1367 = vmul.f32 %v905, %v1086
        %v1368 = vmul.f32 %v906, %v1086
        %v1369 = vmul.f32 %v907, %v1086
        %v1370 = vmul.f32 %v908, %v1086
        %v1371 = vmul.f32 %v909, %v1086
        %v1372 = vmul.f32 %v910, %v1086
        %v1373 = vmul.f32 %v911, %v1086
        %v1374 = vmul.f32 %v912, %v1086
        %v1375 = vmul.f32 %v913, %v1086
        %v1376 = vmul.f32 %v914, %v1086
        %v1377 = vmul.f32 %v915, %v1086
        %v1378 = vmul.f32 %v916, %v1091
        %v1379 = vmul.f32 %v917, %v1091
        %v1380 = vmul.f32 %v918, %v1091
        %v1381 = vmul.f32 %v919, %v1091
        %v1382 = vmul.f32 %v920, %v1091
        %v1383 = vmul.f32 %v921, %v1091
        %v1384 = vmul.f32 %v922, %v1091
        %v1385 = vmul.f32 %v923, %v1091
        %v1386 = vmul.f32 %v924, %v1091
        %v1387 = vmul.f32 %v925, %v1091
        %v1388 = vmul.f32 %v926, %v1091
        %v1389 = vmul.f32 %v927, %v1091
        %v1390 = vmul.f32 %v928, %v1091
        %v1391 = vmul.f32 %v929, %v1091
        %v1392 = vmul.f32 %v930, %v1091
        %v1393 = vmul.f32 %v931, %v1091
        %v1394 = vmul.f32 %v932, %v1091
        %v1395 = vmul.f32 %v933, %v1091
        %v1396 = vmul.f32 %v934, %v1091
        %v1397 = vmul.f32 %v935, %v1091
        %v1398 = vmul.f32 %v936, %v1091
        %v1399 = vmul.f32 %v937, %v1091
        %v1400 = vmul.f32 %v938, %v1091
        %v1401 = vmul.f32 %v939, %v1091
        %v1402 = vmul.f32 %v940, %v1091
        %v1403 = vmul.f32 %v941, %v1091
        %v1404 = vmul.f32 %v942, %v1091
        %v1405 = vmul.f32 %v943, %v1096
        %v1406 = vmul.f32 %v944, %v1096
        %v1407 = vmul.f32 %v945, %v1096
        %v1408 = vmul.f32 %v946, %v1096
        %v1409 = vmul.f32 %v947, %v1096
        %v1410 = vmul.f32 %v948, %v1096
        %v1411 = vmul.f32 %v949, %v1096
        %v1412 = vmul.f32 %v950, %v1096
        %v1413 = vmul.f32 %v951, %v1096
        %v1414 = vmul.f32 %v952, %v1096
        %v1415 = vmul.f32 %v953, %v1096
        %v1416 = vmul.f32 %v954, %v1096
        %v1417 = vmul.f32 %v955, %v1096
        %v1418 = vmul.f32 %v956, %v1096
        %v1419 = vmul.f32 %v957, %v1096
        %v1420 = vmul.f32 %v958, %v1096
        %v1421 = vmul.f32 %v959, %v1096
        %v1422 = vmul.f32 %v960, %v1096
        %v1423 = vmul.f32 %v961, %v1096
        %v1424 = vmul.f32 %v962, %v1096
        %v1425 = vmul.f32 %v963, %v1096
        %v1426 = vmul.f32 %v964, %v1096
        %v1427 = vmul.f32 %v965, %v1096
        %v1428 = vmul.f32 %v966, %v1096
        %v1429 = vmul.f32 %v967, %v1096
        %v1430 = vmul.f32 %v968, %v1096
        %v1431 = vmul.f32 %v969, %v1096
        %v1432 = vmul.f32 %v970, %v1101
        %v1433 = vmul.f32 %v971, %v1101
        %v1434 = vmul.f32 %v972, %v1101
        %v1435 = vmul.f32 %v973, %v1101
        %v1436 = vmul.f32 %v974, %v1101
        %v1437 = vmul.f32 %v975, %v1101
        %v1438 = vmul.f32 %v976, %v1101
        %v1439 = vmul.f32 %v977, %v1101
        %v1440 = vmul.f32 %v978, %v1101
        %v1441 = vmul.f32 %v979, %v1101
        %v1442 = vmul.f32 %v980, %v1101
        %v1443 = vmul.f32 %v981, %v1101
        %v1444 = vmul.f32 %v982, %v1101
        %v1445 = vmul.f32 %v983, %v1101
        %v1446 = vmul.f32 %v984, %v1101
        %v1447 = vmul.f32 %v985, %v1101
        %v1448 = vmul.f32 %v986, %v1101
        %v1449 = vmul.f32 %v987, %v1101
        %v1450 = vmul.f32 %v988, %v1101
        %v1451 = vmul.f32 %v989, %v1101
        %v1452 = vmul.f32 %v990, %v1101
        %v1453 = vmul.f32 %v991, %v1101
        %v1454 = vmul.f32 %v992, %v1101
        %v1455 = vmul.f32 %v993, %v1101
        %v1456 = vmul.f32 %v994, %v1101
        %v1457 = vmul.f32 %v995, %v1101
        %v1458 = vmul.f32 %v996, %v1101
        %v1459 = vmul.f32 %v997, %v1106
        %v1460 = vmul.f32 %v998, %v1106
        %v1461 = vmul.f32 %v999, %v1106
        %v1462 = vmul.f32 %v1000, %v1106
        %v1463 = vmul.f32 %v1001, %v1106
        %v1464 = vmul.f32 %v1002, %v1106
        %v1465 = vmul.f32 %v1003, %v1106
        %v1466 = vmul.f32 %v1004, %v1106
        %v1467 = vmul.f32 %v1005, %v1106
        %v1468 = vmul.f32 %v1006, %v1106
        %v1469 = vmul.f32 %v1007, %v1106
        %v1470 = vmul.f32 %v1008, %v1106
        %v1471 = vmul.f32 %v1009, %v1106
        %v1472 = vmul.f32 %v1010, %v1106
        %v1473 = vmul.f32 %v1011, %v1106
        %v1474 = vmul.f32 %v1012, %v1106
        %v1475 = vmul.f32 %v1013, %v1106
        %v1476 = vmul.f32 %v1014, %v1106
        %v1477 = vmul.f32 %v1015, %v1106
        %v1478 = vmul.f32 %v1016, %v1106
        %v1479 = vmul.f32 %v1017, %v1106
        %v1480 = vmul.f32 %v1018, %v1106
        %v1481 = vmul.f32 %v1019, %v1106
        %v1482 = vmul.f32 %v1020, %v1106
        %v1483 = vmul.f32 %v1021, %v1106
        %v1484 = vmul.f32 %v1022, %v1106
        %v1485 = vmul.f32 %v1023, %v1106
        %v1486 = vadd.f32 %v1108, %v1135
        %v1487 = vadd.f32 %v1486, %v1162
        %v1488 = vadd.f32 %v1487, %v1189
        %v1489 = vadd.f32 %v1488, %v1216
        %v1490 = vadd.f32 %v1489, %v1243
        %v1491 = vadd.f32 %v1490, %v1270
        %v1492 = vadd.f32 %v1491, %v1297
        %v1493 = vadd.f32 %v1492, %v1324
        %v1494 = vadd.f32 %v1493, %v1351
        %v1495 = vadd.f32 %v1494, %v1378
        %v1496 = vadd.f32 %v1495, %v1405
        %v1497 = vadd.f32 %v1496, %v1432
        %vm1498 = vcmask 1043456
        %v1499 = vsel %vm1498, %v1459, 0.0
        %v1500 = vadd.f32 %v1497, %v1499
        %v1501 = vrot.slane %v1500, 4
        %v1502 = vadd.f32 %v1500, %v1501
        %v1503 = vrot.slane %v1502, 2
        %v1504 = vadd.f32 %v1502, %v1503
        %v1505 = vrot.slane %v1504, 1
        %v1506 = vadd.f32 %v1504, %v1505
        %v1507 = vadd.f32 %v1109, %v1136
        %v1508 = vadd.f32 %v1507, %v1163
        %v1509 = vadd.f32 %v1508, %v1190
        %v1510 = vadd.f32 %v1509, %v1217
        %v1511 = vadd.f32 %v1510, %v1244
        %v1512 = vadd.f32 %v1511, %v1271
        %v1513 = vadd.f32 %v1512, %v1298
        %v1514 = vadd.f32 %v1513, %v1325
        %v1515 = vadd.f32 %v1514, %v1352
        %v1516 = vadd.f32 %v1515, %v1379
        %v1517 = vadd.f32 %v1516, %v1406
        %v1518 = vadd.f32 %v1517, %v1433
        %v1519 = vsel %vm1498, %v1460, 0.0
        %v1520 = vadd.f32 %v1518, %v1519
        %v1521 = vrot.slane %v1520, 4
        %v1522 = vadd.f32 %v1520, %v1521
        %v1523 = vrot.slane %v1522, 2
        %v1524 = vadd.f32 %v1522, %v1523
        %v1525 = vrot.slane %v1524, 1
        %v1526 = vadd.f32 %v1524, %v1525
        %v1527 = vadd.f32 %v1110, %v1137
        %v1528 = vadd.f32 %v1527, %v1164
        %v1529 = vadd.f32 %v1528, %v1191
        %v1530 = vadd.f32 %v1529, %v1218
        %v1531 = vadd.f32 %v1530, %v1245
        %v1532 = vadd.f32 %v1531, %v1272
        %v1533 = vadd.f32 %v1532, %v1299
        %v1534 = vadd.f32 %v1533, %v1326
        %v1535 = vadd.f32 %v1534, %v1353
        %v1536 = vadd.f32 %v1535, %v1380
        %v1537 = vadd.f32 %v1536, %v1407
        %v1538 = vadd.f32 %v1537, %v1434
        %v1539 = vsel %vm1498, %v1461, 0.0
        %v1540 = vadd.f32 %v1538, %v1539
        %v1541 = vrot.slane %v1540, 4
        %v1542 = vadd.f32 %v1540, %v1541
        %v1543 = vrot.slane %v1542, 2
        %v1544 = vadd.f32 %v1542, %v1543
        %v1545 = vrot.slane %v1544, 1
        %v1546 = vadd.f32 %v1544, %v1545
        %v1547 = vadd.f32 %v1111, %v1138
        %v1548 = vadd.f32 %v1547, %v1165
        %v1549 = vadd.f32 %v1548, %v1192
        %v1550 = vadd.f32 %v1549, %v1219
        %v1551 = vadd.f32 %v1550, %v1246
        %v1552 = vadd.f32 %v1551, %v1273
        %v1553 = vadd.f32 %v1552, %v1300
        %v1554 = vadd.f32 %v1553, %v1327
        %v1555 = vadd.f32 %v1554, %v1354
        %v1556 = vadd.f32 %v1555, %v1381
        %v1557 = vadd.f32 %v1556, %v1408
        %v1558 = vadd.f32 %v1557, %v1435
        %v1559 = vsel %vm1498, %v1462, 0.0
        %v1560 = vadd.f32 %v1558, %v1559
        %v1561 = vrot.slane %v1560, 4
        %v1562 = vadd.f32 %v1560, %v1561
        %v1563 = vrot.slane %v1562, 2
        %v1564 = vadd.f32 %v1562, %v1563
        %v1565 = vrot.slane %v1564, 1
        %v1566 = vadd.f32 %v1564, %v1565
        %v1567 = vadd.f32 %v1112, %v1139
        %v1568 = vadd.f32 %v1567, %v1166
        %v1569 = vadd.f32 %v1568, %v1193
        %v1570 = vadd.f32 %v1569, %v1220
        %v1571 = vadd.f32 %v1570, %v1247
        %v1572 = vadd.f32 %v1571, %v1274
        %v1573 = vadd.f32 %v1572, %v1301
        %v1574 = vadd.f32 %v1573, %v1328
        %v1575 = vadd.f32 %v1574, %v1355
        %v1576 = vadd.f32 %v1575, %v1382
        %v1577 = vadd.f32 %v1576, %v1409
        %v1578 = vadd.f32 %v1577, %v1436
        %v1579 = vsel %vm1498, %v1463, 0.0
        %v1580 = vadd.f32 %v1578, %v1579
        %v1581 = vrot.slane %v1580, 4
        %v1582 = vadd.f32 %v1580, %v1581
        %v1583 = vrot.slane %v1582, 2
        %v1584 = vadd.f32 %v1582, %v1583
        %v1585 = vrot.slane %v1584, 1
        %v1586 = vadd.f32 %v1584, %v1585
        %v1587 = vadd.f32 %v1113, %v1140
        %v1588 = vadd.f32 %v1587, %v1167
        %v1589 = vadd.f32 %v1588, %v1194
        %v1590 = vadd.f32 %v1589, %v1221
        %v1591 = vadd.f32 %v1590, %v1248
        %v1592 = vadd.f32 %v1591, %v1275
        %v1593 = vadd.f32 %v1592, %v1302
        %v1594 = vadd.f32 %v1593, %v1329
        %v1595 = vadd.f32 %v1594, %v1356
        %v1596 = vadd.f32 %v1595, %v1383
        %v1597 = vadd.f32 %v1596, %v1410
        %v1598 = vadd.f32 %v1597, %v1437
        %v1599 = vsel %vm1498, %v1464, 0.0
        %v1600 = vadd.f32 %v1598, %v1599
        %v1601 = vrot.slane %v1600, 4
        %v1602 = vadd.f32 %v1600, %v1601
        %v1603 = vrot.slane %v1602, 2
        %v1604 = vadd.f32 %v1602, %v1603
        %v1605 = vrot.slane %v1604, 1
        %v1606 = vadd.f32 %v1604, %v1605
        %v1607 = vadd.f32 %v1114, %v1141
        %v1608 = vadd.f32 %v1607, %v1168
        %v1609 = vadd.f32 %v1608, %v1195
        %v1610 = vadd.f32 %v1609, %v1222
        %v1611 = vadd.f32 %v1610, %v1249
        %v1612 = vadd.f32 %v1611, %v1276
        %v1613 = vadd.f32 %v1612, %v1303
        %v1614 = vadd.f32 %v1613, %v1330
        %v1615 = vadd.f32 %v1614, %v1357
        %v1616 = vadd.f32 %v1615, %v1384
        %v1617 = vadd.f32 %v1616, %v1411
        %v1618 = vadd.f32 %v1617, %v1438
        %v1619 = vsel %vm1498, %v1465, 0.0
        %v1620 = vadd.f32 %v1618, %v1619
        %v1621 = vrot.slane %v1620, 4
        %v1622 = vadd.f32 %v1620, %v1621
        %v1623 = vrot.slane %v1622, 2
        %v1624 = vadd.f32 %v1622, %v1623
        %v1625 = vrot.slane %v1624, 1
        %v1626 = vadd.f32 %v1624, %v1625
        %v1627 = vadd.f32 %v1115, %v1142
        %v1628 = vadd.f32 %v1627, %v1169
        %v1629 = vadd.f32 %v1628, %v1196
        %v1630 = vadd.f32 %v1629, %v1223
        %v1631 = vadd.f32 %v1630, %v1250
        %v1632 = vadd.f32 %v1631, %v1277
        %v1633 = vadd.f32 %v1632, %v1304
        %v1634 = vadd.f32 %v1633, %v1331
        %v1635 = vadd.f32 %v1634, %v1358
        %v1636 = vadd.f32 %v1635, %v1385
        %v1637 = vadd.f32 %v1636, %v1412
        %v1638 = vadd.f32 %v1637, %v1439
        %v1639 = vsel %vm1498, %v1466, 0.0
        %v1640 = vadd.f32 %v1638, %v1639
        %v1641 = vrot.slane %v1640, 4
        %v1642 = vadd.f32 %v1640, %v1641
        %v1643 = vrot.slane %v1642, 2
        %v1644 = vadd.f32 %v1642, %v1643
        %v1645 = vrot.slane %v1644, 1
        %v1646 = vadd.f32 %v1644, %v1645
        %v1647 = vadd.f32 %v1116, %v1143
        %v1648 = vadd.f32 %v1647, %v1170
        %v1649 = vadd.f32 %v1648, %v1197
        %v1650 = vadd.f32 %v1649, %v1224
        %v1651 = vadd.f32 %v1650, %v1251
        %v1652 = vadd.f32 %v1651, %v1278
        %v1653 = vadd.f32 %v1652, %v1305
        %v1654 = vadd.f32 %v1653, %v1332
        %v1655 = vadd.f32 %v1654, %v1359
        %v1656 = vadd.f32 %v1655, %v1386
        %v1657 = vadd.f32 %v1656, %v1413
        %v1658 = vadd.f32 %v1657, %v1440
        %v1659 = vsel %vm1498, %v1467, 0.0
        %v1660 = vadd.f32 %v1658, %v1659
        %v1661 = vrot.slane %v1660, 4
        %v1662 = vadd.f32 %v1660, %v1661
        %v1663 = vrot.slane %v1662, 2
        %v1664 = vadd.f32 %v1662, %v1663
        %v1665 = vrot.slane %v1664, 1
        %v1666 = vadd.f32 %v1664, %v1665
        %v1667 = vadd.f32 %v1117, %v1144
        %v1668 = vadd.f32 %v1667, %v1171
        %v1669 = vadd.f32 %v1668, %v1198
        %v1670 = vadd.f32 %v1669, %v1225
        %v1671 = vadd.f32 %v1670, %v1252
        %v1672 = vadd.f32 %v1671, %v1279
        %v1673 = vadd.f32 %v1672, %v1306
        %v1674 = vadd.f32 %v1673, %v1333
        %v1675 = vadd.f32 %v1674, %v1360
        %v1676 = vadd.f32 %v1675, %v1387
        %v1677 = vadd.f32 %v1676, %v1414
        %v1678 = vadd.f32 %v1677, %v1441
        %v1679 = vsel %vm1498, %v1468, 0.0
        %v1680 = vadd.f32 %v1678, %v1679
        %v1681 = vrot.slane %v1680, 4
        %v1682 = vadd.f32 %v1680, %v1681
        %v1683 = vrot.slane %v1682, 2
        %v1684 = vadd.f32 %v1682, %v1683
        %v1685 = vrot.slane %v1684, 1
        %v1686 = vadd.f32 %v1684, %v1685
        %v1687 = vadd.f32 %v1118, %v1145
        %v1688 = vadd.f32 %v1687, %v1172
        %v1689 = vadd.f32 %v1688, %v1199
        %v1690 = vadd.f32 %v1689, %v1226
        %v1691 = vadd.f32 %v1690, %v1253
        %v1692 = vadd.f32 %v1691, %v1280
        %v1693 = vadd.f32 %v1692, %v1307
        %v1694 = vadd.f32 %v1693, %v1334
        %v1695 = vadd.f32 %v1694, %v1361
        %v1696 = vadd.f32 %v1695, %v1388
        %v1697 = vadd.f32 %v1696, %v1415
        %v1698 = vadd.f32 %v1697, %v1442
        %v1699 = vsel %vm1498, %v1469, 0.0
        %v1700 = vadd.f32 %v1698, %v1699
        %v1701 = vrot.slane %v1700, 4
        %v1702 = vadd.f32 %v1700, %v1701
        %v1703 = vrot.slane %v1702, 2
        %v1704 = vadd.f32 %v1702, %v1703
        %v1705 = vrot.slane %v1704, 1
        %v1706 = vadd.f32 %v1704, %v1705
        %v1707 = vadd.f32 %v1119, %v1146
        %v1708 = vadd.f32 %v1707, %v1173
        %v1709 = vadd.f32 %v1708, %v1200
        %v1710 = vadd.f32 %v1709, %v1227
        %v1711 = vadd.f32 %v1710, %v1254
        %v1712 = vadd.f32 %v1711, %v1281
        %v1713 = vadd.f32 %v1712, %v1308
        %v1714 = vadd.f32 %v1713, %v1335
        %v1715 = vadd.f32 %v1714, %v1362
        %v1716 = vadd.f32 %v1715, %v1389
        %v1717 = vadd.f32 %v1716, %v1416
        %v1718 = vadd.f32 %v1717, %v1443
        %v1719 = vsel %vm1498, %v1470, 0.0
        %v1720 = vadd.f32 %v1718, %v1719
        %v1721 = vrot.slane %v1720, 4
        %v1722 = vadd.f32 %v1720, %v1721
        %v1723 = vrot.slane %v1722, 2
        %v1724 = vadd.f32 %v1722, %v1723
        %v1725 = vrot.slane %v1724, 1
        %v1726 = vadd.f32 %v1724, %v1725
        %v1727 = vadd.f32 %v1120, %v1147
        %v1728 = vadd.f32 %v1727, %v1174
        %v1729 = vadd.f32 %v1728, %v1201
        %v1730 = vadd.f32 %v1729, %v1228
        %v1731 = vadd.f32 %v1730, %v1255
        %v1732 = vadd.f32 %v1731, %v1282
        %v1733 = vadd.f32 %v1732, %v1309
        %v1734 = vadd.f32 %v1733, %v1336
        %v1735 = vadd.f32 %v1734, %v1363
        %v1736 = vadd.f32 %v1735, %v1390
        %v1737 = vadd.f32 %v1736, %v1417
        %v1738 = vadd.f32 %v1737, %v1444
        %v1739 = vsel %vm1498, %v1471, 0.0
        %v1740 = vadd.f32 %v1738, %v1739
        %v1741 = vrot.slane %v1740, 4
        %v1742 = vadd.f32 %v1740, %v1741
        %v1743 = vrot.slane %v1742, 2
        %v1744 = vadd.f32 %v1742, %v1743
        %v1745 = vrot.slane %v1744, 1
        %v1746 = vadd.f32 %v1744, %v1745
        %v1747 = vadd.f32 %v1121, %v1148
        %v1748 = vadd.f32 %v1747, %v1175
        %v1749 = vadd.f32 %v1748, %v1202
        %v1750 = vadd.f32 %v1749, %v1229
        %v1751 = vadd.f32 %v1750, %v1256
        %v1752 = vadd.f32 %v1751, %v1283
        %v1753 = vadd.f32 %v1752, %v1310
        %v1754 = vadd.f32 %v1753, %v1337
        %v1755 = vadd.f32 %v1754, %v1364
        %v1756 = vadd.f32 %v1755, %v1391
        %v1757 = vadd.f32 %v1756, %v1418
        %v1758 = vadd.f32 %v1757, %v1445
        %v1759 = vsel %vm1498, %v1472, 0.0
        %v1760 = vadd.f32 %v1758, %v1759
        %v1761 = vrot.slane %v1760, 4
        %v1762 = vadd.f32 %v1760, %v1761
        %v1763 = vrot.slane %v1762, 2
        %v1764 = vadd.f32 %v1762, %v1763
        %v1765 = vrot.slane %v1764, 1
        %v1766 = vadd.f32 %v1764, %v1765
        %v1767 = vadd.f32 %v1122, %v1149
        %v1768 = vadd.f32 %v1767, %v1176
        %v1769 = vadd.f32 %v1768, %v1203
        %v1770 = vadd.f32 %v1769, %v1230
        %v1771 = vadd.f32 %v1770, %v1257
        %v1772 = vadd.f32 %v1771, %v1284
        %v1773 = vadd.f32 %v1772, %v1311
        %v1774 = vadd.f32 %v1773, %v1338
        %v1775 = vadd.f32 %v1774, %v1365
        %v1776 = vadd.f32 %v1775, %v1392
        %v1777 = vadd.f32 %v1776, %v1419
        %v1778 = vadd.f32 %v1777, %v1446
        %v1779 = vsel %vm1498, %v1473, 0.0
        %v1780 = vadd.f32 %v1778, %v1779
        %v1781 = vrot.slane %v1780, 4
        %v1782 = vadd.f32 %v1780, %v1781
        %v1783 = vrot.slane %v1782, 2
        %v1784 = vadd.f32 %v1782, %v1783
        %v1785 = vrot.slane %v1784, 1
        %v1786 = vadd.f32 %v1784, %v1785
        %v1787 = vadd.f32 %v1123, %v1150
        %v1788 = vadd.f32 %v1787, %v1177
        %v1789 = vadd.f32 %v1788, %v1204
        %v1790 = vadd.f32 %v1789, %v1231
        %v1791 = vadd.f32 %v1790, %v1258
        %v1792 = vadd.f32 %v1791, %v1285
        %v1793 = vadd.f32 %v1792, %v1312
        %v1794 = vadd.f32 %v1793, %v1339
        %v1795 = vadd.f32 %v1794, %v1366
        %v1796 = vadd.f32 %v1795, %v1393
        %v1797 = vadd.f32 %v1796, %v1420
        %v1798 = vadd.f32 %v1797, %v1447
        %v1799 = vsel %vm1498, %v1474, 0.0
        %v1800 = vadd.f32 %v1798, %v1799
        %v1801 = vrot.slane %v1800, 4
        %v1802 = vadd.f32 %v1800, %v1801
        %v1803 = vrot.slane %v1802, 2
        %v1804 = vadd.f32 %v1802, %v1803
        %v1805 = vrot.slane %v1804, 1
        %v1806 = vadd.f32 %v1804, %v1805
        %v1807 = vadd.f32 %v1124, %v1151
        %v1808 = vadd.f32 %v1807, %v1178
        %v1809 = vadd.f32 %v1808, %v1205
        %v1810 = vadd.f32 %v1809, %v1232
        %v1811 = vadd.f32 %v1810, %v1259
        %v1812 = vadd.f32 %v1811, %v1286
        %v1813 = vadd.f32 %v1812, %v1313
        %v1814 = vadd.f32 %v1813, %v1340
        %v1815 = vadd.f32 %v1814, %v1367
        %v1816 = vadd.f32 %v1815, %v1394
        %v1817 = vadd.f32 %v1816, %v1421
        %v1818 = vadd.f32 %v1817, %v1448
        %v1819 = vsel %vm1498, %v1475, 0.0
        %v1820 = vadd.f32 %v1818, %v1819
        %v1821 = vrot.slane %v1820, 4
        %v1822 = vadd.f32 %v1820, %v1821
        %v1823 = vrot.slane %v1822, 2
        %v1824 = vadd.f32 %v1822, %v1823
        %v1825 = vrot.slane %v1824, 1
        %v1826 = vadd.f32 %v1824, %v1825
        %v1827 = vadd.f32 %v1125, %v1152
        %v1828 = vadd.f32 %v1827, %v1179
        %v1829 = vadd.f32 %v1828, %v1206
        %v1830 = vadd.f32 %v1829, %v1233
        %v1831 = vadd.f32 %v1830, %v1260
        %v1832 = vadd.f32 %v1831, %v1287
        %v1833 = vadd.f32 %v1832, %v1314
        %v1834 = vadd.f32 %v1833, %v1341
        %v1835 = vadd.f32 %v1834, %v1368
        %v1836 = vadd.f32 %v1835, %v1395
        %v1837 = vadd.f32 %v1836, %v1422
        %v1838 = vadd.f32 %v1837, %v1449
        %v1839 = vsel %vm1498, %v1476, 0.0
        %v1840 = vadd.f32 %v1838, %v1839
        %v1841 = vrot.slane %v1840, 4
        %v1842 = vadd.f32 %v1840, %v1841
        %v1843 = vrot.slane %v1842, 2
        %v1844 = vadd.f32 %v1842, %v1843
        %v1845 = vrot.slane %v1844, 1
        %v1846 = vadd.f32 %v1844, %v1845
        %v1847 = vadd.f32 %v1126, %v1153
        %v1848 = vadd.f32 %v1847, %v1180
        %v1849 = vadd.f32 %v1848, %v1207
        %v1850 = vadd.f32 %v1849, %v1234
        %v1851 = vadd.f32 %v1850, %v1261
        %v1852 = vadd.f32 %v1851, %v1288
        %v1853 = vadd.f32 %v1852, %v1315
        %v1854 = vadd.f32 %v1853, %v1342
        %v1855 = vadd.f32 %v1854, %v1369
        %v1856 = vadd.f32 %v1855, %v1396
        %v1857 = vadd.f32 %v1856, %v1423
        %v1858 = vadd.f32 %v1857, %v1450
        %v1859 = vsel %vm1498, %v1477, 0.0
        %v1860 = vadd.f32 %v1858, %v1859
        %v1861 = vrot.slane %v1860, 4
        %v1862 = vadd.f32 %v1860, %v1861
        %v1863 = vrot.slane %v1862, 2
        %v1864 = vadd.f32 %v1862, %v1863
        %v1865 = vrot.slane %v1864, 1
        %v1866 = vadd.f32 %v1864, %v1865
        %v1867 = vadd.f32 %v1127, %v1154
        %v1868 = vadd.f32 %v1867, %v1181
        %v1869 = vadd.f32 %v1868, %v1208
        %v1870 = vadd.f32 %v1869, %v1235
        %v1871 = vadd.f32 %v1870, %v1262
        %v1872 = vadd.f32 %v1871, %v1289
        %v1873 = vadd.f32 %v1872, %v1316
        %v1874 = vadd.f32 %v1873, %v1343
        %v1875 = vadd.f32 %v1874, %v1370
        %v1876 = vadd.f32 %v1875, %v1397
        %v1877 = vadd.f32 %v1876, %v1424
        %v1878 = vadd.f32 %v1877, %v1451
        %v1879 = vsel %vm1498, %v1478, 0.0
        %v1880 = vadd.f32 %v1878, %v1879
        %v1881 = vrot.slane %v1880, 4
        %v1882 = vadd.f32 %v1880, %v1881
        %v1883 = vrot.slane %v1882, 2
        %v1884 = vadd.f32 %v1882, %v1883
        %v1885 = vrot.slane %v1884, 1
        %v1886 = vadd.f32 %v1884, %v1885
        %v1887 = vadd.f32 %v1128, %v1155
        %v1888 = vadd.f32 %v1887, %v1182
        %v1889 = vadd.f32 %v1888, %v1209
        %v1890 = vadd.f32 %v1889, %v1236
        %v1891 = vadd.f32 %v1890, %v1263
        %v1892 = vadd.f32 %v1891, %v1290
        %v1893 = vadd.f32 %v1892, %v1317
        %v1894 = vadd.f32 %v1893, %v1344
        %v1895 = vadd.f32 %v1894, %v1371
        %v1896 = vadd.f32 %v1895, %v1398
        %v1897 = vadd.f32 %v1896, %v1425
        %v1898 = vadd.f32 %v1897, %v1452
        %v1899 = vsel %vm1498, %v1479, 0.0
        %v1900 = vadd.f32 %v1898, %v1899
        %v1901 = vrot.slane %v1900, 4
        %v1902 = vadd.f32 %v1900, %v1901
        %v1903 = vrot.slane %v1902, 2
        %v1904 = vadd.f32 %v1902, %v1903
        %v1905 = vrot.slane %v1904, 1
        %v1906 = vadd.f32 %v1904, %v1905
        %v1907 = vadd.f32 %v1129, %v1156
        %v1908 = vadd.f32 %v1907, %v1183
        %v1909 = vadd.f32 %v1908, %v1210
        %v1910 = vadd.f32 %v1909, %v1237
        %v1911 = vadd.f32 %v1910, %v1264
        %v1912 = vadd.f32 %v1911, %v1291
        %v1913 = vadd.f32 %v1912, %v1318
        %v1914 = vadd.f32 %v1913, %v1345
        %v1915 = vadd.f32 %v1914, %v1372
        %v1916 = vadd.f32 %v1915, %v1399
        %v1917 = vadd.f32 %v1916, %v1426
        %v1918 = vadd.f32 %v1917, %v1453
        %v1919 = vsel %vm1498, %v1480, 0.0
        %v1920 = vadd.f32 %v1918, %v1919
        %v1921 = vrot.slane %v1920, 4
        %v1922 = vadd.f32 %v1920, %v1921
        %v1923 = vrot.slane %v1922, 2
        %v1924 = vadd.f32 %v1922, %v1923
        %v1925 = vrot.slane %v1924, 1
        %v1926 = vadd.f32 %v1924, %v1925
        %v1927 = vadd.f32 %v1130, %v1157
        %v1928 = vadd.f32 %v1927, %v1184
        %v1929 = vadd.f32 %v1928, %v1211
        %v1930 = vadd.f32 %v1929, %v1238
        %v1931 = vadd.f32 %v1930, %v1265
        %v1932 = vadd.f32 %v1931, %v1292
        %v1933 = vadd.f32 %v1932, %v1319
        %v1934 = vadd.f32 %v1933, %v1346
        %v1935 = vadd.f32 %v1934, %v1373
        %v1936 = vadd.f32 %v1935, %v1400
        %v1937 = vadd.f32 %v1936, %v1427
        %v1938 = vadd.f32 %v1937, %v1454
        %v1939 = vsel %vm1498, %v1481, 0.0
        %v1940 = vadd.f32 %v1938, %v1939
        %v1941 = vrot.slane %v1940, 4
        %v1942 = vadd.f32 %v1940, %v1941
        %v1943 = vrot.slane %v1942, 2
        %v1944 = vadd.f32 %v1942, %v1943
        %v1945 = vrot.slane %v1944, 1
        %v1946 = vadd.f32 %v1944, %v1945
        %v1947 = vadd.f32 %v1131, %v1158
        %v1948 = vadd.f32 %v1947, %v1185
        %v1949 = vadd.f32 %v1948, %v1212
        %v1950 = vadd.f32 %v1949, %v1239
        %v1951 = vadd.f32 %v1950, %v1266
        %v1952 = vadd.f32 %v1951, %v1293
        %v1953 = vadd.f32 %v1952, %v1320
        %v1954 = vadd.f32 %v1953, %v1347
        %v1955 = vadd.f32 %v1954, %v1374
        %v1956 = vadd.f32 %v1955, %v1401
        %v1957 = vadd.f32 %v1956, %v1428
        %v1958 = vadd.f32 %v1957, %v1455
        %v1959 = vsel %vm1498, %v1482, 0.0
        %v1960 = vadd.f32 %v1958, %v1959
        %v1961 = vrot.slane %v1960, 4
        %v1962 = vadd.f32 %v1960, %v1961
        %v1963 = vrot.slane %v1962, 2
        %v1964 = vadd.f32 %v1962, %v1963
        %v1965 = vrot.slane %v1964, 1
        %v1966 = vadd.f32 %v1964, %v1965
        %v1967 = vadd.f32 %v1132, %v1159
        %v1968 = vadd.f32 %v1967, %v1186
        %v1969 = vadd.f32 %v1968, %v1213
        %v1970 = vadd.f32 %v1969, %v1240
        %v1971 = vadd.f32 %v1970, %v1267
        %v1972 = vadd.f32 %v1971, %v1294
        %v1973 = vadd.f32 %v1972, %v1321
        %v1974 = vadd.f32 %v1973, %v1348
        %v1975 = vadd.f32 %v1974, %v1375
        %v1976 = vadd.f32 %v1975, %v1402
        %v1977 = vadd.f32 %v1976, %v1429
        %v1978 = vadd.f32 %v1977, %v1456
        %v1979 = vsel %vm1498, %v1483, 0.0
        %v1980 = vadd.f32 %v1978, %v1979
        %v1981 = vrot.slane %v1980, 4
        %v1982 = vadd.f32 %v1980, %v1981
        %v1983 = vrot.slane %v1982, 2
        %v1984 = vadd.f32 %v1982, %v1983
        %v1985 = vrot.slane %v1984, 1
        %v1986 = vadd.f32 %v1984, %v1985
        %v1987 = vadd.f32 %v1133, %v1160
        %v1988 = vadd.f32 %v1987, %v1187
        %v1989 = vadd.f32 %v1988, %v1214
        %v1990 = vadd.f32 %v1989, %v1241
        %v1991 = vadd.f32 %v1990, %v1268
        %v1992 = vadd.f32 %v1991, %v1295
        %v1993 = vadd.f32 %v1992, %v1322
        %v1994 = vadd.f32 %v1993, %v1349
        %v1995 = vadd.f32 %v1994, %v1376
        %v1996 = vadd.f32 %v1995, %v1403
        %v1997 = vadd.f32 %v1996, %v1430
        %v1998 = vadd.f32 %v1997, %v1457
        %v1999 = vsel %vm1498, %v1484, 0.0
        %v2000 = vadd.f32 %v1998, %v1999
        %v2001 = vrot.slane %v2000, 4
        %v2002 = vadd.f32 %v2000, %v2001
        %v2003 = vrot.slane %v2002, 2
        %v2004 = vadd.f32 %v2002, %v2003
        %v2005 = vrot.slane %v2004, 1
        %v2006 = vadd.f32 %v2004, %v2005
        %v2007 = vadd.f32 %v1134, %v1161
        %v2008 = vadd.f32 %v2007, %v1188
        %v2009 = vadd.f32 %v2008, %v1215
        %v2010 = vadd.f32 %v2009, %v1242
        %v2011 = vadd.f32 %v2010, %v1269
        %v2012 = vadd.f32 %v2011, %v1296
        %v2013 = vadd.f32 %v2012, %v1323
        %v2014 = vadd.f32 %v2013, %v1350
        %v2015 = vadd.f32 %v2014, %v1377
        %v2016 = vadd.f32 %v2015, %v1404
        %v2017 = vadd.f32 %v2016, %v1431
        %v2018 = vadd.f32 %v2017, %v1458
        %v2019 = vsel %vm1498, %v1485, 0.0
        %v2020 = vadd.f32 %v2018, %v2019
        %v2021 = vrot.slane %v2020, 4
        %v2022 = vadd.f32 %v2020, %v2021
        %v2023 = vrot.slane %v2022, 2
        %v2024 = vadd.f32 %v2022, %v2023
        %v2025 = vrot.slane %v2024, 1
        %v2026 = vadd.f32 %v2024, %v2025
        %s2027 = sld [smem:[#allocation2]]
        %v2028 = vstv %s2027
        %v2029 = vadd.f32 %v1506, %v2028
        %v2030 = vadd.f32 %v1526, %v2028
        %v2031 = vadd.f32 %v1546, %v2028
        %v2032 = vadd.f32 %v1566, %v2028
        %v2033 = vadd.f32 %v1586, %v2028
        %v2034 = vadd.f32 %v1606, %v2028
        %v2035 = vadd.f32 %v1626, %v2028
        %v2036 = vadd.f32 %v1646, %v2028
        %v2037 = vadd.f32 %v1666, %v2028
        %v2038 = vadd.f32 %v1686, %v2028
        %v2039 = vadd.f32 %v1706, %v2028
        %v2040 = vadd.f32 %v1726, %v2028
        %v2041 = vadd.f32 %v1746, %v2028
        %v2042 = vadd.f32 %v1766, %v2028
        %v2043 = vadd.f32 %v1786, %v2028
        %v2044 = vadd.f32 %v1806, %v2028
        %v2045 = vadd.f32 %v1826, %v2028
        %v2046 = vadd.f32 %v1846, %v2028
        %v2047 = vadd.f32 %v1866, %v2028
        %v2048 = vadd.f32 %v1886, %v2028
        %v2049 = vadd.f32 %v1906, %v2028
        %v2050 = vadd.f32 %v1926, %v2028
        %v2051 = vadd.f32 %v1946, %v2028
        %v2052 = vadd.f32 %v1966, %v2028
        %v2053 = vadd.f32 %v1986, %v2028
        %v2054 = vadd.f32 %v2006, %v2028
        %v2055 = vadd.f32 %v2026, %v2028
        %v2056 = vmax.f32 %v2029, 0.0
        %v2057 = vmax.f32 %v2030, 0.0
        %v2058 = vmax.f32 %v2031, 0.0
        %v2059 = vmax.f32 %v2032, 0.0
        %v2060 = vmax.f32 %v2033, 0.0
        %v2061 = vmax.f32 %v2034, 0.0
        %v2062 = vmax.f32 %v2035, 0.0
        %v2063 = vmax.f32 %v2036, 0.0
        %v2064 = vmax.f32 %v2037, 0.0
        %v2065 = vmax.f32 %v2038, 0.0
        %v2066 = vmax.f32 %v2039, 0.0
        %v2067 = vmax.f32 %v2040, 0.0
        %v2068 = vmax.f32 %v2041, 0.0
        %v2069 = vmax.f32 %v2042, 0.0
        %v2070 = vmax.f32 %v2043, 0.0
        %v2071 = vmax.f32 %v2044, 0.0
        %v2072 = vmax.f32 %v2045, 0.0
        %v2073 = vmax.f32 %v2046, 0.0
        %v2074 = vmax.f32 %v2047, 0.0
        %v2075 = vmax.f32 %v2048, 0.0
        %v2076 = vmax.f32 %v2049, 0.0
        %v2077 = vmax.f32 %v2050, 0.0
        %v2078 = vmax.f32 %v2051, 0.0
        %v2079 = vmax.f32 %v2052, 0.0
        %v2080 = vmax.f32 %v2053, 0.0
        %v2081 = vmax.f32 %v2054, 0.0
        %v2082 = vmax.f32 %v2055, 0.0
        %v2110 = vrot.slane %v2057, 7
        %v2111 = vrot.slane %v2058, 6
        %v2112 = vrot.slane %v2059, 5
        %v2113 = vrot.slane %v2060, 4
        %v2114 = vrot.slane %v2061, 3
        %v2115 = vrot.slane %v2062, 2
        %v2116 = vrot.slane %v2063, 1
        %v2117 = vrot.slane %v2065, 7
        %v2118 = vrot.slane %v2066, 6
        %v2119 = vrot.slane %v2067, 5
        %v2120 = vrot.slane %v2068, 4
        %v2121 = vrot.slane %v2069, 3
        %v2122 = vrot.slane %v2070, 2
        %v2123 = vrot.slane %v2071, 1
        %v2124 = vrot.slane %v2073, 7
        %v2125 = vrot.slane %v2074, 6
        %v2126 = vrot.slane %v2075, 5
        %v2127 = vrot.slane %v2076, 4
        %v2128 = vrot.slane %v2077, 3
        %v2129 = vrot.slane %v2078, 2
        %v2130 = vrot.slane %v2079, 1
        %v2131 = vrot.slane %v2081, 7
        %v2132 = vrot.slane %v2082, 6
        %vm2133 = vcmask 1040384
        %v2134 = vsel %vm2133, %v2056, %v2110
        %vm2135 = vcmask 1042434
        %v2136 = vsel %vm2135, %v2111, %v2112
        %vm2137 = vcmask 1041408
        %v2138 = vsel %vm2137, %v2134, %v2136
        %vm2139 = vcmask 1044484
        %v2140 = vsel %vm2139, %v2113, %v2114
        %vm2141 = vcmask 1046534
        %v2142 = vsel %vm2141, %v2115, %v2116
        %vm2143 = vcmask 1045508
        %v2144 = vsel %vm2143, %v2140, %v2142
        %v2145 = vsel %vm1498, %v2138, %v2144
        %v2146 = vsel %vm2133, %v2064, %v2117
        %v2147 = vsel %vm2135, %v2118, %v2119
        %v2148 = vsel %vm2137, %v2146, %v2147
        %v2149 = vsel %vm2139, %v2120, %v2121
        %v2150 = vsel %vm2141, %v2122, %v2123
        %v2151 = vsel %vm2143, %v2149, %v2150
        %v2152 = vsel %vm1498, %v2148, %v2151
        %v2153 = vsel %vm2133, %v2072, %v2124
        %v2154 = vsel %vm2135, %v2125, %v2126
        %v2155 = vsel %vm2137, %v2153, %v2154
        %v2156 = vsel %vm2139, %v2127, %v2128
        %v2157 = vsel %vm2141, %v2129, %v2130
        %v2158 = vsel %vm2143, %v2156, %v2157
        %v2159 = vsel %vm1498, %v2155, %v2158
        %v2160 = vsel %vm2133, %v2080, %v2131
        %v2161 = vsel %vm2137, %v2160, %v2132
        %2166 = vst [vmem:[%s636] sm:$0xff] %v2145
        %2167 = vst [vmem:[%s636 + $0x8] sm:$0xff] %v2152
        %2168 = vst [vmem:[%s636 + $0x10] sm:$0xff] %v2159
        %v2169 = vlaneseq
        %vm2170 = vcmp.ge.s32.totalorder %v2169, 0
        %vm2171 = vcmp.lt.s32.totalorder %v2169, 384
        %vm2172 = vmand %vm2170, %vm2171
        %2173 = vst.msk [vmem:[%s636 + $0x18] sm:$0x7] %vm2172, %v2161
        %s2174 = sand.u32 %s91, 1
        %s2175 = sand.u32 %s91, 1
        %s2176 = smul.addr %s2175, 27
        %s2177 = scalar_lea.vmem [#allocation4], %s2176
        // Predicated region
        $region99: #{unet_to_regression.2} parent=93 // pred_check
          %p2178 = pneg %p101
        $region100: #{unet_to_regression.2} parent=93 // pred_check_branch
          %2180 = sbr.rel (%p2178) target = $region102
        $region101: #{unet_to_regression.2} parent=93 // pred_region
          %s2181 = smul.u32 27, %s15
          %s2182 = ssub.s32 53, %s2181
          %p2183 = scmp.lt.s32.totalorder %s2182, 27
          %s2184 = scalar_select %p2183, %s2182, 27
          %p2185 = scmp.ne.s32.totalorder 0, %s2184
          %s2186 = scalar_lea.vmem %s3, %s2181
          // Predicated region
          $region103: #{unet_to_regression.2} parent=101 // pred_check
            %p2187 = pneg %p2185
          $region104: #{unet_to_regression.2} parent=101 // pred_check_branch
            %2189 = sbr.rel (%p2187) target = $region106
          $region105: #{unet_to_regression.2} parent=101 // pred_region
            %p2190 = scmp.lt.u32.totalorder %s2184, 8
            %p2191 = pneg %p2190
            // Predicated region
            $region107: #{unet_to_regression.2} parent=105 // pred_check
              _
            $region108: #{unet_to_regression.2} parent=105 // pred_check_branch
              %2193 = sbr.rel (%p2190) target = $region110
            $region109: #{unet_to_regression.2} parent=105 // pred_region
              %s2209 = sand.u32 %s2184, 7
              %p2210 = scmp.eq.s32.totalorder %s2209, 0
              // Predicated region
              $region122: #{unet_to_regression.2} parent=109 // pred_check
                %p2211 = pneg %p2210
              $region123: #{unet_to_regression.2} parent=109 // pred_check_branch
                %2213 = sbr.rel (%p2211) target = $region125
              $region124: #{unet_to_regression.2} parent=109 // pred_region
                %s2214 = sshrl.u32 %s2184, 3
                %s2215 = sshrl.u32 %s2214, 5
                // While loop
                $region126: #{unet_to_regression.2} parent=124 // loop_pre_header
                  _
                $region127: #{unet_to_regression.2} parent=124 // loop_header
                  %s2217 = sphi 0, %s2219
                  %p2218 = scmp.ge.s32.totalorder %s2217, %s2215
                  %s2222 = sphi 0, %s2291
                  %s2223 = sphi %s2177, %s2294
                  %s2224 = sphi %s2186, %s2295
                $region128: #{unet_to_regression.2} parent=124 // loop_header_branch
                  %2221 = sbr.rel (%p2218) target = $region132
                $region129: #{unet_to_regression.2} parent=124 // loop_body
                  %v2225 = vld [vmem:[%s2223] sm:$0xff]
                  %2226 = vst [vmem:[%s2224] sm:$0xff] %v2225
                  %v2227 = vld [vmem:[%s2223 + $0x8] sm:$0xff]
                  %2228 = vst [vmem:[%s2224 + $0x8] sm:$0xff] %v2227
                  %v2229 = vld [vmem:[%s2223 + $0x10] sm:$0xff]
                  %2230 = vst [vmem:[%s2224 + $0x10] sm:$0xff] %v2229
                  %v2231 = vld [vmem:[%s2223 + $0x18] sm:$0xff]
                  %2232 = vst [vmem:[%s2224 + $0x18] sm:$0xff] %v2231
                  %v2233 = vld [vmem:[%s2223 + $0x20] sm:$0xff]
                  %2234 = vst [vmem:[%s2224 + $0x20] sm:$0xff] %v2233
                  %v2235 = vld [vmem:[%s2223 + $0x28] sm:$0xff]
                  %2236 = vst [vmem:[%s2224 + $0x28] sm:$0xff] %v2235
                  %v2237 = vld [vmem:[%s2223 + $0x30] sm:$0xff]
                  %2238 = vst [vmem:[%s2224 + $0x30] sm:$0xff] %v2237
                  %v2239 = vld [vmem:[%s2223 + $0x38] sm:$0xff]
                  %2240 = vst [vmem:[%s2224 + $0x38] sm:$0xff] %v2239
                  %v2241 = vld [vmem:[%s2223 + $0x40] sm:$0xff]
                  %2242 = vst [vmem:[%s2224 + $0x40] sm:$0xff] %v2241
                  %v2243 = vld [vmem:[%s2223 + $0x48] sm:$0xff]
                  %2244 = vst [vmem:[%s2224 + $0x48] sm:$0xff] %v2243
                  %v2245 = vld [vmem:[%s2223 + $0x50] sm:$0xff]
                  %2246 = vst [vmem:[%s2224 + $0x50] sm:$0xff] %v2245
                  %v2247 = vld [vmem:[%s2223 + $0x58] sm:$0xff]
                  %2248 = vst [vmem:[%s2224 + $0x58] sm:$0xff] %v2247
                  %v2249 = vld [vmem:[%s2223 + $0x60] sm:$0xff]
                  %2250 = vst [vmem:[%s2224 + $0x60] sm:$0xff] %v2249
                  %v2251 = vld [vmem:[%s2223 + $0x68] sm:$0xff]
                  %2252 = vst [vmem:[%s2224 + $0x68] sm:$0xff] %v2251
                  %v2253 = vld [vmem:[%s2223 + $0x70] sm:$0xff]
                  %2254 = vst [vmem:[%s2224 + $0x70] sm:$0xff] %v2253
                  %v2255 = vld [vmem:[%s2223 + $0x78] sm:$0xff]
                  %2256 = vst [vmem:[%s2224 + $0x78] sm:$0xff] %v2255
                  %v2257 = vld [vmem:[%s2223 + $0x80] sm:$0xff]
                  %2258 = vst [vmem:[%s2224 + $0x80] sm:$0xff] %v2257
                  %v2259 = vld [vmem:[%s2223 + $0x88] sm:$0xff]
                  %2260 = vst [vmem:[%s2224 + $0x88] sm:$0xff] %v2259
                  %v2261 = vld [vmem:[%s2223 + $0x90] sm:$0xff]
                  %2262 = vst [vmem:[%s2224 + $0x90] sm:$0xff] %v2261
                  %v2263 = vld [vmem:[%s2223 + $0x98] sm:$0xff]
                  %2264 = vst [vmem:[%s2224 + $0x98] sm:$0xff] %v2263
                  %v2265 = vld [vmem:[%s2223 + $0xa0] sm:$0xff]
                  %2266 = vst [vmem:[%s2224 + $0xa0] sm:$0xff] %v2265
                  %v2267 = vld [vmem:[%s2223 + $0xa8] sm:$0xff]
                  %2268 = vst [vmem:[%s2224 + $0xa8] sm:$0xff] %v2267
                  %v2269 = vld [vmem:[%s2223 + $0xb0] sm:$0xff]
                  %2270 = vst [vmem:[%s2224 + $0xb0] sm:$0xff] %v2269
                  %v2271 = vld [vmem:[%s2223 + $0xb8] sm:$0xff]
                  %2272 = vst [vmem:[%s2224 + $0xb8] sm:$0xff] %v2271
                  %v2273 = vld [vmem:[%s2223 + $0xc0] sm:$0xff]
                  %2274 = vst [vmem:[%s2224 + $0xc0] sm:$0xff] %v2273
                  %v2275 = vld [vmem:[%s2223 + $0xc8] sm:$0xff]
                  %2276 = vst [vmem:[%s2224 + $0xc8] sm:$0xff] %v2275
                  %v2277 = vld [vmem:[%s2223 + $0xd0] sm:$0xff]
                  %2278 = vst [vmem:[%s2224 + $0xd0] sm:$0xff] %v2277
                  %v2279 = vld [vmem:[%s2223 + $0xd8] sm:$0xff]
                  %2280 = vst [vmem:[%s2224 + $0xd8] sm:$0xff] %v2279
                  %v2281 = vld [vmem:[%s2223 + $0xe0] sm:$0xff]
                  %2282 = vst [vmem:[%s2224 + $0xe0] sm:$0xff] %v2281
                  %v2283 = vld [vmem:[%s2223 + $0xe8] sm:$0xff]
                  %2284 = vst [vmem:[%s2224 + $0xe8] sm:$0xff] %v2283
                  %v2285 = vld [vmem:[%s2223 + $0xf0] sm:$0xff]
                  %2286 = vst [vmem:[%s2224 + $0xf0] sm:$0xff] %v2285
                  %v2287 = vld [vmem:[%s2223 + $0xf8] sm:$0xff]
                  %2288 = vst [vmem:[%s2224 + $0xf8] sm:$0xff] %v2287
                  %s2289 = sadd.s32 1, %s2222
                  %p2290 = scmp.ge.s32.totalorder %s2289, %s2215
                  %s2291 = scalar_select %p2290, 0, %s2289
                  %s2292 = smul.u32 %s2291, 256
                  %s2293 = smul.u32 %s2291, 256
                  %s2294 = scalar_lea.vmem %s2177, %s2292 [#allocation4]
                  %s2295 = scalar_lea.vmem %s2186, %s2293
                $region130: #{unet_to_regression.2} parent=124 // loop_footer
                  %s2219 = sadd.s32 %s2217, 1
                $region131: #{unet_to_regression.2} parent=124 // loop_footer_branch
                  %2216 = sbr.rel target = $region127
                $region132: #{unet_to_regression.2} parent=124 // loop_exit
                  _
                %s2296 = sshrl.u32 %s2214, 5
                %s2297 = sand.u32 %s2214, 31
                %s2298 = smul.u32 %s2296, 32
                %s2299 = smul.u32 8, %s2298
                %s2300 = scalar_lea.vmem %s2177, %s2299 [#allocation4]
                %s2301 = smul.u32 8, %s2298
                %s2302 = scalar_lea.vmem %s2186, %s2301
                // While loop
                $region133: #{unet_to_regression.2} parent=124 // loop_pre_header
                  _
                $region134: #{unet_to_regression.2} parent=124 // loop_header
                  %s2304 = sphi 0, %s2306
                  %p2305 = scmp.ge.s32.totalorder %s2304, %s2297
                  %s2309 = sphi 0, %s2316
                  %s2310 = sphi %s2300, %s2319
                  %s2311 = sphi %s2302, %s2320
                $region135: #{unet_to_regression.2} parent=124 // loop_header_branch
                  %2308 = sbr.rel (%p2305) target = $region139
                $region136: #{unet_to_regression.2} parent=124 // loop_body
                  %v2312 = vld [vmem:[%s2310] sm:$0xff]
                  %2313 = vst [vmem:[%s2311] sm:$0xff] %v2312
                  %s2314 = sadd.s32 1, %s2309
                  %p2315 = scmp.ge.s32.totalorder %s2314, %s2297
                  %s2316 = scalar_select %p2315, 0, %s2314
                  %s2317 = smul.u32 %s2316, 8
                  %s2318 = smul.u32 %s2316, 8
                  %s2319 = scalar_lea.vmem %s2300, %s2317 [#allocation4]
                  %s2320 = scalar_lea.vmem %s2302, %s2318
                $region137: #{unet_to_regression.2} parent=124 // loop_footer
                  %s2306 = sadd.s32 %s2304, 1
                $region138: #{unet_to_regression.2} parent=124 // loop_footer_branch
                  %2303 = sbr.rel target = $region134
                $region139: #{unet_to_regression.2} parent=124 // loop_exit
                  _
              $region125: #{unet_to_regression.2} parent=109 // pred_fallthru
                _
              %p2321 = pneg %p2210
              // Predicated region
              $region140: #{unet_to_regression.2} parent=109 // pred_check
                _
              $region141: #{unet_to_regression.2} parent=109 // pred_check_branch
                %2323 = sbr.rel (%p2210) target = $region143
              $region142: #{unet_to_regression.2} parent=109 // pred_region
                %s2324 = sand.u32 %s2184, 7
                %s2325 = ssub.s32 %s2184, %s2324
                %s2326 = scalar_lea.vmem %s2177, %s2325 [#allocation4]
                %s2327 = ssub.s32 %s2184, %s2324
                %s2328 = scalar_lea.vmem %s2186, %s2327
                %s2329 = sshrl.u32 %s2184, 3
                %s2330 = sshrl.u32 %s2329, 5
                // While loop
                $region144: #{unet_to_regression.2} parent=142 // loop_pre_header
                  _
                $region145: #{unet_to_regression.2} parent=142 // loop_header
                  %s2332 = sphi 0, %s2334
                  %p2333 = scmp.ge.s32.totalorder %s2332, %s2330
                  %s2337 = sphi 0, %s2406
                  %s2338 = sphi %s2177, %s2409
                  %s2339 = sphi %s2186, %s2410
                $region146: #{unet_to_regression.2} parent=142 // loop_header_branch
                  %2336 = sbr.rel (%p2333) target = $region150
                $region147: #{unet_to_regression.2} parent=142 // loop_body
                  %v2340 = vld [vmem:[%s2338] sm:$0xff]
                  %2341 = vst [vmem:[%s2339] sm:$0xff] %v2340
                  %v2342 = vld [vmem:[%s2338 + $0x8] sm:$0xff]
                  %2343 = vst [vmem:[%s2339 + $0x8] sm:$0xff] %v2342
                  %v2344 = vld [vmem:[%s2338 + $0x10] sm:$0xff]
                  %2345 = vst [vmem:[%s2339 + $0x10] sm:$0xff] %v2344
                  %v2346 = vld [vmem:[%s2338 + $0x18] sm:$0xff]
                  %2347 = vst [vmem:[%s2339 + $0x18] sm:$0xff] %v2346
                  %v2348 = vld [vmem:[%s2338 + $0x20] sm:$0xff]
                  %2349 = vst [vmem:[%s2339 + $0x20] sm:$0xff] %v2348
                  %v2350 = vld [vmem:[%s2338 + $0x28] sm:$0xff]
                  %2351 = vst [vmem:[%s2339 + $0x28] sm:$0xff] %v2350
                  %v2352 = vld [vmem:[%s2338 + $0x30] sm:$0xff]
                  %2353 = vst [vmem:[%s2339 + $0x30] sm:$0xff] %v2352
                  %v2354 = vld [vmem:[%s2338 + $0x38] sm:$0xff]
                  %2355 = vst [vmem:[%s2339 + $0x38] sm:$0xff] %v2354
                  %v2356 = vld [vmem:[%s2338 + $0x40] sm:$0xff]
                  %2357 = vst [vmem:[%s2339 + $0x40] sm:$0xff] %v2356
                  %v2358 = vld [vmem:[%s2338 + $0x48] sm:$0xff]
                  %2359 = vst [vmem:[%s2339 + $0x48] sm:$0xff] %v2358
                  %v2360 = vld [vmem:[%s2338 + $0x50] sm:$0xff]
                  %2361 = vst [vmem:[%s2339 + $0x50] sm:$0xff] %v2360
                  %v2362 = vld [vmem:[%s2338 + $0x58] sm:$0xff]
                  %2363 = vst [vmem:[%s2339 + $0x58] sm:$0xff] %v2362
                  %v2364 = vld [vmem:[%s2338 + $0x60] sm:$0xff]
                  %2365 = vst [vmem:[%s2339 + $0x60] sm:$0xff] %v2364
                  %v2366 = vld [vmem:[%s2338 + $0x68] sm:$0xff]
                  %2367 = vst [vmem:[%s2339 + $0x68] sm:$0xff] %v2366
                  %v2368 = vld [vmem:[%s2338 + $0x70] sm:$0xff]
                  %2369 = vst [vmem:[%s2339 + $0x70] sm:$0xff] %v2368
                  %v2370 = vld [vmem:[%s2338 + $0x78] sm:$0xff]
                  %2371 = vst [vmem:[%s2339 + $0x78] sm:$0xff] %v2370
                  %v2372 = vld [vmem:[%s2338 + $0x80] sm:$0xff]
                  %2373 = vst [vmem:[%s2339 + $0x80] sm:$0xff] %v2372
                  %v2374 = vld [vmem:[%s2338 + $0x88] sm:$0xff]
                  %2375 = vst [vmem:[%s2339 + $0x88] sm:$0xff] %v2374
                  %v2376 = vld [vmem:[%s2338 + $0x90] sm:$0xff]
                  %2377 = vst [vmem:[%s2339 + $0x90] sm:$0xff] %v2376
                  %v2378 = vld [vmem:[%s2338 + $0x98] sm:$0xff]
                  %2379 = vst [vmem:[%s2339 + $0x98] sm:$0xff] %v2378
                  %v2380 = vld [vmem:[%s2338 + $0xa0] sm:$0xff]
                  %2381 = vst [vmem:[%s2339 + $0xa0] sm:$0xff] %v2380
                  %v2382 = vld [vmem:[%s2338 + $0xa8] sm:$0xff]
                  %2383 = vst [vmem:[%s2339 + $0xa8] sm:$0xff] %v2382
                  %v2384 = vld [vmem:[%s2338 + $0xb0] sm:$0xff]
                  %2385 = vst [vmem:[%s2339 + $0xb0] sm:$0xff] %v2384
                  %v2386 = vld [vmem:[%s2338 + $0xb8] sm:$0xff]
                  %2387 = vst [vmem:[%s2339 + $0xb8] sm:$0xff] %v2386
                  %v2388 = vld [vmem:[%s2338 + $0xc0] sm:$0xff]
                  %2389 = vst [vmem:[%s2339 + $0xc0] sm:$0xff] %v2388
                  %v2390 = vld [vmem:[%s2338 + $0xc8] sm:$0xff]
                  %2391 = vst [vmem:[%s2339 + $0xc8] sm:$0xff] %v2390
                  %v2392 = vld [vmem:[%s2338 + $0xd0] sm:$0xff]
                  %2393 = vst [vmem:[%s2339 + $0xd0] sm:$0xff] %v2392
                  %v2394 = vld [vmem:[%s2338 + $0xd8] sm:$0xff]
                  %2395 = vst [vmem:[%s2339 + $0xd8] sm:$0xff] %v2394
                  %v2396 = vld [vmem:[%s2338 + $0xe0] sm:$0xff]
                  %2397 = vst [vmem:[%s2339 + $0xe0] sm:$0xff] %v2396
                  %v2398 = vld [vmem:[%s2338 + $0xe8] sm:$0xff]
                  %2399 = vst [vmem:[%s2339 + $0xe8] sm:$0xff] %v2398
                  %v2400 = vld [vmem:[%s2338 + $0xf0] sm:$0xff]
                  %2401 = vst [vmem:[%s2339 + $0xf0] sm:$0xff] %v2400
                  %v2402 = vld [vmem:[%s2338 + $0xf8] sm:$0xff]
                  %2403 = vst [vmem:[%s2339 + $0xf8] sm:$0xff] %v2402
                  %s2404 = sadd.s32 1, %s2337
                  %p2405 = scmp.ge.s32.totalorder %s2404, %s2330
                  %s2406 = scalar_select %p2405, 0, %s2404
                  %s2407 = smul.u32 %s2406, 256
                  %s2408 = smul.u32 %s2406, 256
                  %s2409 = scalar_lea.vmem %s2177, %s2407 [#allocation4]
                  %s2410 = scalar_lea.vmem %s2186, %s2408
                $region148: #{unet_to_regression.2} parent=142 // loop_footer
                  %s2334 = sadd.s32 %s2332, 1
                $region149: #{unet_to_regression.2} parent=142 // loop_footer_branch
                  %2331 = sbr.rel target = $region145
                $region150: #{unet_to_regression.2} parent=142 // loop_exit
                  _
                %s2411 = sshrl.u32 %s2329, 5
                %s2412 = sand.u32 %s2329, 31
                %s2413 = smul.u32 %s2411, 32
                %s2414 = smul.u32 8, %s2413
                %s2415 = scalar_lea.vmem %s2177, %s2414 [#allocation4]
                %s2416 = smul.u32 8, %s2413
                %s2417 = scalar_lea.vmem %s2186, %s2416
                // While loop
                $region151: #{unet_to_regression.2} parent=142 // loop_pre_header
                  _
                $region152: #{unet_to_regression.2} parent=142 // loop_header
                  %s2419 = sphi 0, %s2421
                  %p2420 = scmp.ge.s32.totalorder %s2419, %s2412
                  %s2424 = sphi 0, %s2431
                  %s2425 = sphi %s2415, %s2434
                  %s2426 = sphi %s2417, %s2435
                $region153: #{unet_to_regression.2} parent=142 // loop_header_branch
                  %2423 = sbr.rel (%p2420) target = $region157
                $region154: #{unet_to_regression.2} parent=142 // loop_body
                  %v2427 = vld [vmem:[%s2425] sm:$0xff]
                  %2428 = vst [vmem:[%s2426] sm:$0xff] %v2427
                  %s2429 = sadd.s32 1, %s2424
                  %p2430 = scmp.ge.s32.totalorder %s2429, %s2412
                  %s2431 = scalar_select %p2430, 0, %s2429
                  %s2432 = smul.u32 %s2431, 8
                  %s2433 = smul.u32 %s2431, 8
                  %s2434 = scalar_lea.vmem %s2415, %s2432 [#allocation4]
                  %s2435 = scalar_lea.vmem %s2417, %s2433
                $region155: #{unet_to_regression.2} parent=142 // loop_footer
                  %s2421 = sadd.s32 %s2419, 1
                $region156: #{unet_to_regression.2} parent=142 // loop_footer_branch
                  %2418 = sbr.rel target = $region152
                $region157: #{unet_to_regression.2} parent=142 // loop_exit
                  _
                %s2436 = sshll.u32 1, %s2324
                %s2437 = ssub.s32 %s2436, 1
                loop: start=0, step=1, limit=1
                $region158: #{unet_to_regression.2} parent=142 // loop_pre_header
                  _
                $region159: #{unet_to_regression.2} parent=142 // loop_header
                  %s2439 = sphi 0, %s2443
                  %p2440 = scmp.ge.s32.totalorder %s2439, 1
                  %s2444 = sphi %s2326, %s2326
                  %s2445 = sphi %s2328, %s2328
                $region160: #{unet_to_regression.2} parent=142 // loop_header_branch
                  %2442 = sbr.rel (%p2440) target = $region164
                $region161: #{unet_to_regression.2} parent=142 // loop_body
                  %v2446 = vld [vmem:[%s2444] sm:%s2437]
                  %2447 = vst [vmem:[%s2445] sm:%s2437] %v2446
                $region162: #{unet_to_regression.2} parent=142 // loop_footer
                  %s2443 = sadd.s32 1, %s2439
                $region163: #{unet_to_regression.2} parent=142 // loop_footer_branch
                  %2438 = sbr.rel target = $region159
                $region164: #{unet_to_regression.2} parent=142 // loop_exit
                  _
              $region143: #{unet_to_regression.2} parent=109 // pred_fallthru
                _
            $region110: #{unet_to_regression.2} parent=105 // pred_fallthru
              _
            // Predicated region
            $region111: #{unet_to_regression.2} parent=105 // pred_check
              %p2194 = pneg %p2190
            $region112: #{unet_to_regression.2} parent=105 // pred_check_branch
              %2196 = sbr.rel (%p2194) target = $region114
            $region113: #{unet_to_regression.2} parent=105 // pred_region
              %s2197 = sshll.u32 1, %s2184
              %s2198 = ssub.s32 %s2197, 1
              loop: start=0, step=1, limit=1
              $region115: #{unet_to_regression.2} parent=113 // loop_pre_header
                _
              $region116: #{unet_to_regression.2} parent=113 // loop_header
                %s2200 = sphi 0, %s2204
                %p2201 = scmp.ge.s32.totalorder %s2200, 1
                %s2205 = sphi %s2177, %s2177
                %s2206 = sphi %s2186, %s2186
              $region117: #{unet_to_regression.2} parent=113 // loop_header_branch
                %2203 = sbr.rel (%p2201) target = $region121
              $region118: #{unet_to_regression.2} parent=113 // loop_body
                %v2207 = vld [vmem:[%s2205] sm:%s2198]
                %2208 = vst [vmem:[%s2206] sm:%s2198] %v2207
              $region119: #{unet_to_regression.2} parent=113 // loop_footer
                %s2204 = sadd.s32 1, %s2200
              $region120: #{unet_to_regression.2} parent=113 // loop_footer_branch
                %2199 = sbr.rel target = $region116
              $region121: #{unet_to_regression.2} parent=113 // loop_exit
                _
            $region114: #{unet_to_regression.2} parent=105 // pred_fallthru
              _
          $region106: #{unet_to_regression.2} parent=101 // pred_fallthru
            _
          %2448 = vnop
        $region102: #{unet_to_regression.2} parent=93 // pred_fallthru
          _
      $region94: #{unet_to_regression.2} parent=5 // pred_fallthru
        _
      %p2449 = scmp.le.s32.totalorder 2, %s10
      // Predicated region
      $region165: #{unet_to_regression.2} parent=5 // pred_check
        %p2450 = pneg %p2449
      $region166: #{unet_to_regression.2} parent=5 // pred_check_branch
        %2452 = sbr.rel (%p2450) target = $region168
      $region167: #{unet_to_regression.2} parent=5 // pred_region
        %s2453 = ssub.s32 %s10, 2
        // Predicated region
        $region169: #{unet_to_regression.2} parent=167 // pred_check
          %p2454 = pneg %p107
        $region170: #{unet_to_regression.2} parent=167 // pred_check_branch
          %2456 = sbr.rel (%p2454) target = $region172
        $region171: #{unet_to_regression.2} parent=167 // pred_region
          %s2457 = sand.u32 %s92, 1
          %s2458 = sand.u32 %s92, 1
          %s2459 = smul.addr %s2458, 27
          %s2460 = scalar_lea.vmem [#allocation4], %s2459
        $region172: #{unet_to_regression.2} parent=167 // pred_fallthru
          _
      $region168: #{unet_to_regression.2} parent=5 // pred_fallthru
        _
    $region6: #{unet_to_regression.2} parent=1 // loop_footer
      %s14 = sadd.s32 1, %s10
    $region7: #{unet_to_regression.2} parent=1 // loop_footer_branch
      %9 = sbr.rel target = $region3
    $region8: #{unet_to_regression.2} parent=1 // loop_exit
      _

// kernel: unet_to_regression.3
$region0: #{unet_to_regression.3}
  #allocation0 [shape = 'u32[]', space=smem, size = 0x4, offset = 0x4, fixed_abs, tag = 'smem constant byte address 0x4 - core index']
  #allocation1 [shape = 'u32[72,128]{1,0:T(1,128)}', space=vmem, size = 0x9000, scoped, tag = 'internal scratch']
  %s0 = inlined_call_operand.vmem [shape: f32[27,2,343], index: 0, kind: input, shape index: {}]
  %s1 = inlined_call_operand.vmem [shape: f32[27,1,1], index: 1, kind: input, shape index: {}]
  %s2 = inlined_call_operand.vmem [shape: f32[343,27], index: 2, kind: input, shape index: {}]
  %s3 = inlined_call_operand.vmem [shape: f32[27,1024], index: 3, kind: input, shape index: {}]
  %s4 = inlined_call_operand.vmem [shape: f32[128,128], index: 4, kind: input, shape index: {}]
  %s5 = inlined_call_operand.vmem [shape: f32[1,128], index: 5, kind: input, shape index: {}]
  %s6 = inlined_call_operand.vmem [shape: f32[1,128], index: 6, kind: input, shape index: {}]
  %s7 = inlined_call_operand.vmem [shape: f32[1,3], index: 7, kind: input, shape index: {}]
  %s8 = inlined_call_operand.vmem [shape: f32[2,1], index: 8, kind: output, shape index: {}]
  %s9 = sld [smem:[#allocation0]]
  $region46: #{unet_to_regression.3} parent=0
    _
  %s11 = ssub.s32 1, %s9
  %s12 = scalar_select 0, %s11, %s9
  $region1: #{unet_to_regression.3} parent=0
    #allocation2 [shape = 'u8[512]{0}', space=smem, size = 0x200, scoped, tag = 'input window, operand 7, single buffered']
    #allocation3 [shape = 's32[1]{0}', space=sflag, size = 0x4, scoped, tag = 'scoped memory for unet_to_regression.3']
    %13 = vsyncpa [#allocation3], 0
    // Predicated region
    $region2: #{unet_to_regression.3} parent=1 // pred_check
      _
    $region3: #{unet_to_regression.3} parent=1 // pred_check_branch
      %15 = sbr.rel (0) target = $region5
    $region4: #{unet_to_regression.3} parent=1 // pred_region
      _
    $region5: #{unet_to_regression.3} parent=1 // pred_fallthru
      _
    // Predicated region
    $region6: #{unet_to_regression.3} parent=1 // pred_check
      _
    $region7: #{unet_to_regression.3} parent=1 // pred_check_branch
      %17 = sbr.rel (0) target = $region9
    $region8: #{unet_to_regression.3} parent=1 // pred_region
      _
    $region9: #{unet_to_regression.3} parent=1 // pred_fallthru
      _
    // Predicated region
    $region10: #{unet_to_regression.3} parent=1 // pred_check
      _
    $region11: #{unet_to_regression.3} parent=1 // pred_check_branch
      %19 = sbr.rel (0) target = $region13
    $region12: #{unet_to_regression.3} parent=1 // pred_region
      _
    $region13: #{unet_to_regression.3} parent=1 // pred_fallthru
      _
    // Predicated region
    $region14: #{unet_to_regression.3} parent=1 // pred_check
      _
    $region15: #{unet_to_regression.3} parent=1 // pred_check_branch
      %21 = sbr.rel (0) target = $region17
    $region16: #{unet_to_regression.3} parent=1 // pred_region
      _
    $region17: #{unet_to_regression.3} parent=1 // pred_fallthru
      _
    // Predicated region
    $region18: #{unet_to_regression.3} parent=1 // pred_check
      _
    $region19: #{unet_to_regression.3} parent=1 // pred_check_branch
      %23 = sbr.rel (0) target = $region21
    $region20: #{unet_to_regression.3} parent=1 // pred_region
      _
    $region21: #{unet_to_regression.3} parent=1 // pred_fallthru
      _
    // Predicated region
    $region22: #{unet_to_regression.3} parent=1 // pred_check
      _
    $region23: #{unet_to_regression.3} parent=1 // pred_check_branch
      %25 = sbr.rel (0) target = $region25
    $region24: #{unet_to_regression.3} parent=1 // pred_region
      _
    $region25: #{unet_to_regression.3} parent=1 // pred_fallthru
      _
    // Predicated region
    $region26: #{unet_to_regression.3} parent=1 // pred_check
      _
    $region27: #{unet_to_regression.3} parent=1 // pred_check_branch
      %27 = sbr.rel (0) target = $region29
    $region28: #{unet_to_regression.3} parent=1 // pred_region
      _
    $region29: #{unet_to_regression.3} parent=1 // pred_fallthru
      _
    // Predicated region
    $region30: #{unet_to_regression.3} parent=1 // pred_check
      _
    $region31: #{unet_to_regression.3} parent=1 // pred_check_branch
      %29 = sbr.rel (0) target = $region33
    $region32: #{unet_to_regression.3} parent=1 // pred_region
      %31 = vsyncadd [#allocation3], 0
      %s33 = sshll.u32 %s7, 4
      %s34 = int_to_ptr.vmem [resolvable:$true] %s33
      %36 = dma.vmem_to_smem %s34, 16, [#allocation2], [#allocation3]
    $region33: #{unet_to_regression.3} parent=1 // pred_fallthru
      _
    // Predicated region
    $region34: #{unet_to_regression.3} parent=1 // pred_check
      _
    $region35: #{unet_to_regression.3} parent=1 // pred_check_branch
      %38 = sbr.rel (0) target = $region37
    $region36: #{unet_to_regression.3} parent=1 // pred_region
      %40 = dma.done [#allocation3], 16
    $region37: #{unet_to_regression.3} parent=1 // pred_fallthru
      _
    %41 = sfence
    %v42 = vld [vmem:[%s0] sm:$0x3f]
    %v43 = vld [vmem:[%s0 + $0x6] sm:$0x3f]
    %v44 = vld [vmem:[%s0 + $0xc] sm:$0x3f]
    %v45 = vld [vmem:[%s0 + $0x12] sm:$0x3f]
    %v46 = vld [vmem:[%s0 + $0x18] sm:$0x3f]
    %v47 = vld [vmem:[%s0 + $0x1e] sm:$0x3f]
    %v48 = vld [vmem:[%s0 + $0x24] sm:$0x3f]
    %v49 = vld [vmem:[%s0 + $0x2a] sm:$0x3f]
    %v50 = vld [vmem:[%s0 + $0x30] sm:$0x3f]
    %v51 = vld [vmem:[%s0 + $0x36] sm:$0x3f]
    %v52 = vld [vmem:[%s0 + $0x3c] sm:$0x3f]
    %v53 = vld [vmem:[%s0 + $0x42] sm:$0x3f]
    %v54 = vld [vmem:[%s0 + $0x48] sm:$0x3f]
    %v55 = vld [vmem:[%s0 + $0x4e] sm:$0x3f]
    %v56 = vld [vmem:[%s0 + $0x54] sm:$0x3f]
    %v57 = vld [vmem:[%s0 + $0x5a] sm:$0x3f]
    %v58 = vld [vmem:[%s0 + $0x60] sm:$0x3f]
    %v59 = vld [vmem:[%s0 + $0x66] sm:$0x3f]
    %v60 = vld [vmem:[%s0 + $0x6c] sm:$0x3f]
    %v61 = vld [vmem:[%s0 + $0x72] sm:$0x3f]
    %v62 = vld [vmem:[%s0 + $0x78] sm:$0x3f]
    %v63 = vld [vmem:[%s0 + $0x7e] sm:$0x3f]
    %v64 = vld [vmem:[%s0 + $0x84] sm:$0x3f]
    %v65 = vld [vmem:[%s0 + $0x8a] sm:$0x3f]
    %v66 = vld [vmem:[%s0 + $0x90] sm:$0x3f]
    %v67 = vld [vmem:[%s0 + $0x96] sm:$0x3f]
    %v68 = vld [vmem:[%s0 + $0x9c] sm:$0x3f]
    %v69 = vld [vmem:[%s1] sm:$0x1]
    %v70 = vld [vmem:[%s1 + $0x1] sm:$0x1]
    %v71 = vld [vmem:[%s1 + $0x2] sm:$0x1]
    %v72 = vld [vmem:[%s1 + $0x3] sm:$0x1]
    %v73 = vld [vmem:[%s1 + $0x4] sm:$0x1]
    %v74 = vld [vmem:[%s1 + $0x5] sm:$0x1]
    %v75 = vld [vmem:[%s1 + $0x6] sm:$0x1]
    %v76 = vld [vmem:[%s1 + $0x7] sm:$0x1]
    %v77 = vld [vmem:[%s1 + $0x8] sm:$0x1]
    %v78 = vld [vmem:[%s1 + $0x9] sm:$0x1]
    %v79 = vld [vmem:[%s1 + $0xa] sm:$0x1]
    %v80 = vld [vmem:[%s1 + $0xb] sm:$0x1]
    %v81 = vld [vmem:[%s1 + $0xc] sm:$0x1]
    %v82 = vld [vmem:[%s1 + $0xd] sm:$0x1]
    %v83 = vld [vmem:[%s1 + $0xe] sm:$0x1]
    %v84 = vld [vmem:[%s1 + $0xf] sm:$0x1]
    %v85 = vld [vmem:[%s1 + $0x10] sm:$0x1]
    %v86 = vld [vmem:[%s1 + $0x11] sm:$0x1]
    %v87 = vld [vmem:[%s1 + $0x12] sm:$0x1]
    %v88 = vld [vmem:[%s1 + $0x13] sm:$0x1]
    %v89 = vld [vmem:[%s1 + $0x14] sm:$0x1]
    %v90 = vld [vmem:[%s1 + $0x15] sm:$0x1]
    %v91 = vld [vmem:[%s1 + $0x16] sm:$0x1]
    %v92 = vld [vmem:[%s1 + $0x17] sm:$0x1]
    %v93 = vld [vmem:[%s1 + $0x18] sm:$0x1]
    %v94 = vld [vmem:[%s1 + $0x19] sm:$0x1]
    %v95 = vld [vmem:[%s1 + $0x1a] sm:$0x1]
    %v123 = vperm.slane %v69, 0
    %v124 = vperm.slane %v70, 0
    %v125 = vperm.slane %v71, 0
    %v126 = vperm.slane %v72, 0
    %v127 = vperm.slane %v73, 0
    %v128 = vperm.slane %v74, 0
    %v129 = vperm.slane %v75, 0
    %v130 = vperm.slane %v76, 0
    %v131 = vperm.slane %v77, 0
    %v132 = vperm.slane %v78, 0
    %v133 = vperm.slane %v79, 0
    %v134 = vperm.slane %v80, 0
    %v135 = vperm.slane %v81, 0
    %v136 = vperm.slane %v82, 0
    %v137 = vperm.slane %v83, 0
    %v138 = vperm.slane %v84, 0
    %v139 = vperm.slane %v85, 0
    %v140 = vperm.slane %v86, 0
    %v141 = vperm.slane %v87, 0
    %v142 = vperm.slane %v88, 0
    %v143 = vperm.slane %v89, 0
    %v144 = vperm.slane %v90, 0
    %v145 = vperm.slane %v91, 0
    %v146 = vperm.slane %v92, 0
    %v147 = vperm.slane %v93, 0
    %v148 = vperm.slane %v94, 0
    %v149 = vperm.slane %v95, 0
    %150 = vset.pattern.permute.xlu0 0
    %151 = vperm.xlu0 %150, %v123
    %v152 = vpop.permute.xlu0 %151
    %154 = vset.pattern.permute.xlu0 0
    %155 = vperm.xlu0 %154, %v124
    %v156 = vpop.permute.xlu0 %155
    %158 = vset.pattern.permute.xlu0 0
    %159 = vperm.xlu0 %158, %v125
    %v160 = vpop.permute.xlu0 %159
    %162 = vset.pattern.permute.xlu0 0
    %163 = vperm.xlu0 %162, %v126
    %v164 = vpop.permute.xlu0 %163
    %166 = vset.pattern.permute.xlu0 0
    %167 = vperm.xlu0 %166, %v127
    %v168 = vpop.permute.xlu0 %167
    %170 = vset.pattern.permute.xlu0 0
    %171 = vperm.xlu0 %170, %v128
    %v172 = vpop.permute.xlu0 %171
    %174 = vset.pattern.permute.xlu0 0
    %175 = vperm.xlu0 %174, %v129
    %v176 = vpop.permute.xlu0 %175
    %178 = vset.pattern.permute.xlu0 0
    %179 = vperm.xlu0 %178, %v130
    %v180 = vpop.permute.xlu0 %179
    %182 = vset.pattern.permute.xlu0 0
    %183 = vperm.xlu0 %182, %v131
    %v184 = vpop.permute.xlu0 %183
    %186 = vset.pattern.permute.xlu0 0
    %187 = vperm.xlu0 %186, %v132
    %v188 = vpop.permute.xlu0 %187
    %190 = vset.pattern.permute.xlu0 0
    %191 = vperm.xlu0 %190, %v133
    %v192 = vpop.permute.xlu0 %191
    %194 = vset.pattern.permute.xlu0 0
    %195 = vperm.xlu0 %194, %v134
    %v196 = vpop.permute.xlu0 %195
    %198 = vset.pattern.permute.xlu0 0
    %199 = vperm.xlu0 %198, %v135
    %v200 = vpop.permute.xlu0 %199
    %202 = vset.pattern.permute.xlu0 0
    %203 = vperm.xlu0 %202, %v136
    %v204 = vpop.permute.xlu0 %203
    %206 = vset.pattern.permute.xlu0 0
    %207 = vperm.xlu0 %206, %v137
    %v208 = vpop.permute.xlu0 %207
    %210 = vset.pattern.permute.xlu0 0
    %211 = vperm.xlu0 %210, %v138
    %v212 = vpop.permute.xlu0 %211
    %214 = vset.pattern.permute.xlu0 0
    %215 = vperm.xlu0 %214, %v139
    %v216 = vpop.permute.xlu0 %215
    %218 = vset.pattern.permute.xlu0 0
    %219 = vperm.xlu0 %218, %v140
    %v220 = vpop.permute.xlu0 %219
    %222 = vset.pattern.permute.xlu0 0
    %223 = vperm.xlu0 %222, %v141
    %v224 = vpop.permute.xlu0 %223
    %226 = vset.pattern.permute.xlu0 0
    %227 = vperm.xlu0 %226, %v142
    %v228 = vpop.permute.xlu0 %227
    %230 = vset.pattern.permute.xlu0 0
    %231 = vperm.xlu0 %230, %v143
    %v232 = vpop.permute.xlu0 %231
    %234 = vset.pattern.permute.xlu0 0
    %235 = vperm.xlu0 %234, %v144
    %v236 = vpop.permute.xlu0 %235
    %238 = vset.pattern.permute.xlu0 0
    %239 = vperm.xlu0 %238, %v145
    %v240 = vpop.permute.xlu0 %239
    %242 = vset.pattern.permute.xlu0 0
    %243 = vperm.xlu0 %242, %v146
    %v244 = vpop.permute.xlu0 %243
    %246 = vset.pattern.permute.xlu0 0
    %247 = vperm.xlu0 %246, %v147
    %v248 = vpop.permute.xlu0 %247
    %250 = vset.pattern.permute.xlu0 0
    %251 = vperm.xlu0 %250, %v148
    %v252 = vpop.permute.xlu0 %251
    %254 = vset.pattern.permute.xlu0 0
    %255 = vperm.xlu0 %254, %v149
    %v256 = vpop.permute.xlu0 %255
    %v258 = vmul.f32 %v42, %v152
    %v259 = vmul.f32 %v43, %v156
    %v260 = vmul.f32 %v44, %v160
    %v261 = vmul.f32 %v45, %v164
    %v262 = vmul.f32 %v46, %v168
    %v263 = vmul.f32 %v47, %v172
    %v264 = vmul.f32 %v48, %v176
    %v265 = vmul.f32 %v49, %v180
    %v266 = vmul.f32 %v50, %v184
    %v267 = vmul.f32 %v51, %v188
    %v268 = vmul.f32 %v52, %v192
    %v269 = vmul.f32 %v53, %v196
    %v270 = vmul.f32 %v54, %v200
    %v271 = vmul.f32 %v55, %v204
    %v272 = vmul.f32 %v56, %v208
    %v273 = vmul.f32 %v57, %v212
    %v274 = vmul.f32 %v58, %v216
    %v275 = vmul.f32 %v59, %v220
    %v276 = vmul.f32 %v60, %v224
    %v277 = vmul.f32 %v61, %v228
    %v278 = vmul.f32 %v62, %v232
    %v279 = vmul.f32 %v63, %v236
    %v280 = vmul.f32 %v64, %v240
    %v281 = vmul.f32 %v65, %v244
    %v282 = vmul.f32 %v66, %v248
    %v283 = vmul.f32 %v67, %v252
    %v284 = vmul.f32 %v68, %v256
    %312 = vst [vmem:[#allocation1] ss:$4 sm:$0xff] %v258
    %v313 = vld.sshfl [vmem:[#allocation1] sm:$0xff pattern:$0x73625140]
    %v314 = vld.sshfl [vmem:[#allocation1 + $0x8] sm:$0xff pattern:$0x73625140]
    %v315 = vld.sshfl [vmem:[#allocation1 + $0x10] sm:$0xff pattern:$0x73625140]
    %s316 = scalar_lea.vmem [#allocation1], 32
    %317 = vst [vmem:[%s316] ss:$4 sm:$0xff] %v259
    %v318 = vld.sshfl [vmem:[#allocation1 + $0x20] sm:$0xff pattern:$0x73625140]
    %v319 = vld.sshfl [vmem:[#allocation1 + $0x28] sm:$0xff pattern:$0x73625140]
    %v320 = vld.sshfl [vmem:[#allocation1 + $0x30] sm:$0xff pattern:$0x73625140]
    %321 = vst [vmem:[#allocation1] ss:$4 sm:$0xff] %v260
    %v322 = vld.sshfl [vmem:[#allocation1] sm:$0xff pattern:$0x73625140]
    %v323 = vld.sshfl [vmem:[#allocation1 + $0x8] sm:$0xff pattern:$0x73625140]
    %v324 = vld.sshfl [vmem:[#allocation1 + $0x10] sm:$0xff pattern:$0x73625140]
    %325 = vst [vmem:[%s316] ss:$4 sm:$0xff] %v261
    %v326 = vld.sshfl [vmem:[#allocation1 + $0x20] sm:$0xff pattern:$0x73625140]
    %v327 = vld.sshfl [vmem:[#allocation1 + $0x28] sm:$0xff pattern:$0x73625140]
    %v328 = vld.sshfl [vmem:[#allocation1 + $0x30] sm:$0xff pattern:$0x73625140]
    %329 = vst [vmem:[#allocation1] ss:$4 sm:$0xff] %v262
    %v330 = vld.sshfl [vmem:[#allocation1] sm:$0xff pattern:$0x73625140]
    %v331 = vld.sshfl [vmem:[#allocation1 + $0x8] sm:$0xff pattern:$0x73625140]
    %v332 = vld.sshfl [vmem:[#allocation1 + $0x10] sm:$0xff pattern:$0x73625140]
    %333 = vst [vmem:[%s316] ss:$4 sm:$0xff] %v263
    %v334 = vld.sshfl [vmem:[#allocation1 + $0x20] sm:$0xff pattern:$0x73625140]
    %v335 = vld.sshfl [vmem:[#allocation1 + $0x28] sm:$0xff pattern:$0x73625140]
    %v336 = vld.sshfl [vmem:[#allocation1 + $0x30] sm:$0xff pattern:$0x73625140]
    %337 = vst [vmem:[#allocation1] ss:$4 sm:$0xff] %v264
    %v338 = vld.sshfl [vmem:[#allocation1] sm:$0xff pattern:$0x73625140]
    %v339 = vld.sshfl [vmem:[#allocation1 + $0x8] sm:$0xff pattern:$0x73625140]
    %v340 = vld.sshfl [vmem:[#allocation1 + $0x10] sm:$0xff pattern:$0x73625140]
    %341 = vst [vmem:[%s316] ss:$4 sm:$0xff] %v265
    %v342 = vld.sshfl [vmem:[#allocation1 + $0x20] sm:$0xff pattern:$0x73625140]
    %v343 = vld.sshfl [vmem:[#allocation1 + $0x28] sm:$0xff pattern:$0x73625140]
    %v344 = vld.sshfl [vmem:[#allocation1 + $0x30] sm:$0xff pattern:$0x73625140]
    %345 = vst [vmem:[#allocation1] ss:$4 sm:$0xff] %v266
    %v346 = vld.sshfl [vmem:[#allocation1] sm:$0xff pattern:$0x73625140]
    %v347 = vld.sshfl [vmem:[#allocation1 + $0x8] sm:$0xff pattern:$0x73625140]
    %v348 = vld.sshfl [vmem:[#allocation1 + $0x10] sm:$0xff pattern:$0x73625140]
    %349 = vst [vmem:[%s316] ss:$4 sm:$0xff] %v267
    %v350 = vld.sshfl [vmem:[#allocation1 + $0x20] sm:$0xff pattern:$0x73625140]
    %v351 = vld.sshfl [vmem:[#allocation1 + $0x28] sm:$0xff pattern:$0x73625140]
    %v352 = vld.sshfl [vmem:[#allocation1 + $0x30] sm:$0xff pattern:$0x73625140]
    %353 = vst [vmem:[#allocation1] ss:$4 sm:$0xff] %v268
    %v354 = vld.sshfl [vmem:[#allocation1] sm:$0xff pattern:$0x73625140]
    %v355 = vld.sshfl [vmem:[#allocation1 + $0x8] sm:$0xff pattern:$0x73625140]
    %v356 = vld.sshfl [vmem:[#allocation1 + $0x10] sm:$0xff pattern:$0x73625140]
    %357 = vst [vmem:[%s316] ss:$4 sm:$0xff] %v269
    %v358 = vld.sshfl [vmem:[#allocation1 + $0x20] sm:$0xff pattern:$0x73625140]
    %v359 = vld.sshfl [vmem:[#allocation1 + $0x28] sm:$0xff pattern:$0x73625140]
    %v360 = vld.sshfl [vmem:[#allocation1 + $0x30] sm:$0xff pattern:$0x73625140]
    %361 = vst [vmem:[#allocation1] ss:$4 sm:$0xff] %v270
    %v362 = vld.sshfl [vmem:[#allocation1] sm:$0xff pattern:$0x73625140]
    %v363 = vld.sshfl [vmem:[#allocation1 + $0x8] sm:$0xff pattern:$0x73625140]
    %v364 = vld.sshfl [vmem:[#allocation1 + $0x10] sm:$0xff pattern:$0x73625140]
    %365 = vst [vmem:[%s316] ss:$4 sm:$0xff] %v271
    %v366 = vld.sshfl [vmem:[#allocation1 + $0x20] sm:$0xff pattern:$0x73625140]
    %v367 = vld.sshfl [vmem:[#allocation1 + $0x28] sm:$0xff pattern:$0x73625140]
    %v368 = vld.sshfl [vmem:[#allocation1 + $0x30] sm:$0xff pattern:$0x73625140]
    %369 = vst [vmem:[#allocation1] ss:$4 sm:$0xff] %v272
    %v370 = vld.sshfl [vmem:[#allocation1] sm:$0xff pattern:$0x73625140]
    %v371 = vld.sshfl [vmem:[#allocation1 + $0x8] sm:$0xff pattern:$0x73625140]
    %v372 = vld.sshfl [vmem:[#allocation1 + $0x10] sm:$0xff pattern:$0x73625140]
    %373 = vst [vmem:[%s316] ss:$4 sm:$0xff] %v273
    %v374 = vld.sshfl [vmem:[#allocation1 + $0x20] sm:$0xff pattern:$0x73625140]
    %v375 = vld.sshfl [vmem:[#allocation1 + $0x28] sm:$0xff pattern:$0x73625140]
    %v376 = vld.sshfl [vmem:[#allocation1 + $0x30] sm:$0xff pattern:$0x73625140]
    %377 = vst [vmem:[#allocation1] ss:$4 sm:$0xff] %v274
    %v378 = vld.sshfl [vmem:[#allocation1] sm:$0xff pattern:$0x73625140]
    %v379 = vld.sshfl [vmem:[#allocation1 + $0x8] sm:$0xff pattern:$0x73625140]
    %v380 = vld.sshfl [vmem:[#allocation1 + $0x10] sm:$0xff pattern:$0x73625140]
    %381 = vst [vmem:[%s316] ss:$4 sm:$0xff] %v275
    %v382 = vld.sshfl [vmem:[#allocation1 + $0x20] sm:$0xff pattern:$0x73625140]
    %v383 = vld.sshfl [vmem:[#allocation1 + $0x28] sm:$0xff pattern:$0x73625140]
    %v384 = vld.sshfl [vmem:[#allocation1 + $0x30] sm:$0xff pattern:$0x73625140]
    %385 = vst [vmem:[#allocation1] ss:$4 sm:$0xff] %v276
    %v386 = vld.sshfl [vmem:[#allocation1] sm:$0xff pattern:$0x73625140]
    %v387 = vld.sshfl [vmem:[#allocation1 + $0x8] sm:$0xff pattern:$0x73625140]
    %v388 = vld.sshfl [vmem:[#allocation1 + $0x10] sm:$0xff pattern:$0x73625140]
    %389 = vst [vmem:[%s316] ss:$4 sm:$0xff] %v277
    %v390 = vld.sshfl [vmem:[#allocation1 + $0x20] sm:$0xff pattern:$0x73625140]
    %v391 = vld.sshfl [vmem:[#allocation1 + $0x28] sm:$0xff pattern:$0x73625140]
    %v392 = vld.sshfl [vmem:[#allocation1 + $0x30] sm:$0xff pattern:$0x73625140]
    %393 = vst [vmem:[#allocation1] ss:$4 sm:$0xff] %v278
    %v394 = vld.sshfl [vmem:[#allocation1] sm:$0xff pattern:$0x73625140]
    %v395 = vld.sshfl [vmem:[#allocation1 + $0x8] sm:$0xff pattern:$0x73625140]
    %v396 = vld.sshfl [vmem:[#allocation1 + $0x10] sm:$0xff pattern:$0x73625140]
    %397 = vst [vmem:[%s316] ss:$4 sm:$0xff] %v279
    %v398 = vld.sshfl [vmem:[#allocation1 + $0x20] sm:$0xff pattern:$0x73625140]
    %v399 = vld.sshfl [vmem:[#allocation1 + $0x28] sm:$0xff pattern:$0x73625140]
    %v400 = vld.sshfl [vmem:[#allocation1 + $0x30] sm:$0xff pattern:$0x73625140]
    %401 = vst [vmem:[#allocation1] ss:$4 sm:$0xff] %v280
    %v402 = vld.sshfl [vmem:[#allocation1] sm:$0xff pattern:$0x73625140]
    %v403 = vld.sshfl [vmem:[#allocation1 + $0x8] sm:$0xff pattern:$0x73625140]
    %v404 = vld.sshfl [vmem:[#allocation1 + $0x10] sm:$0xff pattern:$0x73625140]
    %405 = vst [vmem:[%s316] ss:$4 sm:$0xff] %v281
    %v406 = vld.sshfl [vmem:[#allocation1 + $0x20] sm:$0xff pattern:$0x73625140]
    %v407 = vld.sshfl [vmem:[#allocation1 + $0x28] sm:$0xff pattern:$0x73625140]
    %v408 = vld.sshfl [vmem:[#allocation1 + $0x30] sm:$0xff pattern:$0x73625140]
    %409 = vst [vmem:[#allocation1] ss:$4 sm:$0xff] %v282
    %v410 = vld.sshfl [vmem:[#allocation1] sm:$0xff pattern:$0x73625140]
    %v411 = vld.sshfl [vmem:[#allocation1 + $0x8] sm:$0xff pattern:$0x73625140]
    %v412 = vld.sshfl [vmem:[#allocation1 + $0x10] sm:$0xff pattern:$0x73625140]
    %413 = vst [vmem:[%s316] ss:$4 sm:$0xff] %v283
    %v414 = vld.sshfl [vmem:[#allocation1 + $0x20] sm:$0xff pattern:$0x73625140]
    %v415 = vld.sshfl [vmem:[#allocation1 + $0x28] sm:$0xff pattern:$0x73625140]
    %v416 = vld.sshfl [vmem:[#allocation1 + $0x30] sm:$0xff pattern:$0x73625140]
    %417 = vst [vmem:[#allocation1] ss:$4 sm:$0xff] %v284
    %v418 = vld.sshfl [vmem:[#allocation1] sm:$0xff pattern:$0x73625140]
    %v419 = vld.sshfl [vmem:[#allocation1 + $0x8] sm:$0xff pattern:$0x73625140]
    %v420 = vld.sshfl [vmem:[#allocation1 + $0x10] sm:$0xff pattern:$0x73625140]
    %vm502 = vcmask 1041408
    %v503 = vsel %vm502, %v313, 0.0
    %v504 = vsel %vm502, %v318, 0.0
    %v505 = vadd.f32 %v503, %v504
    %v506 = vsel %vm502, %v322, 0.0
    %v507 = vadd.f32 %v505, %v506
    %v508 = vsel %vm502, %v326, 0.0
    %v509 = vadd.f32 %v507, %v508
    %v510 = vsel %vm502, %v330, 0.0
    %v511 = vadd.f32 %v509, %v510
    %v512 = vsel %vm502, %v334, 0.0
    %v513 = vadd.f32 %v511, %v512
    %v514 = vsel %vm502, %v338, 0.0
    %v515 = vadd.f32 %v513, %v514
    %v516 = vsel %vm502, %v342, 0.0
    %v517 = vadd.f32 %v515, %v516
    %v518 = vsel %vm502, %v346, 0.0
    %v519 = vadd.f32 %v517, %v518
    %v520 = vsel %vm502, %v350, 0.0
    %v521 = vadd.f32 %v519, %v520
    %v522 = vsel %vm502, %v354, 0.0
    %v523 = vadd.f32 %v521, %v522
    %v524 = vsel %vm502, %v358, 0.0
    %v525 = vadd.f32 %v523, %v524
    %v526 = vsel %vm502, %v362, 0.0
    %v527 = vadd.f32 %v525, %v526
    %v528 = vsel %vm502, %v366, 0.0
    %v529 = vadd.f32 %v527, %v528
    %v530 = vsel %vm502, %v370, 0.0
    %v531 = vadd.f32 %v529, %v530
    %v532 = vsel %vm502, %v374, 0.0
    %v533 = vadd.f32 %v531, %v532
    %v534 = vsel %vm502, %v378, 0.0
    %v535 = vadd.f32 %v533, %v534
    %v536 = vsel %vm502, %v382, 0.0
    %v537 = vadd.f32 %v535, %v536
    %v538 = vsel %vm502, %v386, 0.0
    %v539 = vadd.f32 %v537, %v538
    %v540 = vsel %vm502, %v390, 0.0
    %v541 = vadd.f32 %v539, %v540
    %v542 = vsel %vm502, %v394, 0.0
    %v543 = vadd.f32 %v541, %v542
    %v544 = vsel %vm502, %v398, 0.0
    %v545 = vadd.f32 %v543, %v544
    %v546 = vsel %vm502, %v402, 0.0
    %v547 = vadd.f32 %v545, %v546
    %v548 = vsel %vm502, %v406, 0.0
    %v549 = vadd.f32 %v547, %v548
    %v550 = vsel %vm502, %v410, 0.0
    %v551 = vadd.f32 %v549, %v550
    %v552 = vsel %vm502, %v414, 0.0
    %v553 = vadd.f32 %v551, %v552
    %v554 = vsel %vm502, %v418, 0.0
    %v555 = vadd.f32 %v553, %v554
    %v556 = vsel %vm502, %v314, 0.0
    %v557 = vsel %vm502, %v319, 0.0
    %v558 = vadd.f32 %v556, %v557
    %v559 = vsel %vm502, %v323, 0.0
    %v560 = vadd.f32 %v558, %v559
    %v561 = vsel %vm502, %v327, 0.0
    %v562 = vadd.f32 %v560, %v561
    %v563 = vsel %vm502, %v331, 0.0
    %v564 = vadd.f32 %v562, %v563
    %v565 = vsel %vm502, %v335, 0.0
    %v566 = vadd.f32 %v564, %v565
    %v567 = vsel %vm502, %v339, 0.0
    %v568 = vadd.f32 %v566, %v567
    %v569 = vsel %vm502, %v343, 0.0
    %v570 = vadd.f32 %v568, %v569
    %v571 = vsel %vm502, %v347, 0.0
    %v572 = vadd.f32 %v570, %v571
    %v573 = vsel %vm502, %v351, 0.0
    %v574 = vadd.f32 %v572, %v573
    %v575 = vsel %vm502, %v355, 0.0
    %v576 = vadd.f32 %v574, %v575
    %v577 = vsel %vm502, %v359, 0.0
    %v578 = vadd.f32 %v576, %v577
    %v579 = vsel %vm502, %v363, 0.0
    %v580 = vadd.f32 %v578, %v579
    %v581 = vsel %vm502, %v367, 0.0
    %v582 = vadd.f32 %v580, %v581
    %v583 = vsel %vm502, %v371, 0.0
    %v584 = vadd.f32 %v582, %v583
    %v585 = vsel %vm502, %v375, 0.0
    %v586 = vadd.f32 %v584, %v585
    %v587 = vsel %vm502, %v379, 0.0
    %v588 = vadd.f32 %v586, %v587
    %v589 = vsel %vm502, %v383, 0.0
    %v590 = vadd.f32 %v588, %v589
    %v591 = vsel %vm502, %v387, 0.0
    %v592 = vadd.f32 %v590, %v591
    %v593 = vsel %vm502, %v391, 0.0
    %v594 = vadd.f32 %v592, %v593
    %v595 = vsel %vm502, %v395, 0.0
    %v596 = vadd.f32 %v594, %v595
    %v597 = vsel %vm502, %v399, 0.0
    %v598 = vadd.f32 %v596, %v597
    %v599 = vsel %vm502, %v403, 0.0
    %v600 = vadd.f32 %v598, %v599
    %v601 = vsel %vm502, %v407, 0.0
    %v602 = vadd.f32 %v600, %v601
    %v603 = vsel %vm502, %v411, 0.0
    %v604 = vadd.f32 %v602, %v603
    %v605 = vsel %vm502, %v415, 0.0
    %v606 = vadd.f32 %v604, %v605
    %v607 = vsel %vm502, %v419, 0.0
    %v608 = vadd.f32 %v606, %v607
    %vm609 = vcmask 705536
    %v610 = vsel %vm609, %v315, 0.0
    %v611 = vsel %vm609, %v320, 0.0
    %v612 = vadd.f32 %v610, %v611
    %v613 = vsel %vm609, %v324, 0.0
    %v614 = vadd.f32 %v612, %v613
    %v615 = vsel %vm609, %v328, 0.0
    %v616 = vadd.f32 %v614, %v615
    %v617 = vsel %vm609, %v332, 0.0
    %v618 = vadd.f32 %v616, %v617
    %v619 = vsel %vm609, %v336, 0.0
    %v620 = vadd.f32 %v618, %v619
    %v621 = vsel %vm609, %v340, 0.0
    %v622 = vadd.f32 %v620, %v621
    %v623 = vsel %vm609, %v344, 0.0
    %v624 = vadd.f32 %v622, %v623
    %v625 = vsel %vm609, %v348, 0.0
    %v626 = vadd.f32 %v624, %v625
    %v627 = vsel %vm609, %v352, 0.0
    %v628 = vadd.f32 %v626, %v627
    %v629 = vsel %vm609, %v356, 0.0
    %v630 = vadd.f32 %v628, %v629
    %v631 = vsel %vm609, %v360, 0.0
    %v632 = vadd.f32 %v630, %v631
    %v633 = vsel %vm609, %v364, 0.0
    %v634 = vadd.f32 %v632, %v633
    %v635 = vsel %vm609, %v368, 0.0
    %v636 = vadd.f32 %v634, %v635
    %v637 = vsel %vm609, %v372, 0.0
    %v638 = vadd.f32 %v636, %v637
    %v639 = vsel %vm609, %v376, 0.0
    %v640 = vadd.f32 %v638, %v639
    %v641 = vsel %vm609, %v380, 0.0
    %v642 = vadd.f32 %v640, %v641
    %v643 = vsel %vm609, %v384, 0.0
    %v644 = vadd.f32 %v642, %v643
    %v645 = vsel %vm609, %v388, 0.0
    %v646 = vadd.f32 %v644, %v645
    %v647 = vsel %vm609, %v392, 0.0
    %v648 = vadd.f32 %v646, %v647
    %v649 = vsel %vm609, %v396, 0.0
    %v650 = vadd.f32 %v648, %v649
    %v651 = vsel %vm609, %v400, 0.0
    %v652 = vadd.f32 %v650, %v651
    %v653 = vsel %vm609, %v404, 0.0
    %v654 = vadd.f32 %v652, %v653
    %v655 = vsel %vm609, %v408, 0.0
    %v656 = vadd.f32 %v654, %v655
    %v657 = vsel %vm609, %v412, 0.0
    %v658 = vadd.f32 %v656, %v657
    %v659 = vsel %vm609, %v416, 0.0
    %v660 = vadd.f32 %v658, %v659
    %v661 = vsel %vm609, %v420, 0.0
    %v662 = vadd.f32 %v660, %v661
    %s663 = sld [smem:[#allocation2]]
    %v664 = vstv %s663
    %v665 = vadd.f32 %v555, %v664
    %v666 = vadd.f32 %v608, %v664
    %v667 = vadd.f32 %v662, %v664
    %v668 = vmax.f32 %v665, 0.0
    %v669 = vmax.f32 %v666, 0.0
    %v670 = vmax.f32 %v667, 0.0
    %v671 = vld [vmem:[%s2] sm:$0xff]
    %v672 = vld [vmem:[%s2 + $0x8] sm:$0xff]
    %v673 = vld [vmem:[%s2 + $0x10] sm:$0xff]
    %v674 = vld [vmem:[%s2 + $0x18] sm:$0xff]
    %v675 = vld [vmem:[%s2 + $0x20] sm:$0xff]
    %v676 = vld [vmem:[%s2 + $0x28] sm:$0xff]
    %v677 = vld [vmem:[%s2 + $0x30] sm:$0xff]
    %v678 = vld [vmem:[%s2 + $0x38] sm:$0xff]
    %v679 = vld [vmem:[%s2 + $0x40] sm:$0xff]
    %v680 = vld [vmem:[%s2 + $0x48] sm:$0xff]
    %v681 = vld [vmem:[%s2 + $0x50] sm:$0xff]
    %v682 = vld [vmem:[%s2 + $0x58] sm:$0xff]
    %v683 = vld [vmem:[%s2 + $0x60] sm:$0xff]
    %v684 = vld [vmem:[%s2 + $0x68] sm:$0xff]
    %v685 = vld [vmem:[%s2 + $0x70] sm:$0xff]
    %v686 = vld [vmem:[%s2 + $0x78] sm:$0xff]
    %v687 = vld [vmem:[%s2 + $0x80] sm:$0xff]
    %v688 = vld [vmem:[%s2 + $0x88] sm:$0xff]
    %v689 = vld [vmem:[%s2 + $0x90] sm:$0xff]
    %v690 = vld [vmem:[%s2 + $0x98] sm:$0xff]
    %v691 = vld [vmem:[%s2 + $0xa0] sm:$0xff]
    %v692 = vld [vmem:[%s2 + $0xa8] sm:$0xff]
    %v693 = vld [vmem:[%s2 + $0xb0] sm:$0xff]
    %v694 = vld [vmem:[%s2 + $0xb8] sm:$0xff]
    %v695 = vld [vmem:[%s2 + $0xc0] sm:$0xff]
    %v696 = vld [vmem:[%s2 + $0xc8] sm:$0xff]
    %v697 = vld [vmem:[%s2 + $0xd0] sm:$0xff]
    %v698 = vld [vmem:[%s2 + $0xd8] sm:$0xff]
    %v699 = vld [vmem:[%s2 + $0xe0] sm:$0xff]
    %v700 = vld [vmem:[%s2 + $0xe8] sm:$0xff]
    %v701 = vld [vmem:[%s2 + $0xf0] sm:$0xff]
    %v702 = vld [vmem:[%s2 + $0xf8] sm:$0xff]
    %v703 = vld [vmem:[%s2 + $0x100] sm:$0xff]
    %v704 = vld [vmem:[%s2 + $0x108] sm:$0xff]
    %v705 = vld [vmem:[%s2 + $0x110] sm:$0xff]
    %v706 = vld [vmem:[%s2 + $0x118] sm:$0xff]
    %v707 = vld [vmem:[%s2 + $0x120] sm:$0xff]
    %v708 = vld [vmem:[%s2 + $0x128] sm:$0xff]
    %v709 = vld [vmem:[%s2 + $0x130] sm:$0xff]
    %v710 = vld [vmem:[%s2 + $0x138] sm:$0xff]
    %v711 = vld [vmem:[%s2 + $0x140] sm:$0xff]
    %v712 = vld [vmem:[%s2 + $0x148] sm:$0xff]
    %v713 = vld [vmem:[%s2 + $0x150] sm:$0x7f]
    %s714 = sld [smem:[#allocation2 + $0x1]]
    %v715 = vstv %s714
    %vm716 = vcmask 711680
    %v718 = vsel %vm716, %v670, 0
    %vm720 = vcmask 1046528
    %v722 = vsel %vm720, %v713, 0
    %724 = vmatpush.msra.mxu0 %v686
    %725 = vmatpush.msra.mxu0 %v685
    %726 = vmatpush.msra.mxu0 %v684
    %727 = vmatpush.msra.mxu0 %v683
    %728 = vmatpush.msra.mxu0 %v682
    %729 = vmatpush.msra.mxu0 %v681
    %730 = vmatpush.msra.mxu0 %v680
    %731 = vmatpush.msra.mxu0 %v679
    %732 = vmatpush.msra.mxu0 %v678
    %733 = vmatpush.msra.mxu0 %v677
    %734 = vmatpush.msra.mxu0 %v676
    %735 = vmatpush.msra.mxu0 %v675
    %736 = vmatpush.msra.mxu0 %v674
    %737 = vmatpush.msra.mxu0 %v673
    %738 = vmatpush.msra.mxu0 %v672
    %739 = vmatpush.msra.mxu0 %v671
    %740 = vmatmul.f32.gmra.mxu0 %v668
    %v741 = vpop.f32.mrf.mxu0
    %v742 = vadd.f32 %v715, %v741
    %743 = vdwg.mxu0
    %744 = vmatpush.msra.mxu0 %v702
    %745 = vmatpush.msra.mxu0 %v701
    %746 = vmatpush.msra.mxu0 %v700
    %747 = vmatpush.msra.mxu0 %v699
    %748 = vmatpush.msra.mxu0 %v698
    %749 = vmatpush.msra.mxu0 %v697
    %750 = vmatpush.msra.mxu0 %v696
    %751 = vmatpush.msra.mxu0 %v695
    %752 = vmatpush.msra.mxu0 %v694
    %753 = vmatpush.msra.mxu0 %v693
    %754 = vmatpush.msra.mxu0 %v692
    %755 = vmatpush.msra.mxu0 %v691
    %756 = vmatpush.msra.mxu0 %v690
    %757 = vmatpush.msra.mxu0 %v689
    %758 = vmatpush.msra.mxu0 %v688
    %759 = vmatpush.msra.mxu0 %v687
    %760 = vmatmul.f32.gmra.mxu0 %v669
    %v761 = vpop.f32.mrf.mxu0
    %v762 = vadd.f32 %v742, %v761
    %763 = vdwg.mxu0
    %764 = vmatpush.msra.mxu0 0.0
    %765 = vmatpush.msra.mxu0 0.0
    %766 = vmatpush.msra.mxu0 0.0
    %767 = vmatpush.msra.mxu0 0.0
    %768 = vmatpush.msra.mxu0 0.0
    %769 = vmatpush.msra.mxu0 %v722
    %770 = vmatpush.msra.mxu0 %v712
    %771 = vmatpush.msra.mxu0 %v711
    %772 = vmatpush.msra.mxu0 %v710
    %773 = vmatpush.msra.mxu0 %v709
    %774 = vmatpush.msra.mxu0 %v708
    %775 = vmatpush.msra.mxu0 %v707
    %776 = vmatpush.msra.mxu0 %v706
    %777 = vmatpush.msra.mxu0 %v705
    %778 = vmatpush.msra.mxu0 %v704
    %779 = vmatpush.msra.mxu0 %v703
    %780 = vmatmul.f32.gmra.mxu0 %v718
    %v781 = vpop.f32.mrf.mxu0
    %v782 = vadd.f32 %v762, %v781
    %783 = vdwg.mxu0
    %v784 = vmax.f32 %v782, 0.0
    %v785 = vld [vmem:[%s3] sm:$0xff]
    %v786 = vld [vmem:[%s3 + $0x8] sm:$0xff]
    %v787 = vld [vmem:[%s3 + $0x10] sm:$0xff]
    %v788 = vld [vmem:[%s3 + $0x18] sm:$0xff]
    %v789 = vld [vmem:[%s3 + $0x20] sm:$0xff]
    %v790 = vld [vmem:[%s3 + $0x28] sm:$0xff]
    %v791 = vld [vmem:[%s3 + $0x30] sm:$0xff]
    %v792 = vld [vmem:[%s3 + $0x38] sm:$0xff]
    %v793 = vld [vmem:[%s3 + $0x40] sm:$0xff]
    %v794 = vld [vmem:[%s3 + $0x48] sm:$0xff]
    %v795 = vld [vmem:[%s3 + $0x50] sm:$0xff]
    %v796 = vld [vmem:[%s3 + $0x58] sm:$0xff]
    %v797 = vld [vmem:[%s3 + $0x60] sm:$0xff]
    %v798 = vld [vmem:[%s3 + $0x68] sm:$0xff]
    %v799 = vld [vmem:[%s3 + $0x70] sm:$0xff]
    %v800 = vld [vmem:[%s3 + $0x78] sm:$0xff]
    %v801 = vld [vmem:[%s3 + $0x80] sm:$0xff]
    %v802 = vld [vmem:[%s3 + $0x88] sm:$0xff]
    %v803 = vld [vmem:[%s3 + $0x90] sm:$0xff]
    %v804 = vld [vmem:[%s3 + $0x98] sm:$0xff]
    %v805 = vld [vmem:[%s3 + $0xa0] sm:$0xff]
    %v806 = vld [vmem:[%s3 + $0xa8] sm:$0xff]
    %v807 = vld [vmem:[%s3 + $0xb0] sm:$0xff]
    %v808 = vld [vmem:[%s3 + $0xb8] sm:$0xff]
    %v809 = vld [vmem:[%s3 + $0xc0] sm:$0x7]
    %v810 = vld [vmem:[%s3 + $0xc8] sm:$0x7]
    %v811 = vld [vmem:[%s3 + $0xd0] sm:$0x7]
    %v812 = vld [vmem:[%s3 + $0xd8] sm:$0x7]
    %v813 = vld [vmem:[%s3 + $0xe0] sm:$0x7]
    %v814 = vld [vmem:[%s3 + $0xe8] sm:$0x7]
    %v815 = vld [vmem:[%s3 + $0xf0] sm:$0x7]
    %v816 = vld [vmem:[%s3 + $0xf8] sm:$0x7]
    %vm817 = vcmask 220160
    %v819 = vsel %vm817, %v784, 0
    %vm821 = vcmask 1042432
    %v823 = vsel %vm821, %v809, 0
    %v826 = vsel %vm821, %v810, 0
    %v829 = vsel %vm821, %v811, 0
    %v832 = vsel %vm821, %v812, 0
    %v835 = vsel %vm821, %v813, 0
    %v838 = vsel %vm821, %v814, 0
    %v841 = vsel %vm821, %v815, 0
    %v844 = vsel %vm821, %v816, 0
    %846 = vmatpush.msra.mxu0 0.0
    %847 = vmatpush.msra.mxu0 0.0
    %848 = vmatpush.msra.mxu0 0.0
    %849 = vmatpush.msra.mxu0 0.0
    %850 = vmatpush.msra.mxu0 0.0
    %851 = vmatpush.msra.mxu0 0.0
    %852 = vmatpush.msra.mxu0 0.0
    %853 = vmatpush.msra.mxu0 0.0
    %854 = vmatpush.msra.mxu0 0.0
    %855 = vmatpush.msra.mxu0 0.0
    %856 = vmatpush.msra.mxu0 0.0
    %857 = vmatpush.msra.mxu0 0.0
    %858 = vmatpush.msra.mxu0 %v823
    %859 = vmatpush.msra.mxu0 %v801
    %860 = vmatpush.msra.mxu0 %v793
    %861 = vmatpush.msra.mxu0 %v785
    %862 = vmatmul.f32.gmra.mxu0 %v819
    %v863 = vpop.f32.mrf.mxu0
    %v864 = vadd.f32 0.0, %v863
    %865 = vdwg.mxu0
    %866 = vmatpush.msra.mxu0 0.0
    %867 = vmatpush.msra.mxu0 0.0
    %868 = vmatpush.msra.mxu0 0.0
    %869 = vmatpush.msra.mxu0 0.0
    %870 = vmatpush.msra.mxu0 0.0
    %871 = vmatpush.msra.mxu0 0.0
    %872 = vmatpush.msra.mxu0 0.0
    %873 = vmatpush.msra.mxu0 0.0
    %874 = vmatpush.msra.mxu0 0.0
    %875 = vmatpush.msra.mxu0 0.0
    %876 = vmatpush.msra.mxu0 0.0
    %877 = vmatpush.msra.mxu0 0.0
    %878 = vmatpush.msra.mxu0 %v826
    %879 = vmatpush.msra.mxu0 %v802
    %880 = vmatpush.msra.mxu0 %v794
    %881 = vmatpush.msra.mxu0 %v786
    %882 = vmatmul.f32.gmra.mxu0 %v819
    %v883 = vpop.f32.mrf.mxu0
    %v884 = vadd.f32 0.0, %v883
    %885 = vdwg.mxu0
    %886 = vmatpush.msra.mxu0 0.0
    %887 = vmatpush.msra.mxu0 0.0
    %888 = vmatpush.msra.mxu0 0.0
    %889 = vmatpush.msra.mxu0 0.0
    %890 = vmatpush.msra.mxu0 0.0
    %891 = vmatpush.msra.mxu0 0.0
    %892 = vmatpush.msra.mxu0 0.0
    %893 = vmatpush.msra.mxu0 0.0
    %894 = vmatpush.msra.mxu0 0.0
    %895 = vmatpush.msra.mxu0 0.0
    %896 = vmatpush.msra.mxu0 0.0
    %897 = vmatpush.msra.mxu0 0.0
    %898 = vmatpush.msra.mxu0 %v829
    %899 = vmatpush.msra.mxu0 %v803
    %900 = vmatpush.msra.mxu0 %v795
    %901 = vmatpush.msra.mxu0 %v787
    %902 = vmatmul.f32.gmra.mxu0 %v819
    %v903 = vpop.f32.mrf.mxu0
    %v904 = vadd.f32 0.0, %v903
    %905 = vdwg.mxu0
    %906 = vmatpush.msra.mxu0 0.0
    %907 = vmatpush.msra.mxu0 0.0
    %908 = vmatpush.msra.mxu0 0.0
    %909 = vmatpush.msra.mxu0 0.0
    %910 = vmatpush.msra.mxu0 0.0
    %911 = vmatpush.msra.mxu0 0.0
    %912 = vmatpush.msra.mxu0 0.0
    %913 = vmatpush.msra.mxu0 0.0
    %914 = vmatpush.msra.mxu0 0.0
    %915 = vmatpush.msra.mxu0 0.0
    %916 = vmatpush.msra.mxu0 0.0
    %917 = vmatpush.msra.mxu0 0.0
    %918 = vmatpush.msra.mxu0 %v832
    %919 = vmatpush.msra.mxu0 %v804
    %920 = vmatpush.msra.mxu0 %v796
    %921 = vmatpush.msra.mxu0 %v788
    %922 = vmatmul.f32.gmra.mxu0 %v819
    %v923 = vpop.f32.mrf.mxu0
    %v924 = vadd.f32 0.0, %v923
    %925 = vdwg.mxu0
    %926 = vmatpush.msra.mxu0 0.0
    %927 = vmatpush.msra.mxu0 0.0
    %928 = vmatpush.msra.mxu0 0.0
    %929 = vmatpush.msra.mxu0 0.0
    %930 = vmatpush.msra.mxu0 0.0
    %931 = vmatpush.msra.mxu0 0.0
    %932 = vmatpush.msra.mxu0 0.0
    %933 = vmatpush.msra.mxu0 0.0
    %934 = vmatpush.msra.mxu0 0.0
    %935 = vmatpush.msra.mxu0 0.0
    %936 = vmatpush.msra.mxu0 0.0
    %937 = vmatpush.msra.mxu0 0.0
    %938 = vmatpush.msra.mxu0 %v835
    %939 = vmatpush.msra.mxu0 %v805
    %940 = vmatpush.msra.mxu0 %v797
    %941 = vmatpush.msra.mxu0 %v789
    %942 = vmatmul.f32.gmra.mxu0 %v819
    %v943 = vpop.f32.mrf.mxu0
    %v944 = vadd.f32 0.0, %v943
    %945 = vdwg.mxu0
    %946 = vmatpush.msra.mxu0 0.0
    %947 = vmatpush.msra.mxu0 0.0
    %948 = vmatpush.msra.mxu0 0.0
    %949 = vmatpush.msra.mxu0 0.0
    %950 = vmatpush.msra.mxu0 0.0
    %951 = vmatpush.msra.mxu0 0.0
    %952 = vmatpush.msra.mxu0 0.0
    %953 = vmatpush.msra.mxu0 0.0
    %954 = vmatpush.msra.mxu0 0.0
    %955 = vmatpush.msra.mxu0 0.0
    %956 = vmatpush.msra.mxu0 0.0
    %957 = vmatpush.msra.mxu0 0.0
    %958 = vmatpush.msra.mxu0 %v838
    %959 = vmatpush.msra.mxu0 %v806
    %960 = vmatpush.msra.mxu0 %v798
    %961 = vmatpush.msra.mxu0 %v790
    %962 = vmatmul.f32.gmra.mxu0 %v819
    %v963 = vpop.f32.mrf.mxu0
    %v964 = vadd.f32 0.0, %v963
    %965 = vdwg.mxu0
    %966 = vmatpush.msra.mxu0 0.0
    %967 = vmatpush.msra.mxu0 0.0
    %968 = vmatpush.msra.mxu0 0.0
    %969 = vmatpush.msra.mxu0 0.0
    %970 = vmatpush.msra.mxu0 0.0
    %971 = vmatpush.msra.mxu0 0.0
    %972 = vmatpush.msra.mxu0 0.0
    %973 = vmatpush.msra.mxu0 0.0
    %974 = vmatpush.msra.mxu0 0.0
    %975 = vmatpush.msra.mxu0 0.0
    %976 = vmatpush.msra.mxu0 0.0
    %977 = vmatpush.msra.mxu0 0.0
    %978 = vmatpush.msra.mxu0 %v841
    %979 = vmatpush.msra.mxu0 %v807
    %980 = vmatpush.msra.mxu0 %v799
    %981 = vmatpush.msra.mxu0 %v791
    %982 = vmatmul.f32.gmra.mxu0 %v819
    %v983 = vpop.f32.mrf.mxu0
    %v984 = vadd.f32 0.0, %v983
    %985 = vdwg.mxu0
    %986 = vmatpush.msra.mxu0 0.0
    %987 = vmatpush.msra.mxu0 0.0
    %988 = vmatpush.msra.mxu0 0.0
    %989 = vmatpush.msra.mxu0 0.0
    %990 = vmatpush.msra.mxu0 0.0
    %991 = vmatpush.msra.mxu0 0.0
    %992 = vmatpush.msra.mxu0 0.0
    %993 = vmatpush.msra.mxu0 0.0
    %994 = vmatpush.msra.mxu0 0.0
    %995 = vmatpush.msra.mxu0 0.0
    %996 = vmatpush.msra.mxu0 0.0
    %997 = vmatpush.msra.mxu0 0.0
    %998 = vmatpush.msra.mxu0 %v844
    %999 = vmatpush.msra.mxu0 %v808
    %1000 = vmatpush.msra.mxu0 %v800
    %1001 = vmatpush.msra.mxu0 %v792
    %1002 = vmatmul.f32.gmra.mxu0 %v819
    %v1003 = vpop.f32.mrf.mxu0
    %v1004 = vadd.f32 0.0, %v1003
    %1005 = vdwg.mxu0
    %v1006 = vmax.f32 %v864, %v884
    %v1007 = vmax.f32 %v1006, %v904
    %v1008 = vmax.f32 %v1007, %v924
    %v1009 = vmax.f32 %v1008, %v944
    %v1010 = vmax.f32 %v1009, %v964
    %v1011 = vmax.f32 %v1010, %v984
    %v1012 = vmax.f32 %v1011, %v1004
    %v1013 = vld [vmem:[%s4] sm:$0xff]
    %v1014 = vld [vmem:[%s4 + $0x8] sm:$0xff]
    %v1015 = vld [vmem:[%s4 + $0x10] sm:$0xff]
    %v1016 = vld [vmem:[%s4 + $0x18] sm:$0xff]
    %v1017 = vld [vmem:[%s4 + $0x20] sm:$0xff]
    %v1018 = vld [vmem:[%s4 + $0x28] sm:$0xff]
    %v1019 = vld [vmem:[%s4 + $0x30] sm:$0xff]
    %v1020 = vld [vmem:[%s4 + $0x38] sm:$0xff]
    %v1021 = vld [vmem:[%s4 + $0x40] sm:$0xff]
    %v1022 = vld [vmem:[%s4 + $0x48] sm:$0xff]
    %v1023 = vld [vmem:[%s4 + $0x50] sm:$0xff]
    %v1024 = vld [vmem:[%s4 + $0x58] sm:$0xff]
    %v1025 = vld [vmem:[%s4 + $0x60] sm:$0xff]
    %v1026 = vld [vmem:[%s4 + $0x68] sm:$0xff]
    %v1027 = vld [vmem:[%s4 + $0x70] sm:$0xff]
    %v1028 = vld [vmem:[%s4 + $0x78] sm:$0xff]
    %v1029 = vld [vmem:[%s5] sm:$0x1]
    %v1031 = vperm.slane %v1029, 0
    %1033 = vmatpush.msra.mxu0 %v1028
    %1034 = vmatpush.msra.mxu0 %v1027
    %1035 = vmatpush.msra.mxu0 %v1026
    %1036 = vmatpush.msra.mxu0 %v1025
    %1037 = vmatpush.msra.mxu0 %v1024
    %1038 = vmatpush.msra.mxu0 %v1023
    %1039 = vmatpush.msra.mxu0 %v1022
    %1040 = vmatpush.msra.mxu0 %v1021
    %1041 = vmatpush.msra.mxu0 %v1020
    %1042 = vmatpush.msra.mxu0 %v1019
    %1043 = vmatpush.msra.mxu0 %v1018
    %1044 = vmatpush.msra.mxu0 %v1017
    %1045 = vmatpush.msra.mxu0 %v1016
    %1046 = vmatpush.msra.mxu0 %v1015
    %1047 = vmatpush.msra.mxu0 %v1014
    %1048 = vmatpush.msra.mxu0 %v1013
    %1049 = vmatmul.f32.gmra.mxu0 %v1012
    %v1050 = vpop.f32.mrf.mxu0
    %v1051 = vadd.f32 %v1031, %v1050
    %1052 = vdwg.mxu0
    %v1053 = vmax.f32 %v1051, 0.0
    %v1054 = vld [vmem:[%s6] sm:$0x1]
    %v1056 = vperm.slane %v1054, 0
    %v1058 = vmul.f32 %v1053, %v1056
    %v1059 = vsel %vm502, %v1058, 0.0
    %1060 = vadd.xlane.f32.xlu0 %v1059
    %v1061 = vpop.xlane.xlu0 %1060
    %s1062 = sld [smem:[#allocation2 + $0x2]]
    %v1063 = vstv %s1062
    %v1064 = vadd.f32 %v1061, %v1063
    %vm1065 = vcmask 1024
    %1066 = vst.msk [vmem:[%s8] sm:$0x3] %vm1065, %v1064
    // Predicated region
    $region38: #{unet_to_regression.3} parent=1 // pred_check
      _
    $region39: #{unet_to_regression.3} parent=1 // pred_check_branch
      %1068 = sbr.rel (0) target = $region41
    $region40: #{unet_to_regression.3} parent=1 // pred_region
      _
    $region41: #{unet_to_regression.3} parent=1 // pred_fallthru
      _
    // Predicated region
    $region42: #{unet_to_regression.3} parent=1 // pred_check
      _
    $region43: #{unet_to_regression.3} parent=1 // pred_check_branch
      %1070 = sbr.rel (0) target = $region45
    $region44: #{unet_to_regression.3} parent=1 // pred_region
      _
    $region45: #{unet_to_regression.3} parent=1 // pred_fallthru
      _
    %1071 = vsyncpa [#allocation3], 1

</llo_original>
